<compile_context>
chip_gen: v7x
topology: tpu7x:2x2x1
jax: 0.10.0
libtpu: 0.0.40
codegen_flags: <defaults>
</compile_context>

<pallas_src>
import jax
import jax.numpy as jnp
from jax.experimental import pallas as pl
from jax.experimental.pallas import tpu as pltpu


# ---- problem geometry (MNIST-like input implied by the nni test) -----------
H = W = 28
K = 5                     # conv kernel size
C1 = 32                   # conv1 out channels
C2 = 64                   # conv2 out channels
H1 = H - K + 1            # 24  conv1 output height/width
P1 = H1 // 2              # 12  pool1 output height/width
H2 = P1 - K + 1           # 8   conv2 output height/width
P2 = H2 // 2              # 4   pool2 output height/width

L1 = H1 * C1              # 768  conv1 lanes, (w, c) flattened
L1P = (H1 - 1) * C1       # 736  after column-pair max (w in 0..22)
LD = P1 * C1              # 384  pool1 lanes after column decimation (wp, c)
L2 = H2 * C2              # 512  conv2 lanes, (ow, co) flattened
L2P = (H2 - 1) * C2       # 448  after column-pair max (ow in 0..6)
LOUT = P2 * C2            # 256  output lanes, (pw, co) flattened


# ------------------------------ fused kernel --------------------------------

def _stem_kernel(x_ref, w1b_ref, b1_ref, s1_ref, csel1_ref,
                 w2b_ref, b2_ref, s2_ref, o_ref):
    f32 = jnp.float32
    bf16 = jnp.bfloat16

    x = x_ref[0]                                            # (28, 28) f32

    # conv1: h1[r, w*C1 + c] = sum_{di,dj} x[r+di, w+dj] * w1[c,0,di,dj]
    h1 = jnp.dot(x[0:H1, :].astype(bf16), w1b_ref[0],
                 preferred_element_type=f32)
    for di in range(1, K):
        h1 = h1 + jnp.dot(x[di:di + H1, :].astype(bf16), w1b_ref[di],
                          preferred_element_type=f32)
    h1 = h1 + b1_ref[...]                                   # (24, 768)

    # pool1 (2x2 / stride 2), fused: pair maxes + MXU row decimation +
    # MXU column-block decimation (0/1 selection matmuls, exact in bf16).
    t = jnp.maximum(h1[:, :L1P], h1[:, C1:])                # column-pair max (24, 736)
    u = jnp.maximum(t[:H1 - 1, :], t[1:, :]).astype(bf16)   # row-pair max    (23, 736)
    p1 = jnp.dot(s1_ref[...], u, preferred_element_type=f32)          # (12, 736)
    p1d = jnp.dot(p1.astype(bf16), csel1_ref[...],
                  preferred_element_type=f32).astype(bf16)             # (12, 384)

    # conv2 over the decimated pooled lane axis (wp, ci) -> (ow, co)
    h2 = jnp.dot(p1d[0:H2, :], w2b_ref[0], preferred_element_type=f32)
    for di in range(1, K):
        h2 = h2 + jnp.dot(p1d[di:di + H2, :], w2b_ref[di],
                          preferred_element_type=f32)
    h2 = h2 + b2_ref[...]                                   # (8, 512)

    # pool2 (2x2 / stride 2), fused
    t2 = jnp.maximum(h2[:, :L2P], h2[:, C2:])               # column-pair max (8, 448)
    u2 = jnp.maximum(t2[:H2 - 1, :], t2[1:, :])             # row-pair max    (7, 448)
    p2 = jnp.dot(s2_ref[...], u2, preferred_element_type=f32)  # even rows     (4, 448)

    # keep only even output columns -> (4, 256), lanes = (pw, co)
    o_ref[0] = jnp.concatenate(
        [p2[:, 2 * pw * C2:2 * pw * C2 + C2] for pw in range(P2)], axis=1)


# ------------------------- weight preprocessing -----------------------------

def prepare_params(w1, b1, w2, b2):
    """Preprocess PyTorch-layout (OIHW) weights into the banded/tiled form the
    fused kernel consumes.  Done once per parameter set.

      w1: (32, 1, 5, 5)   b1: (32,)   w2: (64, 32, 5, 5)   b2: (64,)
    """
    # conv1 banded matrix:  w1b[di, j, w*C1 + c] = w1[c, 0, di, j - w]
    w1r = jnp.transpose(w1[:, 0, :, :], (1, 2, 0))                  # (5, 5, 32)
    cols = [jnp.pad(w1r, ((0, 0), (w, W - K - w), (0, 0))) for w in range(H1)]
    w1b = jnp.stack(cols, axis=2).reshape(K, W, L1)                 # (5, 28, 768)

    # pool1 column-block decimation: csel1[w*C1+c, wp*C1+c'] = (w==2wp)&(c==c')
    mask1 = (jnp.arange(H1 - 1)[:, None] == 2 * jnp.arange(P1)[None, :])
    csel1 = (mask1.astype(jnp.float32)[:, None, :, None]
             * jnp.eye(C1, dtype=jnp.float32)[None, :, None, :]).reshape(L1P, LD)

    # conv2 banded matrix over the decimated pooled lane axis:
    #   w2b[di, wp*C1 + ci, ow*C2 + co] = w2[co, ci, di, wp - ow]  (0 <= wp-ow < K)
    w2r = jnp.transpose(w2, (2, 3, 1, 0))                           # (5, 5, 32, 64)
    cols2 = [jnp.pad(w2r, ((0, 0), (ow, P1 - K - ow), (0, 0), (0, 0)))
             for ow in range(H2)]
    w2b = jnp.stack(cols2, axis=3).reshape(K, LD, L2)               # (5, 384, 512)

    # stride-2 row-selection matrices for the two pools.
    s1 = (jnp.arange(H1 - 1)[None, :] == 2 * jnp.arange(P1)[:, None]).astype(jnp.float32)
    s2 = (jnp.arange(H2 - 1)[None, :] == 2 * jnp.arange(P2)[:, None]).astype(jnp.float32)

    return dict(
        w1b=w1b.astype(jnp.bfloat16),
        w2b=w2b.astype(jnp.bfloat16),
        csel1=csel1.astype(jnp.bfloat16),
        b1=jnp.tile(b1.astype(jnp.float32), H1).reshape(1, L1),
        b2=jnp.tile(b2.astype(jnp.float32), H2).reshape(1, L2),
        s1=s1.astype(jnp.bfloat16),
        s2=s2,
    )


# ------------------------------ forward pass --------------------------------

@jax.jit
def stem_forward(x_nchw, params):
    """x_nchw: (B, 1, 28, 28) f32 -> (B, 64, 4, 4) f32 (NCHW), like M_1_stem."""
    B = x_nchw.shape[0]
    x = x_nchw[:, 0, :, :]                                          # (B, 28, 28)

    out = pl.pallas_call(
        _stem_kernel,
        out_shape=jax.ShapeDtypeStruct((B, P2, LOUT), jnp.float32),
        grid=(B,),
        in_specs=[
            pl.BlockSpec((1, H, W), lambda b: (b, 0, 0)),           # image b
            pl.BlockSpec((K, W, L1), lambda b: (0, 0, 0)),          # conv1 band
            pl.BlockSpec((1, L1), lambda b: (0, 0)),                # conv1 bias (tiled)
            pl.BlockSpec((P1, H1 - 1), lambda b: (0, 0)),           # pool1 row select
            pl.BlockSpec((L1P, LD), lambda b: (0, 0)),              # pool1 col select
            pl.BlockSpec((K, LD, L2), lambda b: (0, 0, 0)),         # conv2 band
            pl.BlockSpec((1, L2), lambda b: (0, 0)),                # conv2 bias (tiled)
            pl.BlockSpec((P2, H2 - 1), lambda b: (0, 0)),           # pool2 row select
        ],
        out_specs=pl.BlockSpec((1, P2, LOUT), lambda b: (b, 0, 0)),
        compiler_params=pltpu.CompilerParams(
            dimension_semantics=("parallel",),
            vmem_limit_bytes=32 * 1024 * 1024,
        ),
    )(x, params["w1b"], params["b1"], params["s1"], params["csel1"],
      params["w2b"], params["b2"], params["s2"])

    # (B, 4, 256) lanes=(pw, co) -> NHWC (B, 4, 4, 64) -> NCHW (B, 64, 4, 4)
    return jnp.transpose(out.reshape(B, P2, P2, C2), (0, 3, 1, 2))


# ------------------------------ f32 reference -------------------------------

def reference_forward(x_nchw, w1, b1, w2, b2):
    dn = ("NCHW", "OIHW", "NCHW")
    y = jax.lax.conv_general_dilated(x_nchw, w1, (1, 1), "VALID",
                                     dimension_numbers=dn)
    y = y + b1[None, :, None, None]
    y = jax.lax.reduce_window(y, -jnp.inf, jax.lax.max,
                              (1, 1, 2, 2), (1, 1, 2, 2), "VALID")
    y = jax.lax.conv_general_dilated(y, w2, (1, 1), "VALID",
                                     dimension_numbers=dn)
    y = y + b2[None, :, None, None]
    y = jax.lax.reduce_window(y, -jnp.inf, jax.lax.max,
                              (1, 1, 2, 2), (1, 1, 2, 2), "VALID")
    return y


# ----------------------------------- main ------------------------------------

if __name__ == "__main__":
    key = jax.random.PRNGKey(0)
    kx, k1, k2, k3, k4 = jax.random.split(key, 5)

    B = 2
    x = jax.random.normal(kx, (B, 1, H, W), jnp.float32)
    w1 = jax.random.normal(k1, (C1, 1, K, K), jnp.float32) / jnp.sqrt(float(K * K))
    b1 = 0.01 * jax.random.normal(k2, (C1,), jnp.float32)
    w2 = jax.random.normal(k3, (C2, C1, K, K), jnp.float32) / jnp.sqrt(float(C1 * K * K))
    b2 = 0.01 * jax.random.normal(k4, (C2,), jnp.float32)

    params = prepare_params(w1, b1, w2, b2)
    out = stem_forward(x, params)
    jax.block_until_ready(out)

    assert out.shape == (B, C2, P2, P2), out.shape
    assert bool(jnp.all(jnp.isfinite(out)))

    # f32 XLA reference (kernel uses bf16 MXU operands with f32 accumulation,
    # so allow a small tolerance).
    ref = reference_forward(x, w1, b1, w2, b2)
    max_err = float(jnp.max(jnp.abs(out - ref)))
    assert max_err < 0.2, f"max |err| = {max_err}"

    print("KERNEL_OK")
</pallas_src>

<mosaic_0001>
module attributes {stable_mosaic.version = 11 : i64} {
  func.func @_stem_kernel(%arg0: i32, %arg1: memref<1x28x28xf32, #tpu.memory_space<vmem>>, %arg2: memref<5x28x768xbf16, #tpu.memory_space<vmem>>, %arg3: memref<1x768xf32, #tpu.memory_space<vmem>>, %arg4: memref<12x23xbf16, #tpu.memory_space<vmem>>, %arg5: memref<736x384xbf16, #tpu.memory_space<vmem>>, %arg6: memref<5x384x512xbf16, #tpu.memory_space<vmem>>, %arg7: memref<1x512xf32, #tpu.memory_space<vmem>>, %arg8: memref<4x7xf32, #tpu.memory_space<vmem>>, %arg9: memref<1x4x256xf32, #tpu.memory_space<vmem>>) attributes {dimension_semantics = [#tpu.dimension_semantics<parallel>], iteration_bounds = array<i64: 2>, scalar_prefetch = 0 : i64, scratch_operands = 0 : i64, tpu.core_type = #tpu.core_type<tc>, window_params = [{transform_indices = @transform_0, window_bounds = array<i64: 1, 28, 28>}, {pipeline_mode = #tpu.pipeline_mode<synchronous>, transform_indices = @transform_1, window_bounds = array<i64: 5, 28, 768>}, {pipeline_mode = #tpu.pipeline_mode<synchronous>, transform_indices = @transform_2, window_bounds = array<i64: 1, 768>}, {pipeline_mode = #tpu.pipeline_mode<synchronous>, transform_indices = @transform_3, window_bounds = array<i64: 12, 23>}, {pipeline_mode = #tpu.pipeline_mode<synchronous>, transform_indices = @transform_4, window_bounds = array<i64: 736, 384>}, {pipeline_mode = #tpu.pipeline_mode<synchronous>, transform_indices = @transform_5, window_bounds = array<i64: 5, 384, 512>}, {pipeline_mode = #tpu.pipeline_mode<synchronous>, transform_indices = @transform_6, window_bounds = array<i64: 1, 512>}, {pipeline_mode = #tpu.pipeline_mode<synchronous>, transform_indices = @transform_7, window_bounds = array<i64: 4, 7>}, {transform_indices = @transform_8, window_bounds = array<i64: 1, 4, 256>}]} {
    %c0 = arith.constant 0 : index
    %c0_0 = arith.constant 0 : index
    %c0_1 = arith.constant 0 : index
    %0 = vector.load %arg1[%c0, %c0_0, %c0_1] : memref<1x28x28xf32, #tpu.memory_space<vmem>>, vector<1x28x28xf32>
    %1 = vector.shape_cast %0 : vector<1x28x28xf32> to vector<28x28xf32>
    %2 = vector.extract_strided_slice %1 {offsets = [0, 0], sizes = [24, 28], strides = [1, 1]} : vector<28x28xf32> to vector<24x28xf32>
    %3 = arith.truncf %2 : vector<24x28xf32> to vector<24x28xbf16>
    %c0_2 = arith.constant 0 : index
    %c0_3 = arith.constant 0 : index
    %c0_4 = arith.constant 0 : index
    %4 = vector.load %arg2[%c0_2, %c0_3, %c0_4] : memref<5x28x768xbf16, #tpu.memory_space<vmem>>, vector<1x28x768xbf16>
    %5 = vector.shape_cast %4 : vector<1x28x768xbf16> to vector<28x768xbf16>
    %cst = arith.constant dense<0.000000e+00> : vector<24x768xf32>
    %6 = tpu.matmul %3, %5, %cst {dimension_numbers = #tpu.dot_dimension_numbers<[1], [0], [0], [1], [0, 0, 1, 1], [], []>} : vector<24x28xbf16>, vector<28x768xbf16>, vector<24x768xf32> -> vector<24x768xf32>
    %7 = vector.extract_strided_slice %1 {offsets = [1, 0], sizes = [24, 28], strides = [1, 1]} : vector<28x28xf32> to vector<24x28xf32>
    %8 = arith.truncf %7 : vector<24x28xf32> to vector<24x28xbf16>
    %c1 = arith.constant 1 : index
    %c0_5 = arith.constant 0 : index
    %c0_6 = arith.constant 0 : index
    %9 = vector.load %arg2[%c1, %c0_5, %c0_6] : memref<5x28x768xbf16, #tpu.memory_space<vmem>>, vector<1x28x768xbf16>
    %10 = vector.shape_cast %9 : vector<1x28x768xbf16> to vector<28x768xbf16>
    %cst_7 = arith.constant dense<0.000000e+00> : vector<24x768xf32>
    %11 = tpu.matmul %8, %10, %cst_7 {dimension_numbers = #tpu.dot_dimension_numbers<[1], [0], [0], [1], [0, 0, 1, 1], [], []>} : vector<24x28xbf16>, vector<28x768xbf16>, vector<24x768xf32> -> vector<24x768xf32>
    %12 = arith.addf %6, %11 : vector<24x768xf32>
    %13 = vector.extract_strided_slice %1 {offsets = [2, 0], sizes = [24, 28], strides = [1, 1]} : vector<28x28xf32> to vector<24x28xf32>
    %14 = arith.truncf %13 : vector<24x28xf32> to vector<24x28xbf16>
    %c2 = arith.constant 2 : index
    %c0_8 = arith.constant 0 : index
    %c0_9 = arith.constant 0 : index
    %15 = vector.load %arg2[%c2, %c0_8, %c0_9] : memref<5x28x768xbf16, #tpu.memory_space<vmem>>, vector<1x28x768xbf16>
    %16 = vector.shape_cast %15 : vector<1x28x768xbf16> to vector<28x768xbf16>
    %cst_10 = arith.constant dense<0.000000e+00> : vector<24x768xf32>
    %17 = tpu.matmul %14, %16, %cst_10 {dimension_numbers = #tpu.dot_dimension_numbers<[1], [0], [0], [1], [0, 0, 1, 1], [], []>} : vector<24x28xbf16>, vector<28x768xbf16>, vector<24x768xf32> -> vector<24x768xf32>
    %18 = arith.addf %12, %17 : vector<24x768xf32>
    %19 = vector.extract_strided_slice %1 {offsets = [3, 0], sizes = [24, 28], strides = [1, 1]} : vector<28x28xf32> to vector<24x28xf32>
    %20 = arith.truncf %19 : vector<24x28xf32> to vector<24x28xbf16>
    %c3 = arith.constant 3 : index
    %c0_11 = arith.constant 0 : index
    %c0_12 = arith.constant 0 : index
    %21 = vector.load %arg2[%c3, %c0_11, %c0_12] : memref<5x28x768xbf16, #tpu.memory_space<vmem>>, vector<1x28x768xbf16>
    %22 = vector.shape_cast %21 : vector<1x28x768xbf16> to vector<28x768xbf16>
    %cst_13 = arith.constant dense<0.000000e+00> : vector<24x768xf32>
    %23 = tpu.matmul %20, %22, %cst_13 {dimension_numbers = #tpu.dot_dimension_numbers<[1], [0], [0], [1], [0, 0, 1, 1], [], []>} : vector<24x28xbf16>, vector<28x768xbf16>, vector<24x768xf32> -> vector<24x768xf32>
    %24 = arith.addf %18, %23 : vector<24x768xf32>
    %25 = vector.extract_strided_slice %1 {offsets = [4, 0], sizes = [24, 28], strides = [1, 1]} : vector<28x28xf32> to vector<24x28xf32>
    %26 = arith.truncf %25 : vector<24x28xf32> to vector<24x28xbf16>
    %c4 = arith.constant 4 : index
    %c0_14 = arith.constant 0 : index
    %c0_15 = arith.constant 0 : index
    %27 = vector.load %arg2[%c4, %c0_14, %c0_15] : memref<5x28x768xbf16, #tpu.memory_space<vmem>>, vector<1x28x768xbf16>
    %28 = vector.shape_cast %27 : vector<1x28x768xbf16> to vector<28x768xbf16>
    %cst_16 = arith.constant dense<0.000000e+00> : vector<24x768xf32>
    %29 = tpu.matmul %26, %28, %cst_16 {dimension_numbers = #tpu.dot_dimension_numbers<[1], [0], [0], [1], [0, 0, 1, 1], [], []>} : vector<24x28xbf16>, vector<28x768xbf16>, vector<24x768xf32> -> vector<24x768xf32>
    %30 = arith.addf %24, %29 : vector<24x768xf32>
    %c0_17 = arith.constant 0 : index
    %c0_18 = arith.constant 0 : index
    %31 = vector.load %arg3[%c0_17, %c0_18] : memref<1x768xf32, #tpu.memory_space<vmem>>, vector<1x768xf32>
    %32 = vector.broadcast %31 : vector<1x768xf32> to vector<24x768xf32>
    %33 = arith.addf %30, %32 : vector<24x768xf32>
    %34 = vector.extract_strided_slice %33 {offsets = [0, 0], sizes = [24, 736], strides = [1, 1]} : vector<24x768xf32> to vector<24x736xf32>
    %35 = vector.extract_strided_slice %33 {offsets = [0, 32], sizes = [24, 736], strides = [1, 1]} : vector<24x768xf32> to vector<24x736xf32>
    %36 = arith.maximumf %34, %35 : vector<24x736xf32>
    %37 = vector.extract_strided_slice %36 {offsets = [0, 0], sizes = [23, 736], strides = [1, 1]} : vector<24x736xf32> to vector<23x736xf32>
    %38 = vector.extract_strided_slice %36 {offsets = [1, 0], sizes = [23, 736], strides = [1, 1]} : vector<24x736xf32> to vector<23x736xf32>
    %39 = arith.maximumf %37, %38 : vector<23x736xf32>
    %40 = arith.truncf %39 : vector<23x736xf32> to vector<23x736xbf16>
    %c0_19 = arith.constant 0 : index
    %c0_20 = arith.constant 0 : index
    %41 = vector.load %arg4[%c0_19, %c0_20] : memref<12x23xbf16, #tpu.memory_space<vmem>>, vector<12x23xbf16>
    %cst_21 = arith.constant dense<0.000000e+00> : vector<12x736xf32>
    %42 = tpu.matmul %41, %40, %cst_21 {dimension_numbers = #tpu.dot_dimension_numbers<[1], [0], [0], [1], [0, 0, 1, 1], [], []>} : vector<12x23xbf16>, vector<23x736xbf16>, vector<12x736xf32> -> vector<12x736xf32>
    %43 = arith.truncf %42 : vector<12x736xf32> to vector<12x736xbf16>
    %c0_22 = arith.constant 0 : index
    %c0_23 = arith.constant 0 : index
    %44 = vector.load %arg5[%c0_22, %c0_23] : memref<736x384xbf16, #tpu.memory_space<vmem>>, vector<736x384xbf16>
    %cst_24 = arith.constant dense<0.000000e+00> : vector<12x384xf32>
    %45 = tpu.matmul %43, %44, %cst_24 {dimension_numbers = #tpu.dot_dimension_numbers<[1], [0], [0], [1], [0, 0, 1, 1], [], []>} : vector<12x736xbf16>, vector<736x384xbf16>, vector<12x384xf32> -> vector<12x384xf32>
    %46 = arith.truncf %45 : vector<12x384xf32> to vector<12x384xbf16>
    %47 = vector.extract_strided_slice %46 {offsets = [0, 0], sizes = [8, 384], strides = [1, 1]} : vector<12x384xbf16> to vector<8x384xbf16>
    %c0_25 = arith.constant 0 : index
    %c0_26 = arith.constant 0 : index
    %c0_27 = arith.constant 0 : index
    %48 = vector.load %arg6[%c0_25, %c0_26, %c0_27] : memref<5x384x512xbf16, #tpu.memory_space<vmem>>, vector<1x384x512xbf16>
    %49 = vector.shape_cast %48 : vector<1x384x512xbf16> to vector<384x512xbf16>
    %cst_28 = arith.constant dense<0.000000e+00> : vector<8x512xf32>
    %50 = tpu.matmul %47, %49, %cst_28 {dimension_numbers = #tpu.dot_dimension_numbers<[1], [0], [0], [1], [0, 0, 1, 1], [], []>} : vector<8x384xbf16>, vector<384x512xbf16>, vector<8x512xf32> -> vector<8x512xf32>
    %51 = vector.extract_strided_slice %46 {offsets = [1, 0], sizes = [8, 384], strides = [1, 1]} : vector<12x384xbf16> to vector<8x384xbf16>
    %c1_29 = arith.constant 1 : index
    %c0_30 = arith.constant 0 : index
    %c0_31 = arith.constant 0 : index
    %52 = vector.load %arg6[%c1_29, %c0_30, %c0_31] : memref<5x384x512xbf16, #tpu.memory_space<vmem>>, vector<1x384x512xbf16>
    %53 = vector.shape_cast %52 : vector<1x384x512xbf16> to vector<384x512xbf16>
    %cst_32 = arith.constant dense<0.000000e+00> : vector<8x512xf32>
    %54 = tpu.matmul %51, %53, %cst_32 {dimension_numbers = #tpu.dot_dimension_numbers<[1], [0], [0], [1], [0, 0, 1, 1], [], []>} : vector<8x384xbf16>, vector<384x512xbf16>, vector<8x512xf32> -> vector<8x512xf32>
    %55 = arith.addf %50, %54 : vector<8x512xf32>
    %56 = vector.extract_strided_slice %46 {offsets = [2, 0], sizes = [8, 384], strides = [1, 1]} : vector<12x384xbf16> to vector<8x384xbf16>
    %c2_33 = arith.constant 2 : index
    %c0_34 = arith.constant 0 : index
    %c0_35 = arith.constant 0 : index
    %57 = vector.load %arg6[%c2_33, %c0_34, %c0_35] : memref<5x384x512xbf16, #tpu.memory_space<vmem>>, vector<1x384x512xbf16>
    %58 = vector.shape_cast %57 : vector<1x384x512xbf16> to vector<384x512xbf16>
    %cst_36 = arith.constant dense<0.000000e+00> : vector<8x512xf32>
    %59 = tpu.matmul %56, %58, %cst_36 {dimension_numbers = #tpu.dot_dimension_numbers<[1], [0], [0], [1], [0, 0, 1, 1], [], []>} : vector<8x384xbf16>, vector<384x512xbf16>, vector<8x512xf32> -> vector<8x512xf32>
    %60 = arith.addf %55, %59 : vector<8x512xf32>
    %61 = vector.extract_strided_slice %46 {offsets = [3, 0], sizes = [8, 384], strides = [1, 1]} : vector<12x384xbf16> to vector<8x384xbf16>
    %c3_37 = arith.constant 3 : index
    %c0_38 = arith.constant 0 : index
    %c0_39 = arith.constant 0 : index
    %62 = vector.load %arg6[%c3_37, %c0_38, %c0_39] : memref<5x384x512xbf16, #tpu.memory_space<vmem>>, vector<1x384x512xbf16>
    %63 = vector.shape_cast %62 : vector<1x384x512xbf16> to vector<384x512xbf16>
    %cst_40 = arith.constant dense<0.000000e+00> : vector<8x512xf32>
    %64 = tpu.matmul %61, %63, %cst_40 {dimension_numbers = #tpu.dot_dimension_numbers<[1], [0], [0], [1], [0, 0, 1, 1], [], []>} : vector<8x384xbf16>, vector<384x512xbf16>, vector<8x512xf32> -> vector<8x512xf32>
    %65 = arith.addf %60, %64 : vector<8x512xf32>
    %66 = vector.extract_strided_slice %46 {offsets = [4, 0], sizes = [8, 384], strides = [1, 1]} : vector<12x384xbf16> to vector<8x384xbf16>
    %c4_41 = arith.constant 4 : index
    %c0_42 = arith.constant 0 : index
    %c0_43 = arith.constant 0 : index
    %67 = vector.load %arg6[%c4_41, %c0_42, %c0_43] : memref<5x384x512xbf16, #tpu.memory_space<vmem>>, vector<1x384x512xbf16>
    %68 = vector.shape_cast %67 : vector<1x384x512xbf16> to vector<384x512xbf16>
    %cst_44 = arith.constant dense<0.000000e+00> : vector<8x512xf32>
    %69 = tpu.matmul %66, %68, %cst_44 {dimension_numbers = #tpu.dot_dimension_numbers<[1], [0], [0], [1], [0, 0, 1, 1], [], []>} : vector<8x384xbf16>, vector<384x512xbf16>, vector<8x512xf32> -> vector<8x512xf32>
    %70 = arith.addf %65, %69 : vector<8x512xf32>
    %c0_45 = arith.constant 0 : index
    %c0_46 = arith.constant 0 : index
    %71 = vector.load %arg7[%c0_45, %c0_46] : memref<1x512xf32, #tpu.memory_space<vmem>>, vector<1x512xf32>
    %72 = vector.broadcast %71 : vector<1x512xf32> to vector<8x512xf32>
    %73 = arith.addf %70, %72 : vector<8x512xf32>
    %74 = vector.extract_strided_slice %73 {offsets = [0, 0], sizes = [8, 448], strides = [1, 1]} : vector<8x512xf32> to vector<8x448xf32>
    %75 = vector.extract_strided_slice %73 {offsets = [0, 64], sizes = [8, 448], strides = [1, 1]} : vector<8x512xf32> to vector<8x448xf32>
    %76 = arith.maximumf %74, %75 : vector<8x448xf32>
    %77 = vector.extract_strided_slice %76 {offsets = [0, 0], sizes = [7, 448], strides = [1, 1]} : vector<8x448xf32> to vector<7x448xf32>
    %78 = vector.extract_strided_slice %76 {offsets = [1, 0], sizes = [7, 448], strides = [1, 1]} : vector<8x448xf32> to vector<7x448xf32>
    %79 = arith.maximumf %77, %78 : vector<7x448xf32>
    %c0_47 = arith.constant 0 : index
    %c0_48 = arith.constant 0 : index
    %80 = vector.load %arg8[%c0_47, %c0_48] : memref<4x7xf32, #tpu.memory_space<vmem>>, vector<4x7xf32>
    %cst_49 = arith.constant dense<0.000000e+00> : vector<4x448xf32>
    %81 = tpu.matmul %80, %79, %cst_49 {dimension_numbers = #tpu.dot_dimension_numbers<[1], [0], [0], [1], [0, 0, 1, 1], [], []>} : vector<4x7xf32>, vector<7x448xf32>, vector<4x448xf32> -> vector<4x448xf32>
    %82 = vector.extract_strided_slice %81 {offsets = [0, 0], sizes = [4, 64], strides = [1, 1]} : vector<4x448xf32> to vector<4x64xf32>
    %83 = vector.extract_strided_slice %81 {offsets = [0, 128], sizes = [4, 64], strides = [1, 1]} : vector<4x448xf32> to vector<4x64xf32>
    %84 = vector.extract_strided_slice %81 {offsets = [0, 256], sizes = [4, 64], strides = [1, 1]} : vector<4x448xf32> to vector<4x64xf32>
    %85 = vector.extract_strided_slice %81 {offsets = [0, 384], sizes = [4, 64], strides = [1, 1]} : vector<4x448xf32> to vector<4x64xf32>
    %86 = tpu.concatenate %82, %83, %84, %85 in 1 : vector<4x64xf32>, vector<4x64xf32>, vector<4x64xf32>, vector<4x64xf32> -> vector<4x256xf32>
    %c0_50 = arith.constant 0 : index
    %c0_51 = arith.constant 0 : index
    %c0_52 = arith.constant 0 : index
    %87 = vector.load %arg9[%c0_50, %c0_51, %c0_52] : memref<1x4x256xf32, #tpu.memory_space<vmem>>, vector<1x4x256xf32>
    %88 = vector.shape_cast %87 : vector<1x4x256xf32> to vector<4x256xf32>
    %89 = vector.shape_cast %86 : vector<4x256xf32> to vector<1x4x256xf32>
    tpu.vector_store %arg9[%c0_50, %c0_51, %c0_52], %89 {strides = array<i32>} : memref<1x4x256xf32, #tpu.memory_space<vmem>>, vector<1x4x256xf32>,
    return
  }
  func.func @transform_0(%arg0: i32) -> (i32, i32, i32) {
    %c0_i32 = arith.constant 0 : i32
    %c0_i32_0 = arith.constant 0 : i32
    %c0_i32_1 = arith.constant 0 : i32
    return %arg0, %c0_i32, %c0_i32_0 : i32, i32, i32
  }
  func.func @transform_1(%arg0: i32) -> (i32, i32, i32) {
    %c0_i32 = arith.constant 0 : i32
    %c0_i32_0 = arith.constant 0 : i32
    %c0_i32_1 = arith.constant 0 : i32
    %c0_i32_2 = arith.constant 0 : i32
    return %c0_i32, %c0_i32_0, %c0_i32_1 : i32, i32, i32
  }
  func.func @transform_2(%arg0: i32) -> (i32, i32) {
    %c0_i32 = arith.constant 0 : i32
    %c0_i32_0 = arith.constant 0 : i32
    %c0_i32_1 = arith.constant 0 : i32
    return %c0_i32, %c0_i32_0 : i32, i32
  }
  func.func @transform_3(%arg0: i32) -> (i32, i32) {
    %c0_i32 = arith.constant 0 : i32
    %c0_i32_0 = arith.constant 0 : i32
    %c0_i32_1 = arith.constant 0 : i32
    return %c0_i32, %c0_i32_0 : i32, i32
  }
  func.func @transform_4(%arg0: i32) -> (i32, i32) {
    %c0_i32 = arith.constant 0 : i32
    %c0_i32_0 = arith.constant 0 : i32
    %c0_i32_1 = arith.constant 0 : i32
    return %c0_i32, %c0_i32_0 : i32, i32
  }
  func.func @transform_5(%arg0: i32) -> (i32, i32, i32) {
    %c0_i32 = arith.constant 0 : i32
    %c0_i32_0 = arith.constant 0 : i32
    %c0_i32_1 = arith.constant 0 : i32
    %c0_i32_2 = arith.constant 0 : i32
    return %c0_i32, %c0_i32_0, %c0_i32_1 : i32, i32, i32
  }
  func.func @transform_6(%arg0: i32) -> (i32, i32) {
    %c0_i32 = arith.constant 0 : i32
    %c0_i32_0 = arith.constant 0 : i32
    %c0_i32_1 = arith.constant 0 : i32
    return %c0_i32, %c0_i32_0 : i32, i32
  }
  func.func @transform_7(%arg0: i32) -> (i32, i32) {
    %c0_i32 = arith.constant 0 : i32
    %c0_i32_0 = arith.constant 0 : i32
    %c0_i32_1 = arith.constant 0 : i32
    return %c0_i32, %c0_i32_0 : i32, i32
  }
  func.func @transform_8(%arg0: i32) -> (i32, i32, i32) {
    %c0_i32 = arith.constant 0 : i32
    %c0_i32_0 = arith.constant 0 : i32
    %c0_i32_1 = arith.constant 0 : i32
    return %arg0, %c0_i32, %c0_i32_0 : i32, i32, i32
  }
}

</mosaic_0001>

<llo_original>
// kernel: stem_forward.1
$region0: #{stem_forward.1}
  #allocation0 [shape = 'u32[]', space=smem, size = 0x4, offset = 0x4, fixed_abs, tag = 'smem constant byte address 0x4 - core index']
  #allocation1 [shape = 'u32[144,128]{1,0:T(1,128)}', space=vmem, size = 0x12000, scoped, tag = 'internal scratch']
  %s0 = inlined_call_operand.vmem [shape: f32[2,28,28], index: 0, kind: input, shape index: {}]
  %s1 = inlined_call_operand.hbm [shape: bf16[5,28,768], index: 1, kind: input, shape index: {}]
  %s2 = inlined_call_operand.hbm [shape: f32[1,768], index: 2, kind: input, shape index: {}]
  %s3 = inlined_call_operand.hbm [shape: bf16[12,23], index: 3, kind: input, shape index: {}]
  %s4 = inlined_call_operand.hbm [shape: bf16[736,384], index: 4, kind: input, shape index: {}]
  %s5 = inlined_call_operand.hbm [shape: bf16[5,384,512], index: 5, kind: input, shape index: {}]
  %s6 = inlined_call_operand.hbm [shape: f32[1,512], index: 6, kind: input, shape index: {}]
  %s7 = inlined_call_operand.hbm [shape: f32[4,7], index: 7, kind: input, shape index: {}]
  %s8 = inlined_call_operand.vmem [shape: f32[2,4,256], index: 8, kind: output, shape index: {}]
  %s9 = sld [smem:[#allocation0]]
  $region93: #{stem_forward.1} parent=0
    _
  %s11 = ssub.s32 1, %s9
  %s12 = scalar_select 0, %s11, %s9
  $region1: #{stem_forward.1} parent=0
    #allocation2 [shape = 'u8[245760]{0}', space=vmem, size = 0x3c000, scoped, tag = 'input window, operand 1, single buffered']
    #allocation3 [shape = 's32[2]{0}', space=sflag, size = 0x8, scoped, tag = 'scoped memory for stem_forward.1']
    #allocation4 [shape = 'u8[3072]{0}', space=vmem, size = 0xc00, scoped, tag = 'input window, operand 2, single buffered']
    #allocation5 [shape = 's32[1]{0}', space=sflag, size = 0x4, scoped, tag = 'scoped memory for stem_forward.1']
    #allocation6 [shape = 'u8[4096]{0}', space=vmem, size = 0x1000, scoped, tag = 'input window, operand 3, single buffered']
    #allocation7 [shape = 'u8[565248]{0}', space=vmem, size = 0x8a000, scoped, tag = 'input window, operand 4, single buffered']
    #allocation8 [shape = 's32[1]{0}', space=sflag, size = 0x4, scoped, tag = 'scoped memory for stem_forward.1']
    #allocation9 [shape = 'u8[1966080]{0}', space=vmem, size = 0x1e0000, scoped, tag = 'input window, operand 5, single buffered']
    #allocation10 [shape = 'u8[2048]{0}', space=vmem, size = 0x800, scoped, tag = 'input window, operand 6, single buffered']
    #allocation11 [shape = 's32[1]{0}', space=sflag, size = 0x4, scoped, tag = 'scoped memory for stem_forward.1']
    #allocation12 [shape = 'u8[2048]{0}', space=vmem, size = 0x800, scoped, tag = 'input window, operand 7, single buffered']
    %13 = vsyncpa [#allocation3], 0
    %14 = vsyncpa [#allocation5], 0
    %15 = vsyncpa [#allocation8], 0
    %16 = vsyncpa [#allocation11], 0
    loop: start=0, step=1, limit=4
    $region2: #{stem_forward.1} parent=1 // loop_pre_header
      _
    $region3: #{stem_forward.1} parent=1 // loop_header
      %s18 = sphi 0, %s22
      %p19 = scmp.ge.s32.totalorder %s18, 4
      %s28 = sphi 0, %s30
      %s31 = sphi 0, %s28
      %s32 = sphi 0, %s31
      %s48 = sphi 0, %s32
      %s52 = sphi 0, %s52
      %s54 = sphi 0, %s52
      %s55 = sphi 0, %s54
      %s69 = sphi 0, %s55
      %s73 = sphi 0, %s73
      %s75 = sphi 0, %s73
      %s76 = sphi 0, %s75
      %s90 = sphi 0, %s76
      %s94 = sphi 0, %s94
      %s96 = sphi 0, %s94
      %s97 = sphi 0, %s96
      %s111 = sphi 0, %s97
      %s115 = sphi 0, %s115
      %s117 = sphi 0, %s115
      %s118 = sphi 0, %s117
      %s132 = sphi 0, %s118
      %s136 = sphi 0, %s136
      %s138 = sphi 0, %s136
      %s139 = sphi 0, %s138
      %s153 = sphi 0, %s139
      %s157 = sphi 0, %s157
      %s159 = sphi 0, %s157
      %s160 = sphi 0, %s159
      %s174 = sphi 0, %s160
      %s178 = sphi 0, %s178
      %s180 = sphi 0, %s178
      %s181 = sphi 0, %s180
      %s195 = sphi 0, %s181
      %s201 = sphi 0, %s203
      %s204 = sphi 0, %s201
      %s205 = sphi 0, %s204
      %s221 = sphi 0, %s205
    $region4: #{stem_forward.1} parent=1 // loop_header_branch
      %21 = sbr.rel (%p19) target = $region8
    $region5: #{stem_forward.1} parent=1 // loop_body
      %s23 = ssub.s32 %s18, 1
      %s24 = ssub.s32 %s18, 2
      %s25 = sadd.s32 %s18, 1
      %s26 = ssub.s32 %s18, %s25
      %p27 = scmp.eq.s32.totalorder %s26, 0
      %s29 = sadd.s32 %s28, 1
      %s30 = scalar_select %p27, %s28, %s29
      %p33 = pneg %p27
      %p34 = scmp.eq.s32.totalorder %s18, 1
      %p35 = por %p33, %p34
      %p36 = scmp.ne.s32.totalorder %s28, %s31
      %p37 = scmp.eq.s32.totalorder %s18, 0
      %p38 = por %p36, %p37
      %p39 = scmp.ne.s32.totalorder %s28, %s31
      %p40 = scmp.eq.s32.totalorder %s23, 1
      %p41 = por %p39, %p40
      %p42 = scmp.ne.s32.totalorder %s31, %s32
      %p43 = scmp.eq.s32.totalorder %s23, 0
      %p44 = por %p42, %p43
      %p45 = scmp.ne.s32.totalorder %s31, %s32
      %p46 = scmp.eq.s32.totalorder %s24, 1
      %p47 = por %p45, %p46
      %p49 = scmp.ne.s32.totalorder %s32, %s48
      %p50 = scmp.eq.s32.totalorder %s24, 0
      %p51 = por %p49, %p50
      %s53 = sadd.s32 %s52, 1
      %p56 = scmp.eq.s32.totalorder %s18, 1
      %p57 = scmp.ne.s32.totalorder %s52, %s54
      %p58 = scmp.eq.s32.totalorder %s18, 0
      %p59 = por %p57, %p58
      %p60 = scmp.ne.s32.totalorder %s52, %s54
      %p61 = scmp.eq.s32.totalorder %s23, 1
      %p62 = por %p60, %p61
      %p63 = scmp.ne.s32.totalorder %s54, %s55
      %p64 = scmp.eq.s32.totalorder %s23, 0
      %p65 = por %p63, %p64
      %p66 = scmp.ne.s32.totalorder %s54, %s55
      %p67 = scmp.eq.s32.totalorder %s24, 1
      %p68 = por %p66, %p67
      %p70 = scmp.ne.s32.totalorder %s55, %s69
      %p71 = scmp.eq.s32.totalorder %s24, 0
      %p72 = por %p70, %p71
      %s74 = sadd.s32 %s73, 1
      %p77 = scmp.eq.s32.totalorder %s18, 1
      %p78 = scmp.ne.s32.totalorder %s73, %s75
      %p79 = scmp.eq.s32.totalorder %s18, 0
      %p80 = por %p78, %p79
      %p81 = scmp.ne.s32.totalorder %s73, %s75
      %p82 = scmp.eq.s32.totalorder %s23, 1
      %p83 = por %p81, %p82
      %p84 = scmp.ne.s32.totalorder %s75, %s76
      %p85 = scmp.eq.s32.totalorder %s23, 0
      %p86 = por %p84, %p85
      %p87 = scmp.ne.s32.totalorder %s75, %s76
      %p88 = scmp.eq.s32.totalorder %s24, 1
      %p89 = por %p87, %p88
      %p91 = scmp.ne.s32.totalorder %s76, %s90
      %p92 = scmp.eq.s32.totalorder %s24, 0
      %p93 = por %p91, %p92
      %s95 = sadd.s32 %s94, 1
      %p98 = scmp.eq.s32.totalorder %s18, 1
      %p99 = scmp.ne.s32.totalorder %s94, %s96
      %p100 = scmp.eq.s32.totalorder %s18, 0
      %p101 = por %p99, %p100
      %p102 = scmp.ne.s32.totalorder %s94, %s96
      %p103 = scmp.eq.s32.totalorder %s23, 1
      %p104 = por %p102, %p103
      %p105 = scmp.ne.s32.totalorder %s96, %s97
      %p106 = scmp.eq.s32.totalorder %s23, 0
      %p107 = por %p105, %p106
      %p108 = scmp.ne.s32.totalorder %s96, %s97
      %p109 = scmp.eq.s32.totalorder %s24, 1
      %p110 = por %p108, %p109
      %p112 = scmp.ne.s32.totalorder %s97, %s111
      %p113 = scmp.eq.s32.totalorder %s24, 0
      %p114 = por %p112, %p113
      %s116 = sadd.s32 %s115, 1
      %p119 = scmp.eq.s32.totalorder %s18, 1
      %p120 = scmp.ne.s32.totalorder %s115, %s117
      %p121 = scmp.eq.s32.totalorder %s18, 0
      %p122 = por %p120, %p121
      %p123 = scmp.ne.s32.totalorder %s115, %s117
      %p124 = scmp.eq.s32.totalorder %s23, 1
      %p125 = por %p123, %p124
      %p126 = scmp.ne.s32.totalorder %s117, %s118
      %p127 = scmp.eq.s32.totalorder %s23, 0
      %p128 = por %p126, %p127
      %p129 = scmp.ne.s32.totalorder %s117, %s118
      %p130 = scmp.eq.s32.totalorder %s24, 1
      %p131 = por %p129, %p130
      %p133 = scmp.ne.s32.totalorder %s118, %s132
      %p134 = scmp.eq.s32.totalorder %s24, 0
      %p135 = por %p133, %p134
      %s137 = sadd.s32 %s136, 1
      %p140 = scmp.eq.s32.totalorder %s18, 1
      %p141 = scmp.ne.s32.totalorder %s136, %s138
      %p142 = scmp.eq.s32.totalorder %s18, 0
      %p143 = por %p141, %p142
      %p144 = scmp.ne.s32.totalorder %s136, %s138
      %p145 = scmp.eq.s32.totalorder %s23, 1
      %p146 = por %p144, %p145
      %p147 = scmp.ne.s32.totalorder %s138, %s139
      %p148 = scmp.eq.s32.totalorder %s23, 0
      %p149 = por %p147, %p148
      %p150 = scmp.ne.s32.totalorder %s138, %s139
      %p151 = scmp.eq.s32.totalorder %s24, 1
      %p152 = por %p150, %p151
      %p154 = scmp.ne.s32.totalorder %s139, %s153
      %p155 = scmp.eq.s32.totalorder %s24, 0
      %p156 = por %p154, %p155
      %s158 = sadd.s32 %s157, 1
      %p161 = scmp.eq.s32.totalorder %s18, 1
      %p162 = scmp.ne.s32.totalorder %s157, %s159
      %p163 = scmp.eq.s32.totalorder %s18, 0
      %p164 = por %p162, %p163
      %p165 = scmp.ne.s32.totalorder %s157, %s159
      %p166 = scmp.eq.s32.totalorder %s23, 1
      %p167 = por %p165, %p166
      %p168 = scmp.ne.s32.totalorder %s159, %s160
      %p169 = scmp.eq.s32.totalorder %s23, 0
      %p170 = por %p168, %p169
      %p171 = scmp.ne.s32.totalorder %s159, %s160
      %p172 = scmp.eq.s32.totalorder %s24, 1
      %p173 = por %p171, %p172
      %p175 = scmp.ne.s32.totalorder %s160, %s174
      %p176 = scmp.eq.s32.totalorder %s24, 0
      %p177 = por %p175, %p176
      %s179 = sadd.s32 %s178, 1
      %p182 = scmp.eq.s32.totalorder %s18, 1
      %p183 = scmp.ne.s32.totalorder %s178, %s180
      %p184 = scmp.eq.s32.totalorder %s18, 0
      %p185 = por %p183, %p184
      %p186 = scmp.ne.s32.totalorder %s178, %s180
      %p187 = scmp.eq.s32.totalorder %s23, 1
      %p188 = por %p186, %p187
      %p189 = scmp.ne.s32.totalorder %s180, %s181
      %p190 = scmp.eq.s32.totalorder %s23, 0
      %p191 = por %p189, %p190
      %p192 = scmp.ne.s32.totalorder %s180, %s181
      %p193 = scmp.eq.s32.totalorder %s24, 1
      %p194 = por %p192, %p193
      %p196 = scmp.ne.s32.totalorder %s181, %s195
      %p197 = scmp.eq.s32.totalorder %s24, 0
      %p198 = por %p196, %p197
      %s199 = ssub.s32 %s18, %s25
      %p200 = scmp.eq.s32.totalorder %s199, 0
      %s202 = sadd.s32 %s201, 1
      %s203 = scalar_select %p200, %s201, %s202
      %p206 = pneg %p200
      %p207 = scmp.eq.s32.totalorder %s18, 1
      %p208 = por %p206, %p207
      %p209 = scmp.ne.s32.totalorder %s201, %s204
      %p210 = scmp.eq.s32.totalorder %s18, 0
      %p211 = por %p209, %p210
      %p212 = scmp.ne.s32.totalorder %s201, %s204
      %p213 = scmp.eq.s32.totalorder %s23, 1
      %p214 = por %p212, %p213
      %p215 = scmp.ne.s32.totalorder %s204, %s205
      %p216 = scmp.eq.s32.totalorder %s23, 0
      %p217 = por %p215, %p216
      %p218 = scmp.ne.s32.totalorder %s204, %s205
      %p219 = scmp.eq.s32.totalorder %s24, 1
      %p220 = por %p218, %p219
      %p222 = scmp.ne.s32.totalorder %s205, %s221
      %p223 = scmp.eq.s32.totalorder %s24, 0
      %p224 = por %p222, %p223
      %p225 = scmp.le.s32.totalorder 1, %s18
      %p226 = scmp.lt.s32.totalorder %s18, 3
      %p227 = pnand %p225, %p226
      %p228 = pneg %p227
      // Predicated region
      $region9: #{stem_forward.1} parent=5 // pred_check
        _
      $region10: #{stem_forward.1} parent=5 // pred_check_branch
        %230 = sbr.rel (%p227) target = $region12
      $region11: #{stem_forward.1} parent=5 // pred_region
        %s231 = ssub.s32 %s18, 1
        // Predicated region
        $region13: #{stem_forward.1} parent=11 // pred_check
          %p232 = pneg %p65
        $region14: #{stem_forward.1} parent=11 // pred_check_branch
          %234 = sbr.rel (%p232) target = $region16
        $region15: #{stem_forward.1} parent=11 // pred_region
          %s236 = ssub.s32 7680, 7680
          %237 = vsyncadd [#allocation3], %s236
          %s238 = sshll.u32 [#allocation2], 4
          %s239 = int_to_ptr.vmem [resolvable:$true] %s238
          %244 = dma.hbm_to_vmem [thread:$0]  %s1, 7680, %s239, [#allocation3], 384, 384, 24
        $region16: #{stem_forward.1} parent=11 // pred_fallthru
          _
        // Predicated region
        $region17: #{stem_forward.1} parent=11 // pred_check
          %p245 = pneg %p86
        $region18: #{stem_forward.1} parent=11 // pred_check_branch
          %247 = sbr.rel (%p245) target = $region20
        $region19: #{stem_forward.1} parent=11 // pred_region
          %s249 = ssub.s32 96, 96
          %250 = vsyncadd [#allocation5], %s249
          %s252 = sshll.u32 [#allocation4], 4
          %s253 = int_to_ptr.vmem [resolvable:$true] %s252
          %255 = dma.hbm_to_vmem [thread:$0]  %s2, 96, %s253, [#allocation5]
        $region20: #{stem_forward.1} parent=11 // pred_fallthru
          _
        // Predicated region
        $region21: #{stem_forward.1} parent=11 // pred_check
          %p256 = pneg %p107
        $region22: #{stem_forward.1} parent=11 // pred_check_branch
          %258 = sbr.rel (%p256) target = $region24
        $region23: #{stem_forward.1} parent=11 // pred_region
          %s260 = ssub.s32 128, 128
          %261 = vsyncadd [#allocation5], %s260
          %s262 = sshll.u32 [#allocation6], 4
          %s263 = int_to_ptr.vmem [resolvable:$true] %s262
          %268 = dma.hbm_to_vmem [thread:$0]  %s3, 128, %s263, [#allocation5], 64, 64, 4
        $region24: #{stem_forward.1} parent=11 // pred_fallthru
          _
        // Predicated region
        $region25: #{stem_forward.1} parent=11 // pred_check
          %p269 = pneg %p128
        $region26: #{stem_forward.1} parent=11 // pred_check_branch
          %271 = sbr.rel (%p269) target = $region28
        $region27: #{stem_forward.1} parent=11 // pred_region
          %s273 = ssub.s32 17664, 17664
          %274 = vsyncadd [#allocation8], %s273
          %s275 = sshll.u32 [#allocation7], 4
          %s276 = int_to_ptr.vmem [resolvable:$true] %s275
          %281 = dma.hbm_to_vmem [thread:$0]  %s4, 17664, %s276, [#allocation8], 192, 192, 12
        $region28: #{stem_forward.1} parent=11 // pred_fallthru
          _
        // Predicated region
        $region29: #{stem_forward.1} parent=11 // pred_check
          %p282 = pneg %p149
        $region30: #{stem_forward.1} parent=11 // pred_check_branch
          %284 = sbr.rel (%p282) target = $region32
        $region31: #{stem_forward.1} parent=11 // pred_region
          %s286 = ssub.s32 61440, 61440
          %287 = vsyncadd [#allocation8], %s286
          %s288 = sshll.u32 [#allocation9], 4
          %s289 = int_to_ptr.vmem [resolvable:$true] %s288
          %294 = dma.hbm_to_vmem [thread:$0]  %s5, 61440, %s289, [#allocation8], 256, 256, 16
        $region32: #{stem_forward.1} parent=11 // pred_fallthru
          _
        // Predicated region
        $region33: #{stem_forward.1} parent=11 // pred_check
          %p295 = pneg %p170
        $region34: #{stem_forward.1} parent=11 // pred_check_branch
          %297 = sbr.rel (%p295) target = $region36
        $region35: #{stem_forward.1} parent=11 // pred_region
          %s299 = ssub.s32 64, 64
          %300 = vsyncadd [#allocation11], %s299
          %s302 = sshll.u32 [#allocation10], 4
          %s303 = int_to_ptr.vmem [resolvable:$true] %s302
          %305 = dma.hbm_to_vmem [thread:$0]  %s6, 64, %s303, [#allocation11]
        $region36: #{stem_forward.1} parent=11 // pred_fallthru
          _
        // Predicated region
        $region37: #{stem_forward.1} parent=11 // pred_check
          %p306 = pneg %p191
        $region38: #{stem_forward.1} parent=11 // pred_check_branch
          %308 = sbr.rel (%p306) target = $region40
        $region39: #{stem_forward.1} parent=11 // pred_region
          %s310 = ssub.s32 64, 64
          %311 = vsyncadd [#allocation11], %s310
          %s313 = sshll.u32 [#allocation12], 4
          %s314 = int_to_ptr.vmem [resolvable:$true] %s313
          %316 = dma.hbm_to_vmem [thread:$0]  %s7, 64, %s314, [#allocation11]
        $region40: #{stem_forward.1} parent=11 // pred_fallthru
          _
      $region12: #{stem_forward.1} parent=5 // pred_fallthru
        _
      %p317 = scmp.lt.s32.totalorder %s18, 2
      // Predicated region
      $region41: #{stem_forward.1} parent=5 // pred_check
        %p318 = pneg %p317
      $region42: #{stem_forward.1} parent=5 // pred_check_branch
        %320 = sbr.rel (%p318) target = $region44
      $region43: #{stem_forward.1} parent=5 // pred_region
        // Predicated region
        $region45: #{stem_forward.1} parent=43 // pred_check
          %p321 = pneg %p38
        $region46: #{stem_forward.1} parent=43 // pred_check_branch
          %323 = sbr.rel (%p321) target = $region48
        $region47: #{stem_forward.1} parent=43 // pred_region
          %p324 = scmp.lt.s32.totalorder %s18, 1
          %s325 = scalar_select %p324, %s18, 1
          %s326 = smul.addr %s325, 4
          %s327 = smul.addr %s326, 8
          %s328 = scalar_lea.vmem %s0, %s327
        $region48: #{stem_forward.1} parent=43 // pred_fallthru
          _
      $region44: #{stem_forward.1} parent=5 // pred_fallthru
        _
      %p329 = scmp.le.s32.totalorder 1, %s18
      %p330 = scmp.lt.s32.totalorder %s18, 3
      %p331 = pnand %p329, %p330
      %p332 = pneg %p331
      // Predicated region
      $region49: #{stem_forward.1} parent=5 // pred_check
        _
      $region50: #{stem_forward.1} parent=5 // pred_check_branch
        %334 = sbr.rel (%p331) target = $region52
      $region51: #{stem_forward.1} parent=5 // pred_region
        %s335 = ssub.s32 %s18, 1
        // Predicated region
        $region53: #{stem_forward.1} parent=51 // pred_check
          %p336 = pneg %p65
        $region54: #{stem_forward.1} parent=51 // pred_check_branch
          %338 = sbr.rel (%p336) target = $region56
        $region55: #{stem_forward.1} parent=51 // pred_region
          %339 = dma.done [#allocation3], 7680
        $region56: #{stem_forward.1} parent=51 // pred_fallthru
          _
        // Predicated region
        $region57: #{stem_forward.1} parent=51 // pred_check
          %p340 = pneg %p86
        $region58: #{stem_forward.1} parent=51 // pred_check_branch
          %342 = sbr.rel (%p340) target = $region60
        $region59: #{stem_forward.1} parent=51 // pred_region
          %343 = dma.done [#allocation5], 96
        $region60: #{stem_forward.1} parent=51 // pred_fallthru
          _
        // Predicated region
        $region61: #{stem_forward.1} parent=51 // pred_check
          %p344 = pneg %p107
        $region62: #{stem_forward.1} parent=51 // pred_check_branch
          %346 = sbr.rel (%p344) target = $region64
        $region63: #{stem_forward.1} parent=51 // pred_region
          %347 = dma.done [#allocation5], 128
        $region64: #{stem_forward.1} parent=51 // pred_fallthru
          _
        // Predicated region
        $region65: #{stem_forward.1} parent=51 // pred_check
          %p348 = pneg %p128
        $region66: #{stem_forward.1} parent=51 // pred_check_branch
          %350 = sbr.rel (%p348) target = $region68
        $region67: #{stem_forward.1} parent=51 // pred_region
          %351 = dma.done [#allocation8], 17664
        $region68: #{stem_forward.1} parent=51 // pred_fallthru
          _
        // Predicated region
        $region69: #{stem_forward.1} parent=51 // pred_check
          %p352 = pneg %p149
        $region70: #{stem_forward.1} parent=51 // pred_check_branch
          %354 = sbr.rel (%p352) target = $region72
        $region71: #{stem_forward.1} parent=51 // pred_region
          %355 = dma.done [#allocation8], 61440
        $region72: #{stem_forward.1} parent=51 // pred_fallthru
          _
        // Predicated region
        $region73: #{stem_forward.1} parent=51 // pred_check
          %p356 = pneg %p170
        $region74: #{stem_forward.1} parent=51 // pred_check_branch
          %358 = sbr.rel (%p356) target = $region76
        $region75: #{stem_forward.1} parent=51 // pred_region
          %359 = dma.done [#allocation11], 64
        $region76: #{stem_forward.1} parent=51 // pred_fallthru
          _
        // Predicated region
        $region77: #{stem_forward.1} parent=51 // pred_check
          %p360 = pneg %p191
        $region78: #{stem_forward.1} parent=51 // pred_check_branch
          %362 = sbr.rel (%p360) target = $region80
        $region79: #{stem_forward.1} parent=51 // pred_region
          %363 = dma.done [#allocation11], 64
        $region80: #{stem_forward.1} parent=51 // pred_fallthru
          _
        %p364 = scmp.lt.s32.totalorder %s23, 1
        %s365 = scalar_select %p364, %s23, 1
        %s366 = smul.addr %s365, 4
        %s367 = smul.addr %s366, 8
        %s368 = scalar_lea.vmem %s0, %s367
        %p369 = pneg %p44
        %p370 = pneg %p41
        %p371 = pneg %p65
        %p372 = pneg %p62
        %p373 = pneg %p86
        %p374 = pneg %p83
        %p375 = pneg %p107
        %p376 = pneg %p104
        %p377 = pneg %p128
        %p378 = pneg %p125
        %p379 = pneg %p149
        %p380 = pneg %p146
        %p381 = pneg %p170
        %p382 = pneg %p167
        %p383 = pneg %p191
        %p384 = pneg %p188
        %p385 = pneg %p217
        %p386 = pneg %p214
        %p387 = scmp.lt.s32.totalorder %s23, 1
        %s388 = scalar_select %p387, %s23, 1
        %s389 = smul.addr %s388, 2
        %s390 = smul.addr %s389, 4
        %s391 = scalar_lea.vmem %s8, %s390
        %p392 = scmp.lt.s32.totalorder %s23, 1
        %s393 = scalar_select %p392, %s23, 1
        %s394 = smul.addr %s393, 4
        %s395 = smul.addr %s394, 8
        %s396 = scalar_lea.vmem %s0, %s395
        %p397 = scmp.lt.s32.totalorder %s23, 1
        %s398 = scalar_select %p397, %s23, 1
        %s399 = smul.addr %s398, 2
        %s400 = smul.addr %s399, 4
        %s401 = scalar_lea.vmem %s8, %s400
        %v403 = vld [vmem:[%s396] sm:$0xff]
        %v404 = vld [vmem:[%s396 + $0x8] sm:$0xff]
        %v405 = vld [vmem:[%s396 + $0x10] sm:$0xff]
        %v406 = vld [vmem:[%s396 + $0x18] sm:$0xf]
        %v407 = vpack.c.bf16 %v404, %v403
        %v408 = vpack.c.bf16 %v405, %v405
        %v409 = vld [vmem:[#allocation2] sm:$0xff]
        %v410 = vld [vmem:[#allocation2 + $0x8] sm:$0xff]
        %v411 = vld [vmem:[#allocation2 + $0x10] sm:$0xff]
        %v412 = vld [vmem:[#allocation2 + $0x18] sm:$0xff]
        %v413 = vld [vmem:[#allocation2 + $0x20] sm:$0xff]
        %v414 = vld [vmem:[#allocation2 + $0x28] sm:$0xff]
        %v415 = vld [vmem:[#allocation2 + $0x30] sm:$0xff]
        %v416 = vld [vmem:[#allocation2 + $0x38] sm:$0xff]
        %v417 = vld [vmem:[#allocation2 + $0x40] sm:$0xff]
        %v418 = vld [vmem:[#allocation2 + $0x48] sm:$0x33]
        %v419 = vld [vmem:[#allocation2 + $0x50] sm:$0x33]
        %v420 = vld [vmem:[#allocation2 + $0x58] sm:$0x33]
        %v421 = vpack.c.bf16 %v406, %v405
        %s422 = scalar_lea.vmem [#allocation2], 96
        %v423 = vld [vmem:[%s422] sm:$0xff]
        %v424 = vld [vmem:[%s422 + $0x8] sm:$0xff]
        %v425 = vld [vmem:[%s422 + $0x10] sm:$0xff]
        %v426 = vld [vmem:[%s422 + $0x18] sm:$0xff]
        %v427 = vld [vmem:[%s422 + $0x20] sm:$0xff]
        %v428 = vld [vmem:[%s422 + $0x28] sm:$0xff]
        %v429 = vld [vmem:[%s422 + $0x30] sm:$0xff]
        %v430 = vld [vmem:[%s422 + $0x38] sm:$0xff]
        %v431 = vld [vmem:[%s422 + $0x40] sm:$0xff]
        %v432 = vld [vmem:[%s422 + $0x48] sm:$0x33]
        %v433 = vld [vmem:[%s422 + $0x50] sm:$0x33]
        %v434 = vld [vmem:[%s422 + $0x58] sm:$0x33]
        %vm435 = vsmask.f32 7424
        %v437 = vshrl.u32 %v407, 16
        %v439 = vshll.u32 %v407, 16
        %v441 = vrot.slane %v439, 1
        %v442 = vor.u32 %v437, %v441
        %v444 = vshll.u32 %v421, 16
        %v446 = vrot.slane %v444, 1
        %v447 = vsel %vm435, %v442, %v446
        %v448 = vshrl.u32 %v421, 16
        %v450 = vor.u32 %v448, %v446
        %v463 = vunpack.c.l.b16 %v423
        %v464 = vunpack.c.h.b16 %v423
        %v465 = vunpack.c.l.b16 %v424
        %v466 = vunpack.c.h.b16 %v424
        %v467 = vunpack.c.l.b16 %v425
        %v468 = vunpack.c.h.b16 %v425
        %v469 = vunpack.c.l.b16 %v426
        %v470 = vunpack.c.h.b16 %v426
        %v471 = vunpack.c.l.b16 %v427
        %v472 = vunpack.c.h.b16 %v427
        %v473 = vunpack.c.l.b16 %v428
        %v474 = vunpack.c.h.b16 %v428
        %v475 = vunpack.c.l.b16 %v429
        %v476 = vunpack.c.h.b16 %v429
        %v477 = vunpack.c.l.b16 %v430
        %v478 = vunpack.c.h.b16 %v430
        %v479 = vunpack.c.l.b16 %v431
        %v480 = vunpack.c.h.b16 %v431
        %v481 = vunpack.c.l.b16 %v432
        %v482 = vunpack.c.h.b16 %v432
        %v483 = vunpack.c.l.b16 %v433
        %v484 = vunpack.c.h.b16 %v433
        %v485 = vunpack.c.l.b16 %v434
        %v486 = vunpack.c.h.b16 %v434
        %v487 = vpack.c.b16 %v469, %v463
        %v488 = vpack.c.b16 %v470, %v464
        %v489 = vpack.c.b16 %v471, %v465
        %v490 = vpack.c.b16 %v472, %v466
        %v491 = vpack.c.b16 %v473, %v467
        %v492 = vpack.c.b16 %v474, %v468
        %v493 = vpack.c.b16 %v481, %v475
        %v494 = vpack.c.b16 %v482, %v476
        %v495 = vpack.c.b16 %v483, %v477
        %v496 = vpack.c.b16 %v484, %v478
        %v497 = vpack.c.b16 %v485, %v479
        %v498 = vpack.c.b16 %v486, %v480
        %vm505 = vcmask 228352
        %v507 = vsel %vm505, %v447, 0
        %v510 = vsel %vm505, %v450, 0
        %vm512 = vcmask 1045504
        %v514 = vsel %vm512, %v493, 0
        %v517 = vsel %vm512, %v494, 0
        %v520 = vsel %vm512, %v495, 0
        %v523 = vsel %vm512, %v496, 0
        %v526 = vsel %vm512, %v497, 0
        %v529 = vsel %vm512, %v498, 0
        %531 = vmatprep.subr.bf16.mxu0 %v488
        %532 = vmatpush1.bf16.msra.mxu0 %v487
        %533 = vmatprep.subr.bf16.mxu0 %v517
        %534 = vmatpush1.bf16.msra.mxu0 %v514
        %535 = vmatprep.subr.bf16.mxu0 0
        %536 = vmatpush1.bf16.msra.mxu0 0
        %537 = vmatprep.subr.bf16.mxu0 0
        %538 = vmatpush1.bf16.msra.mxu0 0
        %539 = vmatprep.subr.bf16.mxu0 0
        %540 = vmatpush1.bf16.msra.mxu0 0
        %541 = vmatprep.subr.bf16.mxu0 0
        %542 = vmatpush1.bf16.msra.mxu0 0
        %543 = vmatprep.subr.bf16.mxu0 0
        %544 = vmatpush1.bf16.msra.mxu0 0
        %545 = vmatprep.subr.bf16.mxu0 0
        %546 = vmatpush1.bf16.msra.mxu0 0
        %547 = vmatprep.subr.bf16.mxu0 0
        %548 = vmatpush1.bf16.msra.mxu0 0
        %549 = vmatprep.subr.bf16.mxu0 0
        %550 = vmatpush1.bf16.msra.mxu0 0
        %551 = vmatprep.subr.bf16.mxu0 0
        %552 = vmatpush1.bf16.msra.mxu0 0
        %553 = vmatprep.subr.bf16.mxu0 0
        %554 = vmatpush1.bf16.msra.mxu0 0
        %555 = vmatprep.subr.bf16.mxu0 0
        %556 = vmatpush1.bf16.msra.mxu0 0
        %557 = vmatprep.subr.bf16.mxu0 0
        %558 = vmatpush1.bf16.msra.mxu0 0
        %559 = vmatprep.subr.bf16.mxu0 0
        %560 = vmatpush1.bf16.msra.mxu0 0
        %561 = vmatprep.subr.bf16.mxu0 0
        %562 = vmatpush1.bf16.msra.mxu0 0
        %563 = vmatprep.mubr.bf16.mxu0 0
        %564 = vmatmul.mubr.bf16.gmra.mrb[0].mxu0 %v507
        %v565 = vpop.f32.mrb[0].mxu0
        %v566 = vadd.f32 0.0, %v565
        %v567 = vpop.f32.mrb[0].mxu0
        %v568 = vadd.f32 0.0, %v567
        %v569 = vpop.f32.mrb[0].mxu0
        %v570 = vadd.f32 0.0, %v569
        %v571 = vpop.f32.mrb[0].mxu0
        %v572 = vadd.f32 0.0, %v571
        %573 = vmatprep.mubr.bf16.mxu0 0
        %574 = vmatmul.mubr.bf16.gmra.mrb[0].mxu0 %v510
        %v575 = vpop.f32.mrb[0].mxu0
        %v576 = vadd.f32 0.0, %v575
        %v577 = vpop.f32.mrb[0].mxu0
        %v578 = vadd.f32 0.0, %v577
        %v579 = vpop.f32.mrb[0].mxu0
        %v580 = vpop.f32.mrb[0].mxu0
        %581 = vdwg.mxu0
        %582 = vmatprep.subr.bf16.mxu0 %v490
        %583 = vmatpush1.bf16.msra.mxu0 %v489
        %584 = vmatprep.subr.bf16.mxu0 %v523
        %585 = vmatpush1.bf16.msra.mxu0 %v520
        %586 = vmatprep.subr.bf16.mxu0 0
        %587 = vmatpush1.bf16.msra.mxu0 0
        %588 = vmatprep.subr.bf16.mxu0 0
        %589 = vmatpush1.bf16.msra.mxu0 0
        %590 = vmatprep.subr.bf16.mxu0 0
        %591 = vmatpush1.bf16.msra.mxu0 0
        %592 = vmatprep.subr.bf16.mxu0 0
        %593 = vmatpush1.bf16.msra.mxu0 0
        %594 = vmatprep.subr.bf16.mxu0 0
        %595 = vmatpush1.bf16.msra.mxu0 0
        %596 = vmatprep.subr.bf16.mxu0 0
        %597 = vmatpush1.bf16.msra.mxu0 0
        %598 = vmatprep.subr.bf16.mxu0 0
        %599 = vmatpush1.bf16.msra.mxu0 0
        %600 = vmatprep.subr.bf16.mxu0 0
        %601 = vmatpush1.bf16.msra.mxu0 0
        %602 = vmatprep.subr.bf16.mxu0 0
        %603 = vmatpush1.bf16.msra.mxu0 0
        %604 = vmatprep.subr.bf16.mxu0 0
        %605 = vmatpush1.bf16.msra.mxu0 0
        %606 = vmatprep.subr.bf16.mxu0 0
        %607 = vmatpush1.bf16.msra.mxu0 0
        %608 = vmatprep.subr.bf16.mxu0 0
        %609 = vmatpush1.bf16.msra.mxu0 0
        %610 = vmatprep.subr.bf16.mxu0 0
        %611 = vmatpush1.bf16.msra.mxu0 0
        %612 = vmatprep.subr.bf16.mxu0 0
        %613 = vmatpush1.bf16.msra.mxu0 0
        %614 = vmatprep.mubr.bf16.mxu0 0
        %615 = vmatmul.mubr.bf16.gmra.mrb[0].mxu0 %v507
        %v616 = vpop.f32.mrb[0].mxu0
        %v617 = vadd.f32 0.0, %v616
        %v618 = vpop.f32.mrb[0].mxu0
        %v619 = vadd.f32 0.0, %v618
        %v620 = vpop.f32.mrb[0].mxu0
        %v621 = vadd.f32 0.0, %v620
        %v622 = vpop.f32.mrb[0].mxu0
        %v623 = vadd.f32 0.0, %v622
        %624 = vmatprep.mubr.bf16.mxu0 0
        %625 = vmatmul.mubr.bf16.gmra.mrb[0].mxu0 %v510
        %v626 = vpop.f32.mrb[0].mxu0
        %v627 = vadd.f32 0.0, %v626
        %v628 = vpop.f32.mrb[0].mxu0
        %v629 = vadd.f32 0.0, %v628
        %v630 = vpop.f32.mrb[0].mxu0
        %v631 = vpop.f32.mrb[0].mxu0
        %632 = vdwg.mxu0
        %633 = vmatprep.subr.bf16.mxu0 %v492
        %634 = vmatpush1.bf16.msra.mxu0 %v491
        %635 = vmatprep.subr.bf16.mxu0 %v529
        %636 = vmatpush1.bf16.msra.mxu0 %v526
        %637 = vmatprep.subr.bf16.mxu0 0
        %638 = vmatpush1.bf16.msra.mxu0 0
        %639 = vmatprep.subr.bf16.mxu0 0
        %640 = vmatpush1.bf16.msra.mxu0 0
        %641 = vmatprep.subr.bf16.mxu0 0
        %642 = vmatpush1.bf16.msra.mxu0 0
        %643 = vmatprep.subr.bf16.mxu0 0
        %644 = vmatpush1.bf16.msra.mxu0 0
        %645 = vmatprep.subr.bf16.mxu0 0
        %646 = vmatpush1.bf16.msra.mxu0 0
        %647 = vmatprep.subr.bf16.mxu0 0
        %648 = vmatpush1.bf16.msra.mxu0 0
        %649 = vmatprep.subr.bf16.mxu0 0
        %650 = vmatpush1.bf16.msra.mxu0 0
        %651 = vmatprep.subr.bf16.mxu0 0
        %652 = vmatpush1.bf16.msra.mxu0 0
        %653 = vmatprep.subr.bf16.mxu0 0
        %654 = vmatpush1.bf16.msra.mxu0 0
        %655 = vmatprep.subr.bf16.mxu0 0
        %656 = vmatpush1.bf16.msra.mxu0 0
        %657 = vmatprep.subr.bf16.mxu0 0
        %658 = vmatpush1.bf16.msra.mxu0 0
        %659 = vmatprep.subr.bf16.mxu0 0
        %660 = vmatpush1.bf16.msra.mxu0 0
        %661 = vmatprep.subr.bf16.mxu0 0
        %662 = vmatpush1.bf16.msra.mxu0 0
        %663 = vmatprep.subr.bf16.mxu0 0
        %664 = vmatpush1.bf16.msra.mxu0 0
        %665 = vmatprep.mubr.bf16.mxu0 0
        %666 = vmatmul.mubr.bf16.gmra.mrb[0].mxu0 %v507
        %v667 = vpop.f32.mrb[0].mxu0
        %v668 = vadd.f32 0.0, %v667
        %v669 = vpop.f32.mrb[0].mxu0
        %v670 = vadd.f32 0.0, %v669
        %v671 = vpop.f32.mrb[0].mxu0
        %v672 = vadd.f32 0.0, %v671
        %v673 = vpop.f32.mrb[0].mxu0
        %v674 = vadd.f32 0.0, %v673
        %675 = vmatprep.mubr.bf16.mxu0 0
        %676 = vmatmul.mubr.bf16.gmra.mrb[0].mxu0 %v510
        %v677 = vpop.f32.mrb[0].mxu0
        %v678 = vadd.f32 0.0, %v677
        %v679 = vpop.f32.mrb[0].mxu0
        %v680 = vadd.f32 0.0, %v679
        %v681 = vpop.f32.mrb[0].mxu0
        %v682 = vpop.f32.mrb[0].mxu0
        %683 = vdwg.mxu0
        %v696 = vunpack.c.l.b16 %v409
        %v697 = vunpack.c.h.b16 %v409
        %v698 = vunpack.c.l.b16 %v410
        %v699 = vunpack.c.h.b16 %v410
        %v700 = vunpack.c.l.b16 %v411
        %v701 = vunpack.c.h.b16 %v411
        %v702 = vunpack.c.l.b16 %v412
        %v703 = vunpack.c.h.b16 %v412
        %v704 = vunpack.c.l.b16 %v413
        %v705 = vunpack.c.h.b16 %v413
        %v706 = vunpack.c.l.b16 %v414
        %v707 = vunpack.c.h.b16 %v414
        %v708 = vunpack.c.l.b16 %v415
        %v709 = vunpack.c.h.b16 %v415
        %v710 = vunpack.c.l.b16 %v416
        %v711 = vunpack.c.h.b16 %v416
        %v712 = vunpack.c.l.b16 %v417
        %v713 = vunpack.c.h.b16 %v417
        %v714 = vunpack.c.l.b16 %v418
        %v715 = vunpack.c.h.b16 %v418
        %v716 = vunpack.c.l.b16 %v419
        %v717 = vunpack.c.h.b16 %v419
        %v718 = vunpack.c.l.b16 %v420
        %v719 = vunpack.c.h.b16 %v420
        %v720 = vpack.c.b16 %v702, %v696
        %v721 = vpack.c.b16 %v703, %v697
        %v722 = vpack.c.b16 %v704, %v698
        %v723 = vpack.c.b16 %v705, %v699
        %v724 = vpack.c.b16 %v706, %v700
        %v725 = vpack.c.b16 %v707, %v701
        %v726 = vpack.c.b16 %v714, %v708
        %v727 = vpack.c.b16 %v715, %v709
        %v728 = vpack.c.b16 %v716, %v710
        %v729 = vpack.c.b16 %v717, %v711
        %v730 = vpack.c.b16 %v718, %v712
        %v731 = vpack.c.b16 %v719, %v713
        %v738 = vsel %vm505, %v407, 0
        %v741 = vsel %vm505, %v408, 0
        %v744 = vsel %vm512, %v726, 0
        %v747 = vsel %vm512, %v727, 0
        %v750 = vsel %vm512, %v728, 0
        %v753 = vsel %vm512, %v729, 0
        %v756 = vsel %vm512, %v730, 0
        %v759 = vsel %vm512, %v731, 0
        %761 = vmatprep.subr.bf16.mxu0 %v721
        %762 = vmatpush1.bf16.msra.mxu0 %v720
        %763 = vmatprep.subr.bf16.mxu0 %v747
        %764 = vmatpush1.bf16.msra.mxu0 %v744
        %765 = vmatprep.subr.bf16.mxu0 0
        %766 = vmatpush1.bf16.msra.mxu0 0
        %767 = vmatprep.subr.bf16.mxu0 0
        %768 = vmatpush1.bf16.msra.mxu0 0
        %769 = vmatprep.subr.bf16.mxu0 0
        %770 = vmatpush1.bf16.msra.mxu0 0
        %771 = vmatprep.subr.bf16.mxu0 0
        %772 = vmatpush1.bf16.msra.mxu0 0
        %773 = vmatprep.subr.bf16.mxu0 0
        %774 = vmatpush1.bf16.msra.mxu0 0
        %775 = vmatprep.subr.bf16.mxu0 0
        %776 = vmatpush1.bf16.msra.mxu0 0
        %777 = vmatprep.subr.bf16.mxu0 0
        %778 = vmatpush1.bf16.msra.mxu0 0
        %779 = vmatprep.subr.bf16.mxu0 0
        %780 = vmatpush1.bf16.msra.mxu0 0
        %781 = vmatprep.subr.bf16.mxu0 0
        %782 = vmatpush1.bf16.msra.mxu0 0
        %783 = vmatprep.subr.bf16.mxu0 0
        %784 = vmatpush1.bf16.msra.mxu0 0
        %785 = vmatprep.subr.bf16.mxu0 0
        %786 = vmatpush1.bf16.msra.mxu0 0
        %787 = vmatprep.subr.bf16.mxu0 0
        %788 = vmatpush1.bf16.msra.mxu0 0
        %789 = vmatprep.subr.bf16.mxu0 0
        %790 = vmatpush1.bf16.msra.mxu0 0
        %791 = vmatprep.subr.bf16.mxu0 0
        %792 = vmatpush1.bf16.msra.mxu0 0
        %793 = vmatprep.mubr.bf16.mxu0 0
        %794 = vmatmul.mubr.bf16.gmra.mrb[0].mxu0 %v738
        %v795 = vpop.f32.mrb[0].mxu0
        %v796 = vadd.f32 %v566, %v795
        %v797 = vpop.f32.mrb[0].mxu0
        %v798 = vadd.f32 %v568, %v797
        %v799 = vpop.f32.mrb[0].mxu0
        %v800 = vadd.f32 %v570, %v799
        %v801 = vpop.f32.mrb[0].mxu0
        %v802 = vadd.f32 %v572, %v801
        %803 = vmatprep.mubr.bf16.mxu0 0
        %804 = vmatmul.mubr.bf16.gmra.mrb[0].mxu0 %v741
        %v805 = vpop.f32.mrb[0].mxu0
        %v806 = vadd.f32 %v576, %v805
        %v807 = vpop.f32.mrb[0].mxu0
        %v808 = vadd.f32 %v578, %v807
        %v809 = vpop.f32.mrb[0].mxu0
        %v810 = vpop.f32.mrb[0].mxu0
        %811 = vdwg.mxu0
        %812 = vmatprep.subr.bf16.mxu0 %v723
        %813 = vmatpush1.bf16.msra.mxu0 %v722
        %814 = vmatprep.subr.bf16.mxu0 %v753
        %815 = vmatpush1.bf16.msra.mxu0 %v750
        %816 = vmatprep.subr.bf16.mxu0 0
        %817 = vmatpush1.bf16.msra.mxu0 0
        %818 = vmatprep.subr.bf16.mxu0 0
        %819 = vmatpush1.bf16.msra.mxu0 0
        %820 = vmatprep.subr.bf16.mxu0 0
        %821 = vmatpush1.bf16.msra.mxu0 0
        %822 = vmatprep.subr.bf16.mxu0 0
        %823 = vmatpush1.bf16.msra.mxu0 0
        %824 = vmatprep.subr.bf16.mxu0 0
        %825 = vmatpush1.bf16.msra.mxu0 0
        %826 = vmatprep.subr.bf16.mxu0 0
        %827 = vmatpush1.bf16.msra.mxu0 0
        %828 = vmatprep.subr.bf16.mxu0 0
        %829 = vmatpush1.bf16.msra.mxu0 0
        %830 = vmatprep.subr.bf16.mxu0 0
        %831 = vmatpush1.bf16.msra.mxu0 0
        %832 = vmatprep.subr.bf16.mxu0 0
        %833 = vmatpush1.bf16.msra.mxu0 0
        %834 = vmatprep.subr.bf16.mxu0 0
        %835 = vmatpush1.bf16.msra.mxu0 0
        %836 = vmatprep.subr.bf16.mxu0 0
        %837 = vmatpush1.bf16.msra.mxu0 0
        %838 = vmatprep.subr.bf16.mxu0 0
        %839 = vmatpush1.bf16.msra.mxu0 0
        %840 = vmatprep.subr.bf16.mxu0 0
        %841 = vmatpush1.bf16.msra.mxu0 0
        %842 = vmatprep.subr.bf16.mxu0 0
        %843 = vmatpush1.bf16.msra.mxu0 0
        %844 = vmatprep.mubr.bf16.mxu0 0
        %845 = vmatmul.mubr.bf16.gmra.mrb[0].mxu0 %v738
        %v846 = vpop.f32.mrb[0].mxu0
        %v847 = vadd.f32 %v617, %v846
        %v848 = vpop.f32.mrb[0].mxu0
        %v849 = vadd.f32 %v619, %v848
        %v850 = vpop.f32.mrb[0].mxu0
        %v851 = vadd.f32 %v621, %v850
        %v852 = vpop.f32.mrb[0].mxu0
        %v853 = vadd.f32 %v623, %v852
        %854 = vmatprep.mubr.bf16.mxu0 0
        %855 = vmatmul.mubr.bf16.gmra.mrb[0].mxu0 %v741
        %v856 = vpop.f32.mrb[0].mxu0
        %v857 = vadd.f32 %v627, %v856
        %v858 = vpop.f32.mrb[0].mxu0
        %v859 = vadd.f32 %v629, %v858
        %v860 = vpop.f32.mrb[0].mxu0
        %v861 = vpop.f32.mrb[0].mxu0
        %862 = vdwg.mxu0
        %863 = vmatprep.subr.bf16.mxu0 %v725
        %864 = vmatpush1.bf16.msra.mxu0 %v724
        %865 = vmatprep.subr.bf16.mxu0 %v759
        %866 = vmatpush1.bf16.msra.mxu0 %v756
        %867 = vmatprep.subr.bf16.mxu0 0
        %868 = vmatpush1.bf16.msra.mxu0 0
        %869 = vmatprep.subr.bf16.mxu0 0
        %870 = vmatpush1.bf16.msra.mxu0 0
        %871 = vmatprep.subr.bf16.mxu0 0
        %872 = vmatpush1.bf16.msra.mxu0 0
        %873 = vmatprep.subr.bf16.mxu0 0
        %874 = vmatpush1.bf16.msra.mxu0 0
        %875 = vmatprep.subr.bf16.mxu0 0
        %876 = vmatpush1.bf16.msra.mxu0 0
        %877 = vmatprep.subr.bf16.mxu0 0
        %878 = vmatpush1.bf16.msra.mxu0 0
        %879 = vmatprep.subr.bf16.mxu0 0
        %880 = vmatpush1.bf16.msra.mxu0 0
        %881 = vmatprep.subr.bf16.mxu0 0
        %882 = vmatpush1.bf16.msra.mxu0 0
        %883 = vmatprep.subr.bf16.mxu0 0
        %884 = vmatpush1.bf16.msra.mxu0 0
        %885 = vmatprep.subr.bf16.mxu0 0
        %886 = vmatpush1.bf16.msra.mxu0 0
        %887 = vmatprep.subr.bf16.mxu0 0
        %888 = vmatpush1.bf16.msra.mxu0 0
        %889 = vmatprep.subr.bf16.mxu0 0
        %890 = vmatpush1.bf16.msra.mxu0 0
        %891 = vmatprep.subr.bf16.mxu0 0
        %892 = vmatpush1.bf16.msra.mxu0 0
        %893 = vmatprep.subr.bf16.mxu0 0
        %894 = vmatpush1.bf16.msra.mxu0 0
        %895 = vmatprep.mubr.bf16.mxu0 0
        %896 = vmatmul.mubr.bf16.gmra.mrb[0].mxu0 %v738
        %v897 = vpop.f32.mrb[0].mxu0
        %v898 = vadd.f32 %v668, %v897
        %v899 = vpop.f32.mrb[0].mxu0
        %v900 = vadd.f32 %v670, %v899
        %v901 = vpop.f32.mrb[0].mxu0
        %v902 = vadd.f32 %v672, %v901
        %v903 = vpop.f32.mrb[0].mxu0
        %v904 = vadd.f32 %v674, %v903
        %905 = vmatprep.mubr.bf16.mxu0 0
        %906 = vmatmul.mubr.bf16.gmra.mrb[0].mxu0 %v741
        %v907 = vpop.f32.mrb[0].mxu0
        %v908 = vadd.f32 %v678, %v907
        %v909 = vpop.f32.mrb[0].mxu0
        %v910 = vadd.f32 %v680, %v909
        %v911 = vpop.f32.mrb[0].mxu0
        %v912 = vpop.f32.mrb[0].mxu0
        %913 = vdwg.mxu0
        %s914 = scalar_lea.vmem [#allocation2], 192
        %v915 = vld [vmem:[%s914] sm:$0xff]
        %v916 = vld [vmem:[%s914 + $0x8] sm:$0xff]
        %v917 = vld [vmem:[%s914 + $0x10] sm:$0xff]
        %v918 = vld [vmem:[%s914 + $0x18] sm:$0xff]
        %v919 = vld [vmem:[%s914 + $0x20] sm:$0xff]
        %v920 = vld [vmem:[%s914 + $0x28] sm:$0xff]
        %v921 = vld [vmem:[%s914 + $0x30] sm:$0xff]
        %v922 = vld [vmem:[%s914 + $0x38] sm:$0xff]
        %v923 = vld [vmem:[%s914 + $0x40] sm:$0xff]
        %v924 = vld [vmem:[%s914 + $0x48] sm:$0x33]
        %v925 = vld [vmem:[%s914 + $0x50] sm:$0x33]
        %v926 = vld [vmem:[%s914 + $0x58] sm:$0x33]
        %vm929 = vcmask 1046528
        %v930 = vrot.slane %v407, 1
        %v931 = vrot.slane %v421, 1
        %v932 = vsel %vm929, %v930, %v931
        %v945 = vunpack.c.l.b16 %v915
        %v946 = vunpack.c.h.b16 %v915
        %v947 = vunpack.c.l.b16 %v916
        %v948 = vunpack.c.h.b16 %v916
        %v949 = vunpack.c.l.b16 %v917
        %v950 = vunpack.c.h.b16 %v917
        %v951 = vunpack.c.l.b16 %v918
        %v952 = vunpack.c.h.b16 %v918
        %v953 = vunpack.c.l.b16 %v919
        %v954 = vunpack.c.h.b16 %v919
        %v955 = vunpack.c.l.b16 %v920
        %v956 = vunpack.c.h.b16 %v920
        %v957 = vunpack.c.l.b16 %v921
        %v958 = vunpack.c.h.b16 %v921
        %v959 = vunpack.c.l.b16 %v922
        %v960 = vunpack.c.h.b16 %v922
        %v961 = vunpack.c.l.b16 %v923
        %v962 = vunpack.c.h.b16 %v923
        %v963 = vunpack.c.l.b16 %v924
        %v964 = vunpack.c.h.b16 %v924
        %v965 = vunpack.c.l.b16 %v925
        %v966 = vunpack.c.h.b16 %v925
        %v967 = vunpack.c.l.b16 %v926
        %v968 = vunpack.c.h.b16 %v926
        %v969 = vpack.c.b16 %v951, %v945
        %v970 = vpack.c.b16 %v952, %v946
        %v971 = vpack.c.b16 %v953, %v947
        %v972 = vpack.c.b16 %v954, %v948
        %v973 = vpack.c.b16 %v955, %v949
        %v974 = vpack.c.b16 %v956, %v950
        %v975 = vpack.c.b16 %v963, %v957
        %v976 = vpack.c.b16 %v964, %v958
        %v977 = vpack.c.b16 %v965, %v959
        %v978 = vpack.c.b16 %v966, %v960
        %v979 = vpack.c.b16 %v967, %v961
        %v980 = vpack.c.b16 %v968, %v962
        %v988 = vsel %vm505, %v932, 0
        %v991 = vsel %vm505, %v931, 0
        %v994 = vsel %vm512, %v975, 0
        %v997 = vsel %vm512, %v976, 0
        %v1000 = vsel %vm512, %v977, 0
        %v1003 = vsel %vm512, %v978, 0
        %v1006 = vsel %vm512, %v979, 0
        %v1009 = vsel %vm512, %v980, 0
        %1011 = vmatprep.subr.bf16.mxu0 %v970
        %1012 = vmatpush1.bf16.msra.mxu0 %v969
        %1013 = vmatprep.subr.bf16.mxu0 %v997
        %1014 = vmatpush1.bf16.msra.mxu0 %v994
        %1015 = vmatprep.subr.bf16.mxu0 0
        %1016 = vmatpush1.bf16.msra.mxu0 0
        %1017 = vmatprep.subr.bf16.mxu0 0
        %1018 = vmatpush1.bf16.msra.mxu0 0
        %1019 = vmatprep.subr.bf16.mxu0 0
        %1020 = vmatpush1.bf16.msra.mxu0 0
        %1021 = vmatprep.subr.bf16.mxu0 0
        %1022 = vmatpush1.bf16.msra.mxu0 0
        %1023 = vmatprep.subr.bf16.mxu0 0
        %1024 = vmatpush1.bf16.msra.mxu0 0
        %1025 = vmatprep.subr.bf16.mxu0 0
        %1026 = vmatpush1.bf16.msra.mxu0 0
        %1027 = vmatprep.subr.bf16.mxu0 0
        %1028 = vmatpush1.bf16.msra.mxu0 0
        %1029 = vmatprep.subr.bf16.mxu0 0
        %1030 = vmatpush1.bf16.msra.mxu0 0
        %1031 = vmatprep.subr.bf16.mxu0 0
        %1032 = vmatpush1.bf16.msra.mxu0 0
        %1033 = vmatprep.subr.bf16.mxu0 0
        %1034 = vmatpush1.bf16.msra.mxu0 0
        %1035 = vmatprep.subr.bf16.mxu0 0
        %1036 = vmatpush1.bf16.msra.mxu0 0
        %1037 = vmatprep.subr.bf16.mxu0 0
        %1038 = vmatpush1.bf16.msra.mxu0 0
        %1039 = vmatprep.subr.bf16.mxu0 0
        %1040 = vmatpush1.bf16.msra.mxu0 0
        %1041 = vmatprep.subr.bf16.mxu0 0
        %1042 = vmatpush1.bf16.msra.mxu0 0
        %1043 = vmatprep.mubr.bf16.mxu0 0
        %1044 = vmatmul.mubr.bf16.gmra.mrb[0].mxu0 %v988
        %v1045 = vpop.f32.mrb[0].mxu0
        %v1046 = vadd.f32 0.0, %v1045
        %v1047 = vpop.f32.mrb[0].mxu0
        %v1048 = vadd.f32 0.0, %v1047
        %v1049 = vpop.f32.mrb[0].mxu0
        %v1050 = vadd.f32 0.0, %v1049
        %v1051 = vpop.f32.mrb[0].mxu0
        %v1052 = vadd.f32 0.0, %v1051
        %1053 = vmatprep.mubr.bf16.mxu0 0
        %1054 = vmatmul.mubr.bf16.gmra.mrb[0].mxu0 %v991
        %v1055 = vpop.f32.mrb[0].mxu0
        %v1056 = vadd.f32 0.0, %v1055
        %v1057 = vpop.f32.mrb[0].mxu0
        %v1058 = vadd.f32 0.0, %v1057
        %v1059 = vpop.f32.mrb[0].mxu0
        %v1060 = vpop.f32.mrb[0].mxu0
        %1061 = vdwg.mxu0
        %1062 = vmatprep.subr.bf16.mxu0 %v972
        %1063 = vmatpush1.bf16.msra.mxu0 %v971
        %1064 = vmatprep.subr.bf16.mxu0 %v1003
        %1065 = vmatpush1.bf16.msra.mxu0 %v1000
        %1066 = vmatprep.subr.bf16.mxu0 0
        %1067 = vmatpush1.bf16.msra.mxu0 0
        %1068 = vmatprep.subr.bf16.mxu0 0
        %1069 = vmatpush1.bf16.msra.mxu0 0
        %1070 = vmatprep.subr.bf16.mxu0 0
        %1071 = vmatpush1.bf16.msra.mxu0 0
        %1072 = vmatprep.subr.bf16.mxu0 0
        %1073 = vmatpush1.bf16.msra.mxu0 0
        %1074 = vmatprep.subr.bf16.mxu0 0
        %1075 = vmatpush1.bf16.msra.mxu0 0
        %1076 = vmatprep.subr.bf16.mxu0 0
        %1077 = vmatpush1.bf16.msra.mxu0 0
        %1078 = vmatprep.subr.bf16.mxu0 0
        %1079 = vmatpush1.bf16.msra.mxu0 0
        %1080 = vmatprep.subr.bf16.mxu0 0
        %1081 = vmatpush1.bf16.msra.mxu0 0
        %1082 = vmatprep.subr.bf16.mxu0 0
        %1083 = vmatpush1.bf16.msra.mxu0 0
        %1084 = vmatprep.subr.bf16.mxu0 0
        %1085 = vmatpush1.bf16.msra.mxu0 0
        %1086 = vmatprep.subr.bf16.mxu0 0
        %1087 = vmatpush1.bf16.msra.mxu0 0
        %1088 = vmatprep.subr.bf16.mxu0 0
        %1089 = vmatpush1.bf16.msra.mxu0 0
        %1090 = vmatprep.subr.bf16.mxu0 0
        %1091 = vmatpush1.bf16.msra.mxu0 0
        %1092 = vmatprep.subr.bf16.mxu0 0
        %1093 = vmatpush1.bf16.msra.mxu0 0
        %1094 = vmatprep.mubr.bf16.mxu0 0
        %1095 = vmatmul.mubr.bf16.gmra.mrb[0].mxu0 %v988
        %v1096 = vpop.f32.mrb[0].mxu0
        %v1097 = vadd.f32 0.0, %v1096
        %v1098 = vpop.f32.mrb[0].mxu0
        %v1099 = vadd.f32 0.0, %v1098
        %v1100 = vpop.f32.mrb[0].mxu0
        %v1101 = vadd.f32 0.0, %v1100
        %v1102 = vpop.f32.mrb[0].mxu0
        %v1103 = vadd.f32 0.0, %v1102
        %1104 = vmatprep.mubr.bf16.mxu0 0
        %1105 = vmatmul.mubr.bf16.gmra.mrb[0].mxu0 %v991
        %v1106 = vpop.f32.mrb[0].mxu0
        %v1107 = vadd.f32 0.0, %v1106
        %v1108 = vpop.f32.mrb[0].mxu0
        %v1109 = vadd.f32 0.0, %v1108
        %v1110 = vpop.f32.mrb[0].mxu0
        %v1111 = vpop.f32.mrb[0].mxu0
        %1112 = vdwg.mxu0
        %1113 = vmatprep.subr.bf16.mxu0 %v974
        %1114 = vmatpush1.bf16.msra.mxu0 %v973
        %1115 = vmatprep.subr.bf16.mxu0 %v1009
        %1116 = vmatpush1.bf16.msra.mxu0 %v1006
        %1117 = vmatprep.subr.bf16.mxu0 0
        %1118 = vmatpush1.bf16.msra.mxu0 0
        %1119 = vmatprep.subr.bf16.mxu0 0
        %1120 = vmatpush1.bf16.msra.mxu0 0
        %1121 = vmatprep.subr.bf16.mxu0 0
        %1122 = vmatpush1.bf16.msra.mxu0 0
        %1123 = vmatprep.subr.bf16.mxu0 0
        %1124 = vmatpush1.bf16.msra.mxu0 0
        %1125 = vmatprep.subr.bf16.mxu0 0
        %1126 = vmatpush1.bf16.msra.mxu0 0
        %1127 = vmatprep.subr.bf16.mxu0 0
        %1128 = vmatpush1.bf16.msra.mxu0 0
        %1129 = vmatprep.subr.bf16.mxu0 0
        %1130 = vmatpush1.bf16.msra.mxu0 0
        %1131 = vmatprep.subr.bf16.mxu0 0
        %1132 = vmatpush1.bf16.msra.mxu0 0
        %1133 = vmatprep.subr.bf16.mxu0 0
        %1134 = vmatpush1.bf16.msra.mxu0 0
        %1135 = vmatprep.subr.bf16.mxu0 0
        %1136 = vmatpush1.bf16.msra.mxu0 0
        %1137 = vmatprep.subr.bf16.mxu0 0
        %1138 = vmatpush1.bf16.msra.mxu0 0
        %1139 = vmatprep.subr.bf16.mxu0 0
        %1140 = vmatpush1.bf16.msra.mxu0 0
        %1141 = vmatprep.subr.bf16.mxu0 0
        %1142 = vmatpush1.bf16.msra.mxu0 0
        %1143 = vmatprep.subr.bf16.mxu0 0
        %1144 = vmatpush1.bf16.msra.mxu0 0
        %1145 = vmatprep.mubr.bf16.mxu0 0
        %1146 = vmatmul.mubr.bf16.gmra.mrb[0].mxu0 %v988
        %v1147 = vpop.f32.mrb[0].mxu0
        %v1148 = vadd.f32 0.0, %v1147
        %v1149 = vpop.f32.mrb[0].mxu0
        %v1150 = vadd.f32 0.0, %v1149
        %v1151 = vpop.f32.mrb[0].mxu0
        %v1152 = vadd.f32 0.0, %v1151
        %v1153 = vpop.f32.mrb[0].mxu0
        %v1154 = vadd.f32 0.0, %v1153
        %1155 = vmatprep.mubr.bf16.mxu0 0
        %1156 = vmatmul.mubr.bf16.gmra.mrb[0].mxu0 %v991
        %v1157 = vpop.f32.mrb[0].mxu0
        %v1158 = vadd.f32 0.0, %v1157
        %v1159 = vpop.f32.mrb[0].mxu0
        %v1160 = vadd.f32 0.0, %v1159
        %v1161 = vpop.f32.mrb[0].mxu0
        %v1162 = vpop.f32.mrb[0].mxu0
        %1163 = vdwg.mxu0
        %v1164 = vadd.f32 %v796, %v1046
        %v1165 = vadd.f32 %v798, %v1048
        %v1166 = vadd.f32 %v847, %v1097
        %v1167 = vadd.f32 %v849, %v1099
        %v1168 = vadd.f32 %v898, %v1148
        %v1169 = vadd.f32 %v900, %v1150
        %v1170 = vadd.f32 %v800, %v1050
        %v1171 = vadd.f32 %v802, %v1052
        %v1172 = vadd.f32 %v851, %v1101
        %v1173 = vadd.f32 %v853, %v1103
        %v1174 = vadd.f32 %v902, %v1152
        %v1175 = vadd.f32 %v904, %v1154
        %v1176 = vadd.f32 %v806, %v1056
        %v1177 = vadd.f32 %v808, %v1058
        %v1178 = vadd.f32 %v857, %v1107
        %v1179 = vadd.f32 %v859, %v1109
        %v1180 = vadd.f32 %v908, %v1158
        %v1181 = vadd.f32 %v910, %v1160
        %s1182 = scalar_lea.vmem [#allocation2], 288
        %v1183 = vld [vmem:[%s1182] sm:$0xff]
        %v1184 = vld [vmem:[%s1182 + $0x8] sm:$0xff]
        %v1185 = vld [vmem:[%s1182 + $0x10] sm:$0xff]
        %v1186 = vld [vmem:[%s1182 + $0x18] sm:$0xff]
        %v1187 = vld [vmem:[%s1182 + $0x20] sm:$0xff]
        %v1188 = vld [vmem:[%s1182 + $0x28] sm:$0xff]
        %v1189 = vld [vmem:[%s1182 + $0x30] sm:$0xff]
        %v1190 = vld [vmem:[%s1182 + $0x38] sm:$0xff]
        %v1191 = vld [vmem:[%s1182 + $0x40] sm:$0xff]
        %v1192 = vld [vmem:[%s1182 + $0x48] sm:$0x33]
        %v1193 = vld [vmem:[%s1182 + $0x50] sm:$0x33]
        %v1194 = vld [vmem:[%s1182 + $0x58] sm:$0x33]
        %vm1195 = vsmask.f32 6400
        %v1196 = vrot.slane %v437, 1
        %v1197 = vrot.slane %v439, 2
        %v1198 = vor.u32 %v1196, %v1197
        %v1199 = vrot.slane %v448, 1
        %v1200 = vrot.slane %v444, 2
        %v1201 = vor.u32 %v1199, %v1200
        %v1202 = vsel %vm1195, %v1198, %v1201
        %v1215 = vunpack.c.l.b16 %v1183
        %v1216 = vunpack.c.h.b16 %v1183
        %v1217 = vunpack.c.l.b16 %v1184
        %v1218 = vunpack.c.h.b16 %v1184
        %v1219 = vunpack.c.l.b16 %v1185
        %v1220 = vunpack.c.h.b16 %v1185
        %v1221 = vunpack.c.l.b16 %v1186
        %v1222 = vunpack.c.h.b16 %v1186
        %v1223 = vunpack.c.l.b16 %v1187
        %v1224 = vunpack.c.h.b16 %v1187
        %v1225 = vunpack.c.l.b16 %v1188
        %v1226 = vunpack.c.h.b16 %v1188
        %v1227 = vunpack.c.l.b16 %v1189
        %v1228 = vunpack.c.h.b16 %v1189
        %v1229 = vunpack.c.l.b16 %v1190
        %v1230 = vunpack.c.h.b16 %v1190
        %v1231 = vunpack.c.l.b16 %v1191
        %v1232 = vunpack.c.h.b16 %v1191
        %v1233 = vunpack.c.l.b16 %v1192
        %v1234 = vunpack.c.h.b16 %v1192
        %v1235 = vunpack.c.l.b16 %v1193
        %v1236 = vunpack.c.h.b16 %v1193
        %v1237 = vunpack.c.l.b16 %v1194
        %v1238 = vunpack.c.h.b16 %v1194
        %v1239 = vpack.c.b16 %v1221, %v1215
        %v1240 = vpack.c.b16 %v1222, %v1216
        %v1241 = vpack.c.b16 %v1223, %v1217
        %v1242 = vpack.c.b16 %v1224, %v1218
        %v1243 = vpack.c.b16 %v1225, %v1219
        %v1244 = vpack.c.b16 %v1226, %v1220
        %v1245 = vpack.c.b16 %v1233, %v1227
        %v1246 = vpack.c.b16 %v1234, %v1228
        %v1247 = vpack.c.b16 %v1235, %v1229
        %v1248 = vpack.c.b16 %v1236, %v1230
        %v1249 = vpack.c.b16 %v1237, %v1231
        %v1250 = vpack.c.b16 %v1238, %v1232
        %v1258 = vsel %vm505, %v1202, 0
        %v1261 = vsel %vm505, %v1201, 0
        %v1264 = vsel %vm512, %v1245, 0
        %v1267 = vsel %vm512, %v1246, 0
        %v1270 = vsel %vm512, %v1247, 0
        %v1273 = vsel %vm512, %v1248, 0
        %v1276 = vsel %vm512, %v1249, 0
        %v1279 = vsel %vm512, %v1250, 0
        %1281 = vmatprep.subr.bf16.mxu0 %v1240
        %1282 = vmatpush1.bf16.msra.mxu0 %v1239
        %1283 = vmatprep.subr.bf16.mxu0 %v1267
        %1284 = vmatpush1.bf16.msra.mxu0 %v1264
        %1285 = vmatprep.subr.bf16.mxu0 0
        %1286 = vmatpush1.bf16.msra.mxu0 0
        %1287 = vmatprep.subr.bf16.mxu0 0
        %1288 = vmatpush1.bf16.msra.mxu0 0
        %1289 = vmatprep.subr.bf16.mxu0 0
        %1290 = vmatpush1.bf16.msra.mxu0 0
        %1291 = vmatprep.subr.bf16.mxu0 0
        %1292 = vmatpush1.bf16.msra.mxu0 0
        %1293 = vmatprep.subr.bf16.mxu0 0
        %1294 = vmatpush1.bf16.msra.mxu0 0
        %1295 = vmatprep.subr.bf16.mxu0 0
        %1296 = vmatpush1.bf16.msra.mxu0 0
        %1297 = vmatprep.subr.bf16.mxu0 0
        %1298 = vmatpush1.bf16.msra.mxu0 0
        %1299 = vmatprep.subr.bf16.mxu0 0
        %1300 = vmatpush1.bf16.msra.mxu0 0
        %1301 = vmatprep.subr.bf16.mxu0 0
        %1302 = vmatpush1.bf16.msra.mxu0 0
        %1303 = vmatprep.subr.bf16.mxu0 0
        %1304 = vmatpush1.bf16.msra.mxu0 0
        %1305 = vmatprep.subr.bf16.mxu0 0
        %1306 = vmatpush1.bf16.msra.mxu0 0
        %1307 = vmatprep.subr.bf16.mxu0 0
        %1308 = vmatpush1.bf16.msra.mxu0 0
        %1309 = vmatprep.subr.bf16.mxu0 0
        %1310 = vmatpush1.bf16.msra.mxu0 0
        %1311 = vmatprep.subr.bf16.mxu0 0
        %1312 = vmatpush1.bf16.msra.mxu0 0
        %1313 = vmatprep.mubr.bf16.mxu0 0
        %1314 = vmatmul.mubr.bf16.gmra.mrb[0].mxu0 %v1258
        %v1315 = vpop.f32.mrb[0].mxu0
        %v1316 = vadd.f32 0.0, %v1315
        %v1317 = vpop.f32.mrb[0].mxu0
        %v1318 = vadd.f32 0.0, %v1317
        %v1319 = vpop.f32.mrb[0].mxu0
        %v1320 = vadd.f32 0.0, %v1319
        %v1321 = vpop.f32.mrb[0].mxu0
        %v1322 = vadd.f32 0.0, %v1321
        %1323 = vmatprep.mubr.bf16.mxu0 0
        %1324 = vmatmul.mubr.bf16.gmra.mrb[0].mxu0 %v1261
        %v1325 = vpop.f32.mrb[0].mxu0
        %v1326 = vadd.f32 0.0, %v1325
        %v1327 = vpop.f32.mrb[0].mxu0
        %v1328 = vadd.f32 0.0, %v1327
        %v1329 = vpop.f32.mrb[0].mxu0
        %v1330 = vpop.f32.mrb[0].mxu0
        %1331 = vdwg.mxu0
        %1332 = vmatprep.subr.bf16.mxu0 %v1242
        %1333 = vmatpush1.bf16.msra.mxu0 %v1241
        %1334 = vmatprep.subr.bf16.mxu0 %v1273
        %1335 = vmatpush1.bf16.msra.mxu0 %v1270
        %1336 = vmatprep.subr.bf16.mxu0 0
        %1337 = vmatpush1.bf16.msra.mxu0 0
        %1338 = vmatprep.subr.bf16.mxu0 0
        %1339 = vmatpush1.bf16.msra.mxu0 0
        %1340 = vmatprep.subr.bf16.mxu0 0
        %1341 = vmatpush1.bf16.msra.mxu0 0
        %1342 = vmatprep.subr.bf16.mxu0 0
        %1343 = vmatpush1.bf16.msra.mxu0 0
        %1344 = vmatprep.subr.bf16.mxu0 0
        %1345 = vmatpush1.bf16.msra.mxu0 0
        %1346 = vmatprep.subr.bf16.mxu0 0
        %1347 = vmatpush1.bf16.msra.mxu0 0
        %1348 = vmatprep.subr.bf16.mxu0 0
        %1349 = vmatpush1.bf16.msra.mxu0 0
        %1350 = vmatprep.subr.bf16.mxu0 0
        %1351 = vmatpush1.bf16.msra.mxu0 0
        %1352 = vmatprep.subr.bf16.mxu0 0
        %1353 = vmatpush1.bf16.msra.mxu0 0
        %1354 = vmatprep.subr.bf16.mxu0 0
        %1355 = vmatpush1.bf16.msra.mxu0 0
        %1356 = vmatprep.subr.bf16.mxu0 0
        %1357 = vmatpush1.bf16.msra.mxu0 0
        %1358 = vmatprep.subr.bf16.mxu0 0
        %1359 = vmatpush1.bf16.msra.mxu0 0
        %1360 = vmatprep.subr.bf16.mxu0 0
        %1361 = vmatpush1.bf16.msra.mxu0 0
        %1362 = vmatprep.subr.bf16.mxu0 0
        %1363 = vmatpush1.bf16.msra.mxu0 0
        %1364 = vmatprep.mubr.bf16.mxu0 0
        %1365 = vmatmul.mubr.bf16.gmra.mrb[0].mxu0 %v1258
        %v1366 = vpop.f32.mrb[0].mxu0
        %v1367 = vadd.f32 0.0, %v1366
        %v1368 = vpop.f32.mrb[0].mxu0
        %v1369 = vadd.f32 0.0, %v1368
        %v1370 = vpop.f32.mrb[0].mxu0
        %v1371 = vadd.f32 0.0, %v1370
        %v1372 = vpop.f32.mrb[0].mxu0
        %v1373 = vadd.f32 0.0, %v1372
        %1374 = vmatprep.mubr.bf16.mxu0 0
        %1375 = vmatmul.mubr.bf16.gmra.mrb[0].mxu0 %v1261
        %v1376 = vpop.f32.mrb[0].mxu0
        %v1377 = vadd.f32 0.0, %v1376
        %v1378 = vpop.f32.mrb[0].mxu0
        %v1379 = vadd.f32 0.0, %v1378
        %v1380 = vpop.f32.mrb[0].mxu0
        %v1381 = vpop.f32.mrb[0].mxu0
        %1382 = vdwg.mxu0
        %1383 = vmatprep.subr.bf16.mxu0 %v1244
        %1384 = vmatpush1.bf16.msra.mxu0 %v1243
        %1385 = vmatprep.subr.bf16.mxu0 %v1279
        %1386 = vmatpush1.bf16.msra.mxu0 %v1276
        %1387 = vmatprep.subr.bf16.mxu0 0
        %1388 = vmatpush1.bf16.msra.mxu0 0
        %1389 = vmatprep.subr.bf16.mxu0 0
        %1390 = vmatpush1.bf16.msra.mxu0 0
        %1391 = vmatprep.subr.bf16.mxu0 0
        %1392 = vmatpush1.bf16.msra.mxu0 0
        %1393 = vmatprep.subr.bf16.mxu0 0
        %1394 = vmatpush1.bf16.msra.mxu0 0
        %1395 = vmatprep.subr.bf16.mxu0 0
        %1396 = vmatpush1.bf16.msra.mxu0 0
        %1397 = vmatprep.subr.bf16.mxu0 0
        %1398 = vmatpush1.bf16.msra.mxu0 0
        %1399 = vmatprep.subr.bf16.mxu0 0
        %1400 = vmatpush1.bf16.msra.mxu0 0
        %1401 = vmatprep.subr.bf16.mxu0 0
        %1402 = vmatpush1.bf16.msra.mxu0 0
        %1403 = vmatprep.subr.bf16.mxu0 0
        %1404 = vmatpush1.bf16.msra.mxu0 0
        %1405 = vmatprep.subr.bf16.mxu0 0
        %1406 = vmatpush1.bf16.msra.mxu0 0
        %1407 = vmatprep.subr.bf16.mxu0 0
        %1408 = vmatpush1.bf16.msra.mxu0 0
        %1409 = vmatprep.subr.bf16.mxu0 0
        %1410 = vmatpush1.bf16.msra.mxu0 0
        %1411 = vmatprep.subr.bf16.mxu0 0
        %1412 = vmatpush1.bf16.msra.mxu0 0
        %1413 = vmatprep.subr.bf16.mxu0 0
        %1414 = vmatpush1.bf16.msra.mxu0 0
        %1415 = vmatprep.mubr.bf16.mxu0 0
        %1416 = vmatmul.mubr.bf16.gmra.mrb[0].mxu0 %v1258
        %v1417 = vpop.f32.mrb[0].mxu0
        %v1418 = vadd.f32 0.0, %v1417
        %v1419 = vpop.f32.mrb[0].mxu0
        %v1420 = vadd.f32 0.0, %v1419
        %v1421 = vpop.f32.mrb[0].mxu0
        %v1422 = vadd.f32 0.0, %v1421
        %v1423 = vpop.f32.mrb[0].mxu0
        %v1424 = vadd.f32 0.0, %v1423
        %1425 = vmatprep.mubr.bf16.mxu0 0
        %1426 = vmatmul.mubr.bf16.gmra.mrb[0].mxu0 %v1261
        %v1427 = vpop.f32.mrb[0].mxu0
        %v1428 = vadd.f32 0.0, %v1427
        %v1429 = vpop.f32.mrb[0].mxu0
        %v1430 = vadd.f32 0.0, %v1429
        %v1431 = vpop.f32.mrb[0].mxu0
        %v1432 = vpop.f32.mrb[0].mxu0
        %1433 = vdwg.mxu0
        %v1434 = vadd.f32 %v1164, %v1316
        %v1435 = vadd.f32 %v1165, %v1318
        %v1436 = vadd.f32 %v1166, %v1367
        %v1437 = vadd.f32 %v1167, %v1369
        %v1438 = vadd.f32 %v1168, %v1418
        %v1439 = vadd.f32 %v1169, %v1420
        %v1440 = vadd.f32 %v1170, %v1320
        %v1441 = vadd.f32 %v1171, %v1322
        %v1442 = vadd.f32 %v1172, %v1371
        %v1443 = vadd.f32 %v1173, %v1373
        %v1444 = vadd.f32 %v1174, %v1422
        %v1445 = vadd.f32 %v1175, %v1424
        %v1446 = vadd.f32 %v1176, %v1326
        %v1447 = vadd.f32 %v1177, %v1328
        %v1448 = vadd.f32 %v1178, %v1377
        %v1449 = vadd.f32 %v1179, %v1379
        %v1450 = vadd.f32 %v1180, %v1428
        %v1451 = vadd.f32 %v1181, %v1430
        %s1452 = scalar_lea.vmem [#allocation2], 384
        %v1453 = vld [vmem:[%s1452] sm:$0xff]
        %v1454 = vld [vmem:[%s1452 + $0x8] sm:$0xff]
        %v1455 = vld [vmem:[%s1452 + $0x10] sm:$0xff]
        %v1456 = vld [vmem:[%s1452 + $0x18] sm:$0xff]
        %v1457 = vld [vmem:[%s1452 + $0x20] sm:$0xff]
        %v1458 = vld [vmem:[%s1452 + $0x28] sm:$0xff]
        %v1459 = vld [vmem:[%s1452 + $0x30] sm:$0xff]
        %v1460 = vld [vmem:[%s1452 + $0x38] sm:$0xff]
        %v1461 = vld [vmem:[%s1452 + $0x40] sm:$0xff]
        %v1462 = vld [vmem:[%s1452 + $0x48] sm:$0x33]
        %v1463 = vld [vmem:[%s1452 + $0x50] sm:$0x33]
        %v1464 = vld [vmem:[%s1452 + $0x58] sm:$0x33]
        %vm1465 = vcmask 1045504
        %v1466 = vrot.slane %v407, 2
        %v1467 = vrot.slane %v421, 2
        %v1468 = vsel %vm1465, %v1466, %v1467
        %v1481 = vunpack.c.l.b16 %v1453
        %v1482 = vunpack.c.h.b16 %v1453
        %v1483 = vunpack.c.l.b16 %v1454
        %v1484 = vunpack.c.h.b16 %v1454
        %v1485 = vunpack.c.l.b16 %v1455
        %v1486 = vunpack.c.h.b16 %v1455
        %v1487 = vunpack.c.l.b16 %v1456
        %v1488 = vunpack.c.h.b16 %v1456
        %v1489 = vunpack.c.l.b16 %v1457
        %v1490 = vunpack.c.h.b16 %v1457
        %v1491 = vunpack.c.l.b16 %v1458
        %v1492 = vunpack.c.h.b16 %v1458
        %v1493 = vunpack.c.l.b16 %v1459
        %v1494 = vunpack.c.h.b16 %v1459
        %v1495 = vunpack.c.l.b16 %v1460
        %v1496 = vunpack.c.h.b16 %v1460
        %v1497 = vunpack.c.l.b16 %v1461
        %v1498 = vunpack.c.h.b16 %v1461
        %v1499 = vunpack.c.l.b16 %v1462
        %v1500 = vunpack.c.h.b16 %v1462
        %v1501 = vunpack.c.l.b16 %v1463
        %v1502 = vunpack.c.h.b16 %v1463
        %v1503 = vunpack.c.l.b16 %v1464
        %v1504 = vunpack.c.h.b16 %v1464
        %v1505 = vpack.c.b16 %v1487, %v1481
        %v1506 = vpack.c.b16 %v1488, %v1482
        %v1507 = vpack.c.b16 %v1489, %v1483
        %v1508 = vpack.c.b16 %v1490, %v1484
        %v1509 = vpack.c.b16 %v1491, %v1485
        %v1510 = vpack.c.b16 %v1492, %v1486
        %v1511 = vpack.c.b16 %v1499, %v1493
        %v1512 = vpack.c.b16 %v1500, %v1494
        %v1513 = vpack.c.b16 %v1501, %v1495
        %v1514 = vpack.c.b16 %v1502, %v1496
        %v1515 = vpack.c.b16 %v1503, %v1497
        %v1516 = vpack.c.b16 %v1504, %v1498
        %v1524 = vsel %vm505, %v1468, 0
        %v1527 = vsel %vm505, %v1467, 0
        %v1530 = vsel %vm512, %v1511, 0
        %v1533 = vsel %vm512, %v1512, 0
        %v1536 = vsel %vm512, %v1513, 0
        %v1539 = vsel %vm512, %v1514, 0
        %v1542 = vsel %vm512, %v1515, 0
        %v1545 = vsel %vm512, %v1516, 0
        %1547 = vmatprep.subr.bf16.mxu0 %v1506
        %1548 = vmatpush1.bf16.msra.mxu0 %v1505
        %1549 = vmatprep.subr.bf16.mxu0 %v1533
        %1550 = vmatpush1.bf16.msra.mxu0 %v1530
        %1551 = vmatprep.subr.bf16.mxu0 0
        %1552 = vmatpush1.bf16.msra.mxu0 0
        %1553 = vmatprep.subr.bf16.mxu0 0
        %1554 = vmatpush1.bf16.msra.mxu0 0
        %1555 = vmatprep.subr.bf16.mxu0 0
        %1556 = vmatpush1.bf16.msra.mxu0 0
        %1557 = vmatprep.subr.bf16.mxu0 0
        %1558 = vmatpush1.bf16.msra.mxu0 0
        %1559 = vmatprep.subr.bf16.mxu0 0
        %1560 = vmatpush1.bf16.msra.mxu0 0
        %1561 = vmatprep.subr.bf16.mxu0 0
        %1562 = vmatpush1.bf16.msra.mxu0 0
        %1563 = vmatprep.subr.bf16.mxu0 0
        %1564 = vmatpush1.bf16.msra.mxu0 0
        %1565 = vmatprep.subr.bf16.mxu0 0
        %1566 = vmatpush1.bf16.msra.mxu0 0
        %1567 = vmatprep.subr.bf16.mxu0 0
        %1568 = vmatpush1.bf16.msra.mxu0 0
        %1569 = vmatprep.subr.bf16.mxu0 0
        %1570 = vmatpush1.bf16.msra.mxu0 0
        %1571 = vmatprep.subr.bf16.mxu0 0
        %1572 = vmatpush1.bf16.msra.mxu0 0
        %1573 = vmatprep.subr.bf16.mxu0 0
        %1574 = vmatpush1.bf16.msra.mxu0 0
        %1575 = vmatprep.subr.bf16.mxu0 0
        %1576 = vmatpush1.bf16.msra.mxu0 0
        %1577 = vmatprep.subr.bf16.mxu0 0
        %1578 = vmatpush1.bf16.msra.mxu0 0
        %1579 = vmatprep.mubr.bf16.mxu0 0
        %1580 = vmatmul.mubr.bf16.gmra.mrb[0].mxu0 %v1524
        %v1581 = vpop.f32.mrb[0].mxu0
        %v1582 = vadd.f32 0.0, %v1581
        %v1583 = vpop.f32.mrb[0].mxu0
        %v1584 = vadd.f32 0.0, %v1583
        %v1585 = vpop.f32.mrb[0].mxu0
        %v1586 = vadd.f32 0.0, %v1585
        %v1587 = vpop.f32.mrb[0].mxu0
        %v1588 = vadd.f32 0.0, %v1587
        %1589 = vmatprep.mubr.bf16.mxu0 0
        %1590 = vmatmul.mubr.bf16.gmra.mrb[0].mxu0 %v1527
        %v1591 = vpop.f32.mrb[0].mxu0
        %v1592 = vadd.f32 0.0, %v1591
        %v1593 = vpop.f32.mrb[0].mxu0
        %v1594 = vadd.f32 0.0, %v1593
        %v1595 = vpop.f32.mrb[0].mxu0
        %v1596 = vpop.f32.mrb[0].mxu0
        %1597 = vdwg.mxu0
        %1598 = vmatprep.subr.bf16.mxu0 %v1508
        %1599 = vmatpush1.bf16.msra.mxu0 %v1507
        %1600 = vmatprep.subr.bf16.mxu0 %v1539
        %1601 = vmatpush1.bf16.msra.mxu0 %v1536
        %1602 = vmatprep.subr.bf16.mxu0 0
        %1603 = vmatpush1.bf16.msra.mxu0 0
        %1604 = vmatprep.subr.bf16.mxu0 0
        %1605 = vmatpush1.bf16.msra.mxu0 0
        %1606 = vmatprep.subr.bf16.mxu0 0
        %1607 = vmatpush1.bf16.msra.mxu0 0
        %1608 = vmatprep.subr.bf16.mxu0 0
        %1609 = vmatpush1.bf16.msra.mxu0 0
        %1610 = vmatprep.subr.bf16.mxu0 0
        %1611 = vmatpush1.bf16.msra.mxu0 0
        %1612 = vmatprep.subr.bf16.mxu0 0
        %1613 = vmatpush1.bf16.msra.mxu0 0
        %1614 = vmatprep.subr.bf16.mxu0 0
        %1615 = vmatpush1.bf16.msra.mxu0 0
        %1616 = vmatprep.subr.bf16.mxu0 0
        %1617 = vmatpush1.bf16.msra.mxu0 0
        %1618 = vmatprep.subr.bf16.mxu0 0
        %1619 = vmatpush1.bf16.msra.mxu0 0
        %1620 = vmatprep.subr.bf16.mxu0 0
        %1621 = vmatpush1.bf16.msra.mxu0 0
        %1622 = vmatprep.subr.bf16.mxu0 0
        %1623 = vmatpush1.bf16.msra.mxu0 0
        %1624 = vmatprep.subr.bf16.mxu0 0
        %1625 = vmatpush1.bf16.msra.mxu0 0
        %1626 = vmatprep.subr.bf16.mxu0 0
        %1627 = vmatpush1.bf16.msra.mxu0 0
        %1628 = vmatprep.subr.bf16.mxu0 0
        %1629 = vmatpush1.bf16.msra.mxu0 0
        %1630 = vmatprep.mubr.bf16.mxu0 0
        %1631 = vmatmul.mubr.bf16.gmra.mrb[0].mxu0 %v1524
        %v1632 = vpop.f32.mrb[0].mxu0
        %v1633 = vadd.f32 0.0, %v1632
        %v1634 = vpop.f32.mrb[0].mxu0
        %v1635 = vadd.f32 0.0, %v1634
        %v1636 = vpop.f32.mrb[0].mxu0
        %v1637 = vadd.f32 0.0, %v1636
        %v1638 = vpop.f32.mrb[0].mxu0
        %v1639 = vadd.f32 0.0, %v1638
        %1640 = vmatprep.mubr.bf16.mxu0 0
        %1641 = vmatmul.mubr.bf16.gmra.mrb[0].mxu0 %v1527
        %v1642 = vpop.f32.mrb[0].mxu0
        %v1643 = vadd.f32 0.0, %v1642
        %v1644 = vpop.f32.mrb[0].mxu0
        %v1645 = vadd.f32 0.0, %v1644
        %v1646 = vpop.f32.mrb[0].mxu0
        %v1647 = vpop.f32.mrb[0].mxu0
        %1648 = vdwg.mxu0
        %1649 = vmatprep.subr.bf16.mxu0 %v1510
        %1650 = vmatpush1.bf16.msra.mxu0 %v1509
        %1651 = vmatprep.subr.bf16.mxu0 %v1545
        %1652 = vmatpush1.bf16.msra.mxu0 %v1542
        %1653 = vmatprep.subr.bf16.mxu0 0
        %1654 = vmatpush1.bf16.msra.mxu0 0
        %1655 = vmatprep.subr.bf16.mxu0 0
        %1656 = vmatpush1.bf16.msra.mxu0 0
        %1657 = vmatprep.subr.bf16.mxu0 0
        %1658 = vmatpush1.bf16.msra.mxu0 0
        %1659 = vmatprep.subr.bf16.mxu0 0
        %1660 = vmatpush1.bf16.msra.mxu0 0
        %1661 = vmatprep.subr.bf16.mxu0 0
        %1662 = vmatpush1.bf16.msra.mxu0 0
        %1663 = vmatprep.subr.bf16.mxu0 0
        %1664 = vmatpush1.bf16.msra.mxu0 0
        %1665 = vmatprep.subr.bf16.mxu0 0
        %1666 = vmatpush1.bf16.msra.mxu0 0
        %1667 = vmatprep.subr.bf16.mxu0 0
        %1668 = vmatpush1.bf16.msra.mxu0 0
        %1669 = vmatprep.subr.bf16.mxu0 0
        %1670 = vmatpush1.bf16.msra.mxu0 0
        %1671 = vmatprep.subr.bf16.mxu0 0
        %1672 = vmatpush1.bf16.msra.mxu0 0
        %1673 = vmatprep.subr.bf16.mxu0 0
        %1674 = vmatpush1.bf16.msra.mxu0 0
        %1675 = vmatprep.subr.bf16.mxu0 0
        %1676 = vmatpush1.bf16.msra.mxu0 0
        %1677 = vmatprep.subr.bf16.mxu0 0
        %1678 = vmatpush1.bf16.msra.mxu0 0
        %1679 = vmatprep.subr.bf16.mxu0 0
        %1680 = vmatpush1.bf16.msra.mxu0 0
        %1681 = vmatprep.mubr.bf16.mxu0 0
        %1682 = vmatmul.mubr.bf16.gmra.mrb[0].mxu0 %v1524
        %v1683 = vpop.f32.mrb[0].mxu0
        %v1684 = vadd.f32 0.0, %v1683
        %v1685 = vpop.f32.mrb[0].mxu0
        %v1686 = vadd.f32 0.0, %v1685
        %v1687 = vpop.f32.mrb[0].mxu0
        %v1688 = vadd.f32 0.0, %v1687
        %v1689 = vpop.f32.mrb[0].mxu0
        %v1690 = vadd.f32 0.0, %v1689
        %1691 = vmatprep.mubr.bf16.mxu0 0
        %1692 = vmatmul.mubr.bf16.gmra.mrb[0].mxu0 %v1527
        %v1693 = vpop.f32.mrb[0].mxu0
        %v1694 = vadd.f32 0.0, %v1693
        %v1695 = vpop.f32.mrb[0].mxu0
        %v1696 = vadd.f32 0.0, %v1695
        %v1697 = vpop.f32.mrb[0].mxu0
        %v1698 = vpop.f32.mrb[0].mxu0
        %1699 = vdwg.mxu0
        %v1700 = vadd.f32 %v1434, %v1582
        %v1701 = vadd.f32 %v1435, %v1584
        %v1702 = vadd.f32 %v1436, %v1633
        %v1703 = vadd.f32 %v1437, %v1635
        %v1704 = vadd.f32 %v1438, %v1684
        %v1705 = vadd.f32 %v1439, %v1686
        %v1706 = vadd.f32 %v1440, %v1586
        %v1707 = vadd.f32 %v1441, %v1588
        %v1708 = vadd.f32 %v1442, %v1637
        %v1709 = vadd.f32 %v1443, %v1639
        %v1710 = vadd.f32 %v1444, %v1688
        %v1711 = vadd.f32 %v1445, %v1690
        %v1712 = vadd.f32 %v1446, %v1592
        %v1713 = vadd.f32 %v1447, %v1594
        %v1714 = vadd.f32 %v1448, %v1643
        %v1715 = vadd.f32 %v1449, %v1645
        %v1716 = vadd.f32 %v1450, %v1694
        %v1717 = vadd.f32 %v1451, %v1696
        %v1718 = vld [vmem:[#allocation4] sm:$0x3f]
        %v1720 = vlaneseq
        %v1721 = vshrl.u32 %v1720, 7
        %v1722 = vsub.s32 0, %v1721
        %v1723 = vrot.slane %v1718, %v1722
        %v1724 = vlaneseq
        %v1725 = vshrl.u32 %v1724, 7
        %v1726 = vsub.s32 1, %v1725
        %v1727 = vrot.slane %v1718, %v1726
        %v1728 = vlaneseq
        %v1729 = vshrl.u32 %v1728, 7
        %v1730 = vsub.s32 2, %v1729
        %v1731 = vrot.slane %v1718, %v1730
        %v1732 = vlaneseq
        %v1733 = vshrl.u32 %v1732, 7
        %v1734 = vsub.s32 3, %v1733
        %v1735 = vrot.slane %v1718, %v1734
        %v1736 = vlaneseq
        %v1737 = vshrl.u32 %v1736, 7
        %v1738 = vsub.s32 4, %v1737
        %v1739 = vrot.slane %v1718, %v1738
        %v1740 = vlaneseq
        %v1741 = vshrl.u32 %v1740, 7
        %v1742 = vsub.s32 5, %v1741
        %v1743 = vrot.slane %v1718, %v1742
        %v1750 = vadd.f32 %v1700, %v1723
        %v1751 = vadd.f32 %v1701, %v1727
        %v1752 = vadd.f32 %v1702, %v1731
        %v1753 = vadd.f32 %v1703, %v1735
        %v1754 = vadd.f32 %v1704, %v1739
        %v1755 = vadd.f32 %v1705, %v1743
        %v1756 = vadd.f32 %v1706, %v1723
        %v1757 = vadd.f32 %v1707, %v1727
        %v1758 = vadd.f32 %v1708, %v1731
        %v1759 = vadd.f32 %v1709, %v1735
        %v1760 = vadd.f32 %v1710, %v1739
        %v1761 = vadd.f32 %v1711, %v1743
        %v1762 = vadd.f32 %v1712, %v1723
        %v1763 = vadd.f32 %v1713, %v1727
        %v1764 = vadd.f32 %v1714, %v1731
        %v1765 = vadd.f32 %v1715, %v1735
        %v1766 = vadd.f32 %v1716, %v1739
        %v1767 = vadd.f32 %v1717, %v1743
        %1786 = vrot.lane.b32.xlu0 %v1750, 96
        %v1787 = vpop.permute.xlu0 %1786
        %1788 = vrot.lane.b32.xlu0 %v1751, 96
        %v1789 = vpop.permute.xlu0 %1788
        %1790 = vrot.lane.b32.xlu0 %v1752, 96
        %v1791 = vpop.permute.xlu0 %1790
        %1792 = vrot.lane.b32.xlu0 %v1753, 96
        %v1793 = vpop.permute.xlu0 %1792
        %1794 = vrot.lane.b32.xlu0 %v1754, 96
        %v1795 = vpop.permute.xlu0 %1794
        %1796 = vrot.lane.b32.xlu0 %v1755, 96
        %v1797 = vpop.permute.xlu0 %1796
        %1798 = vrot.lane.b32.xlu0 %v1756, 96
        %v1799 = vpop.permute.xlu0 %1798
        %1800 = vrot.lane.b32.xlu0 %v1757, 96
        %v1801 = vpop.permute.xlu0 %1800
        %1802 = vrot.lane.b32.xlu0 %v1758, 96
        %v1803 = vpop.permute.xlu0 %1802
        %1804 = vrot.lane.b32.xlu0 %v1759, 96
        %v1805 = vpop.permute.xlu0 %1804
        %1806 = vrot.lane.b32.xlu0 %v1760, 96
        %v1807 = vpop.permute.xlu0 %1806
        %1808 = vrot.lane.b32.xlu0 %v1761, 96
        %v1809 = vpop.permute.xlu0 %1808
        %1810 = vrot.lane.b32.xlu0 %v1762, 96
        %v1811 = vpop.permute.xlu0 %1810
        %1812 = vrot.lane.b32.xlu0 %v1763, 96
        %v1813 = vpop.permute.xlu0 %1812
        %1814 = vrot.lane.b32.xlu0 %v1764, 96
        %v1815 = vpop.permute.xlu0 %1814
        %1816 = vrot.lane.b32.xlu0 %v1765, 96
        %v1817 = vpop.permute.xlu0 %1816
        %1818 = vrot.lane.b32.xlu0 %v1766, 96
        %v1819 = vpop.permute.xlu0 %1818
        %1820 = vrot.lane.b32.xlu0 %v1767, 96
        %v1821 = vpop.permute.xlu0 %1820
        %vm1822 = vcmask 785408
        %v1823 = vsel %vm1822, %v1787, %v1789
        %v1824 = vsel %vm1822, %v1789, %v1791
        %v1825 = vsel %vm1822, %v1791, %v1793
        %v1826 = vsel %vm1822, %v1793, %v1795
        %v1827 = vsel %vm1822, %v1795, %v1797
        %v1828 = vsel %vm1822, %v1799, %v1801
        %v1829 = vsel %vm1822, %v1801, %v1803
        %v1830 = vsel %vm1822, %v1803, %v1805
        %v1831 = vsel %vm1822, %v1805, %v1807
        %v1832 = vsel %vm1822, %v1807, %v1809
        %v1833 = vsel %vm1822, %v1811, %v1813
        %v1834 = vsel %vm1822, %v1813, %v1815
        %v1835 = vsel %vm1822, %v1815, %v1817
        %v1836 = vsel %vm1822, %v1817, %v1819
        %v1837 = vsel %vm1822, %v1819, %v1821
        %v1856 = vmax.f32 %v1750, %v1823
        %v1857 = vmax.f32 %v1751, %v1824
        %v1858 = vmax.f32 %v1752, %v1825
        %v1859 = vmax.f32 %v1753, %v1826
        %v1860 = vmax.f32 %v1754, %v1827
        %v1861 = vmax.f32 %v1755, %v1797
        %v1862 = vmax.f32 %v1756, %v1828
        %v1863 = vmax.f32 %v1757, %v1829
        %v1864 = vmax.f32 %v1758, %v1830
        %v1865 = vmax.f32 %v1759, %v1831
        %v1866 = vmax.f32 %v1760, %v1832
        %v1867 = vmax.f32 %v1761, %v1809
        %v1868 = vmax.f32 %v1762, %v1833
        %v1869 = vmax.f32 %v1763, %v1834
        %v1870 = vmax.f32 %v1764, %v1835
        %v1871 = vmax.f32 %v1765, %v1836
        %v1872 = vmax.f32 %v1766, %v1837
        %v1873 = vmax.f32 %v1767, %v1821
        %vm1892 = vcmask 1046528
        %v1893 = vrot.slane %v1856, 1
        %v1894 = vrot.slane %v1862, 1
        %v1895 = vsel %vm1892, %v1893, %v1894
        %v1896 = vrot.slane %v1857, 1
        %v1897 = vrot.slane %v1863, 1
        %v1898 = vsel %vm1892, %v1896, %v1897
        %v1899 = vrot.slane %v1858, 1
        %v1900 = vrot.slane %v1864, 1
        %v1901 = vsel %vm1892, %v1899, %v1900
        %v1902 = vrot.slane %v1859, 1
        %v1903 = vrot.slane %v1865, 1
        %v1904 = vsel %vm1892, %v1902, %v1903
        %v1905 = vrot.slane %v1860, 1
        %v1906 = vrot.slane %v1866, 1
        %v1907 = vsel %vm1892, %v1905, %v1906
        %v1908 = vrot.slane %v1861, 1
        %v1909 = vrot.slane %v1867, 1
        %v1910 = vsel %vm1892, %v1908, %v1909
        %v1911 = vrot.slane %v1868, 1
        %v1912 = vsel %vm1892, %v1894, %v1911
        %v1913 = vrot.slane %v1869, 1
        %v1914 = vsel %vm1892, %v1897, %v1913
        %v1915 = vrot.slane %v1870, 1
        %v1916 = vsel %vm1892, %v1900, %v1915
        %v1917 = vrot.slane %v1871, 1
        %v1918 = vsel %vm1892, %v1903, %v1917
        %v1919 = vrot.slane %v1872, 1
        %v1920 = vsel %vm1892, %v1906, %v1919
        %v1921 = vrot.slane %v1873, 1
        %v1922 = vsel %vm1892, %v1909, %v1921
        %v1941 = vmax.f32 %v1856, %v1895
        %v1942 = vmax.f32 %v1857, %v1898
        %v1943 = vmax.f32 %v1858, %v1901
        %v1944 = vmax.f32 %v1859, %v1904
        %v1945 = vmax.f32 %v1860, %v1907
        %v1946 = vmax.f32 %v1861, %v1910
        %v1947 = vmax.f32 %v1862, %v1912
        %v1948 = vmax.f32 %v1863, %v1914
        %v1949 = vmax.f32 %v1864, %v1916
        %v1950 = vmax.f32 %v1865, %v1918
        %v1951 = vmax.f32 %v1866, %v1920
        %v1952 = vmax.f32 %v1867, %v1922
        %v1953 = vmax.f32 %v1868, %v1911
        %v1954 = vmax.f32 %v1869, %v1913
        %v1955 = vmax.f32 %v1870, %v1915
        %v1956 = vmax.f32 %v1871, %v1917
        %v1957 = vmax.f32 %v1872, %v1919
        %v1958 = vmax.f32 %v1873, %v1921
        %v1959 = vpack.c.bf16 %v1947, %v1941
        %v1960 = vpack.c.bf16 %v1948, %v1942
        %v1961 = vpack.c.bf16 %v1949, %v1943
        %v1962 = vpack.c.bf16 %v1950, %v1944
        %v1963 = vpack.c.bf16 %v1951, %v1945
        %v1964 = vpack.c.bf16 %v1952, %v1946
        %v1965 = vpack.c.bf16 %v1953, %v1953
        %v1966 = vpack.c.bf16 %v1954, %v1954
        %v1967 = vpack.c.bf16 %v1955, %v1955
        %v1968 = vpack.c.bf16 %v1956, %v1956
        %v1969 = vpack.c.bf16 %v1957, %v1957
        %v1970 = vpack.c.bf16 %v1958, %v1958
        %v1971 = vld [vmem:[#allocation6] sm:$0xf]
        %v1972 = vld [vmem:[#allocation6 + $0x4] sm:$0x3]
        %v1975 = vunpack.c.l.b16 %v1971
        %v1976 = vunpack.c.l.b16 %v1972
        %v1977 = vpack.c.b16 %v1976, %v1975
        %vm1978 = vcmask 187392
        %v1980 = vsel %vm1978, %v1977, 0
        %vm1982 = vcmask 1042432
        %vm1983 = vcmask 1043456
        %v1984 = vsel %vm1982, 4294967295, 65535
        %v1985 = vsel %vm1983, %v1984, 0
        %v1987 = vand.u32 %v1965, %v1985
        %v1990 = vand.u32 %v1966, %v1985
        %v1993 = vand.u32 %v1967, %v1985
        %v1996 = vand.u32 %v1968, %v1985
        %v1999 = vand.u32 %v1969, %v1985
        %v2002 = vand.u32 %v1970, %v1985
        %2004 = vmatprep.subr.bf16.mxu0 %v1960
        %2005 = vmatpush1.bf16.msra.mxu0 %v1959
        %2006 = vmatprep.subr.bf16.mxu0 %v1990
        %2007 = vmatpush1.bf16.msra.mxu0 %v1987
        %2008 = vmatprep.subr.bf16.mxu0 0
        %2009 = vmatpush1.bf16.msra.mxu0 0
        %2010 = vmatprep.subr.bf16.mxu0 0
        %2011 = vmatpush1.bf16.msra.mxu0 0
        %2012 = vmatprep.subr.bf16.mxu0 0
        %2013 = vmatpush1.bf16.msra.mxu0 0
        %2014 = vmatprep.subr.bf16.mxu0 0
        %2015 = vmatpush1.bf16.msra.mxu0 0
        %2016 = vmatprep.subr.bf16.mxu0 0
        %2017 = vmatpush1.bf16.msra.mxu0 0
        %2018 = vmatprep.subr.bf16.mxu0 0
        %2019 = vmatpush1.bf16.msra.mxu0 0
        %2020 = vmatprep.subr.bf16.mxu0 0
        %2021 = vmatpush1.bf16.msra.mxu0 0
        %2022 = vmatprep.subr.bf16.mxu0 0
        %2023 = vmatpush1.bf16.msra.mxu0 0
        %2024 = vmatprep.subr.bf16.mxu0 0
        %2025 = vmatpush1.bf16.msra.mxu0 0
        %2026 = vmatprep.subr.bf16.mxu0 0
        %2027 = vmatpush1.bf16.msra.mxu0 0
        %2028 = vmatprep.subr.bf16.mxu0 0
        %2029 = vmatpush1.bf16.msra.mxu0 0
        %2030 = vmatprep.subr.bf16.mxu0 0
        %2031 = vmatpush1.bf16.msra.mxu0 0
        %2032 = vmatprep.subr.bf16.mxu0 0
        %2033 = vmatpush1.bf16.msra.mxu0 0
        %2034 = vmatprep.subr.bf16.mxu0 0
        %2035 = vmatpush1.bf16.msra.mxu0 0
        %2036 = vmatprep.mubr.bf16.mxu0 0
        %2037 = vmatmul.mubr.bf16.gmra.mrb[0].mxu0 %v1980
        %v2038 = vpop.f32.mrb[0].mxu0
        %v2039 = vadd.f32 0.0, %v2038
        %v2040 = vpop.f32.mrb[0].mxu0
        %v2041 = vadd.f32 0.0, %v2040
        %v2042 = vpop.f32.mrb[0].mxu0
        %v2043 = vadd.f32 0.0, %v2042
        %v2044 = vpop.f32.mrb[0].mxu0
        %v2045 = vadd.f32 0.0, %v2044
        %2046 = vdwg.mxu0
        %2047 = vmatprep.subr.bf16.mxu0 %v1962
        %2048 = vmatpush1.bf16.msra.mxu0 %v1961
        %2049 = vmatprep.subr.bf16.mxu0 %v1996
        %2050 = vmatpush1.bf16.msra.mxu0 %v1993
        %2051 = vmatprep.subr.bf16.mxu0 0
        %2052 = vmatpush1.bf16.msra.mxu0 0
        %2053 = vmatprep.subr.bf16.mxu0 0
        %2054 = vmatpush1.bf16.msra.mxu0 0
        %2055 = vmatprep.subr.bf16.mxu0 0
        %2056 = vmatpush1.bf16.msra.mxu0 0
        %2057 = vmatprep.subr.bf16.mxu0 0
        %2058 = vmatpush1.bf16.msra.mxu0 0
        %2059 = vmatprep.subr.bf16.mxu0 0
        %2060 = vmatpush1.bf16.msra.mxu0 0
        %2061 = vmatprep.subr.bf16.mxu0 0
        %2062 = vmatpush1.bf16.msra.mxu0 0
        %2063 = vmatprep.subr.bf16.mxu0 0
        %2064 = vmatpush1.bf16.msra.mxu0 0
        %2065 = vmatprep.subr.bf16.mxu0 0
        %2066 = vmatpush1.bf16.msra.mxu0 0
        %2067 = vmatprep.subr.bf16.mxu0 0
        %2068 = vmatpush1.bf16.msra.mxu0 0
        %2069 = vmatprep.subr.bf16.mxu0 0
        %2070 = vmatpush1.bf16.msra.mxu0 0
        %2071 = vmatprep.subr.bf16.mxu0 0
        %2072 = vmatpush1.bf16.msra.mxu0 0
        %2073 = vmatprep.subr.bf16.mxu0 0
        %2074 = vmatpush1.bf16.msra.mxu0 0
        %2075 = vmatprep.subr.bf16.mxu0 0
        %2076 = vmatpush1.bf16.msra.mxu0 0
        %2077 = vmatprep.subr.bf16.mxu0 0
        %2078 = vmatpush1.bf16.msra.mxu0 0
        %2079 = vmatprep.mubr.bf16.mxu0 0
        %2080 = vmatmul.mubr.bf16.gmra.mrb[0].mxu0 %v1980
        %v2081 = vpop.f32.mrb[0].mxu0
        %v2082 = vadd.f32 0.0, %v2081
        %v2083 = vpop.f32.mrb[0].mxu0
        %v2084 = vadd.f32 0.0, %v2083
        %v2085 = vpop.f32.mrb[0].mxu0
        %v2086 = vadd.f32 0.0, %v2085
        %v2087 = vpop.f32.mrb[0].mxu0
        %v2088 = vadd.f32 0.0, %v2087
        %2089 = vdwg.mxu0
        %2090 = vmatprep.subr.bf16.mxu0 %v1964
        %2091 = vmatpush1.bf16.msra.mxu0 %v1963
        %2092 = vmatprep.subr.bf16.mxu0 %v2002
        %2093 = vmatpush1.bf16.msra.mxu0 %v1999
        %2094 = vmatprep.subr.bf16.mxu0 0
        %2095 = vmatpush1.bf16.msra.mxu0 0
        %2096 = vmatprep.subr.bf16.mxu0 0
        %2097 = vmatpush1.bf16.msra.mxu0 0
        %2098 = vmatprep.subr.bf16.mxu0 0
        %2099 = vmatpush1.bf16.msra.mxu0 0
        %2100 = vmatprep.subr.bf16.mxu0 0
        %2101 = vmatpush1.bf16.msra.mxu0 0
        %2102 = vmatprep.subr.bf16.mxu0 0
        %2103 = vmatpush1.bf16.msra.mxu0 0
        %2104 = vmatprep.subr.bf16.mxu0 0
        %2105 = vmatpush1.bf16.msra.mxu0 0
        %2106 = vmatprep.subr.bf16.mxu0 0
        %2107 = vmatpush1.bf16.msra.mxu0 0
        %2108 = vmatprep.subr.bf16.mxu0 0
        %2109 = vmatpush1.bf16.msra.mxu0 0
        %2110 = vmatprep.subr.bf16.mxu0 0
        %2111 = vmatpush1.bf16.msra.mxu0 0
        %2112 = vmatprep.subr.bf16.mxu0 0
        %2113 = vmatpush1.bf16.msra.mxu0 0
        %2114 = vmatprep.subr.bf16.mxu0 0
        %2115 = vmatpush1.bf16.msra.mxu0 0
        %2116 = vmatprep.subr.bf16.mxu0 0
        %2117 = vmatpush1.bf16.msra.mxu0 0
        %2118 = vmatprep.subr.bf16.mxu0 0
        %2119 = vmatpush1.bf16.msra.mxu0 0
        %2120 = vmatprep.subr.bf16.mxu0 0
        %2121 = vmatpush1.bf16.msra.mxu0 0
        %2122 = vmatprep.mubr.bf16.mxu0 0
        %2123 = vmatmul.mubr.bf16.gmra.mrb[0].mxu0 %v1980
        %v2124 = vpop.f32.mrb[0].mxu0
        %v2125 = vadd.f32 0.0, %v2124
        %v2126 = vpop.f32.mrb[0].mxu0
        %v2127 = vadd.f32 0.0, %v2126
        %v2128 = vpop.f32.mrb[0].mxu0
        %v2129 = vadd.f32 0.0, %v2128
        %v2130 = vpop.f32.mrb[0].mxu0
        %v2131 = vadd.f32 0.0, %v2130
        %2132 = vdwg.mxu0
        %v2133 = vpack.c.bf16 %v2043, %v2039
        %v2134 = vpack.c.bf16 %v2045, %v2041
        %v2135 = vpack.c.bf16 %v2086, %v2082
        %v2136 = vpack.c.bf16 %v2088, %v2084
        %v2137 = vpack.c.bf16 %v2129, %v2125
        %v2138 = vpack.c.bf16 %v2131, %v2127
        %v2139 = vld [vmem:[#allocation7] sm:$0xff]
        %v2140 = vld [vmem:[#allocation7 + $0x8] sm:$0xf]
        %v2141 = vld [vmem:[#allocation7 + $0xc] sm:$0xff]
        %v2142 = vld [vmem:[#allocation7 + $0x14] sm:$0xf]
        %v2143 = vld [vmem:[#allocation7 + $0x18] sm:$0xff]
        %v2144 = vld [vmem:[#allocation7 + $0x20] sm:$0xf]
        %v2145 = vld [vmem:[#allocation7 + $0x24] sm:$0xff]
        %v2146 = vld [vmem:[#allocation7 + $0x2c] sm:$0xf]
        %v2147 = vld [vmem:[#allocation7 + $0x30] sm:$0xff]
        %v2148 = vld [vmem:[#allocation7 + $0x38] sm:$0xf]
        %v2149 = vld [vmem:[#allocation7 + $0x3c] sm:$0xff]
        %v2150 = vld [vmem:[#allocation7 + $0x44] sm:$0xf]
        %v2151 = vld [vmem:[#allocation7 + $0x48] sm:$0xff]
        %v2152 = vld [vmem:[#allocation7 + $0x50] sm:$0xf]
        %v2153 = vld [vmem:[#allocation7 + $0x54] sm:$0xff]
        %v2154 = vld [vmem:[#allocation7 + $0x5c] sm:$0xf]
        %v2155 = vld [vmem:[#allocation7 + $0x60] sm:$0xff]
        %v2156 = vld [vmem:[#allocation7 + $0x68] sm:$0xf]
        %v2157 = vld [vmem:[#allocation7 + $0x6c] sm:$0xff]
        %v2158 = vld [vmem:[#allocation7 + $0x74] sm:$0xf]
        %v2159 = vld [vmem:[#allocation7 + $0x78] sm:$0xff]
        %v2160 = vld [vmem:[#allocation7 + $0x80] sm:$0xf]
        %v2161 = vld [vmem:[#allocation7 + $0x84] sm:$0xff]
        %v2162 = vld [vmem:[#allocation7 + $0x8c] sm:$0xf]
        %v2163 = vld [vmem:[#allocation7 + $0x90] sm:$0xff]
        %v2164 = vld [vmem:[#allocation7 + $0x98] sm:$0xf]
        %v2165 = vld [vmem:[#allocation7 + $0x9c] sm:$0xff]
        %v2166 = vld [vmem:[#allocation7 + $0xa4] sm:$0xf]
        %v2167 = vld [vmem:[#allocation7 + $0xa8] sm:$0xff]
        %v2168 = vld [vmem:[#allocation7 + $0xb0] sm:$0xf]
        %v2169 = vld [vmem:[#allocation7 + $0xb4] sm:$0xff]
        %v2170 = vld [vmem:[#allocation7 + $0xbc] sm:$0xf]
        %v2171 = vld [vmem:[#allocation7 + $0xc0] sm:$0xff]
        %v2172 = vld [vmem:[#allocation7 + $0xc8] sm:$0xf]
        %v2173 = vld [vmem:[#allocation7 + $0xcc] sm:$0xff]
        %v2174 = vld [vmem:[#allocation7 + $0xd4] sm:$0xf]
        %v2175 = vld [vmem:[#allocation7 + $0xd8] sm:$0xff]
        %v2176 = vld [vmem:[#allocation7 + $0xe0] sm:$0xf]
        %v2177 = vld [vmem:[#allocation7 + $0xe4] sm:$0xff]
        %v2178 = vld [vmem:[#allocation7 + $0xec] sm:$0xf]
        %v2179 = vld [vmem:[#allocation7 + $0xf0] sm:$0xff]
        %v2180 = vld [vmem:[#allocation7 + $0xf8] sm:$0xf]
        %v2181 = vld [vmem:[#allocation7 + $0xfc] sm:$0xff]
        %v2182 = vld [vmem:[#allocation7 + $0x104] sm:$0xf]
        %v2183 = vld [vmem:[#allocation7 + $0x108] sm:$0xff]
        %v2184 = vld [vmem:[#allocation7 + $0x110] sm:$0xf]
        %v2185 = vld [vmem:[#allocation7 + $0x114] sm:$0xff]
        %v2186 = vld [vmem:[#allocation7 + $0x11c] sm:$0xf]
        %v2187 = vld [vmem:[#allocation7 + $0x120] sm:$0xff]
        %v2188 = vld [vmem:[#allocation7 + $0x128] sm:$0xf]
        %v2189 = vld [vmem:[#allocation7 + $0x12c] sm:$0xff]
        %v2190 = vld [vmem:[#allocation7 + $0x134] sm:$0xf]
        %v2191 = vld [vmem:[#allocation7 + $0x138] sm:$0xff]
        %v2192 = vld [vmem:[#allocation7 + $0x140] sm:$0xf]
        %v2193 = vld [vmem:[#allocation7 + $0x144] sm:$0xff]
        %v2194 = vld [vmem:[#allocation7 + $0x14c] sm:$0xf]
        %v2195 = vld [vmem:[#allocation7 + $0x150] sm:$0xff]
        %v2196 = vld [vmem:[#allocation7 + $0x158] sm:$0xf]
        %v2197 = vld [vmem:[#allocation7 + $0x15c] sm:$0xff]
        %v2198 = vld [vmem:[#allocation7 + $0x164] sm:$0xf]
        %v2199 = vld [vmem:[#allocation7 + $0x168] sm:$0xff]
        %v2200 = vld [vmem:[#allocation7 + $0x170] sm:$0xf]
        %v2201 = vld [vmem:[#allocation7 + $0x174] sm:$0xff]
        %v2202 = vld [vmem:[#allocation7 + $0x17c] sm:$0xf]
        %v2203 = vld [vmem:[#allocation7 + $0x180] sm:$0xff]
        %v2204 = vld [vmem:[#allocation7 + $0x188] sm:$0xf]
        %v2205 = vld [vmem:[#allocation7 + $0x18c] sm:$0xff]
        %v2206 = vld [vmem:[#allocation7 + $0x194] sm:$0xf]
        %v2207 = vld [vmem:[#allocation7 + $0x198] sm:$0xff]
        %v2208 = vld [vmem:[#allocation7 + $0x1a0] sm:$0xf]
        %v2209 = vld [vmem:[#allocation7 + $0x1a4] sm:$0xff]
        %v2210 = vld [vmem:[#allocation7 + $0x1ac] sm:$0xf]
        %v2211 = vld [vmem:[#allocation7 + $0x1b0] sm:$0xff]
        %v2212 = vld [vmem:[#allocation7 + $0x1b8] sm:$0xf]
        %v2213 = vld [vmem:[#allocation7 + $0x1bc] sm:$0xff]
        %v2214 = vld [vmem:[#allocation7 + $0x1c4] sm:$0xf]
        %v2215 = vld [vmem:[#allocation7 + $0x1c8] sm:$0xff]
        %v2216 = vld [vmem:[#allocation7 + $0x1d0] sm:$0xf]
        %v2217 = vld [vmem:[#allocation7 + $0x1d4] sm:$0xff]
        %v2218 = vld [vmem:[#allocation7 + $0x1dc] sm:$0xf]
        %v2219 = vld [vmem:[#allocation7 + $0x1e0] sm:$0xff]
        %v2220 = vld [vmem:[#allocation7 + $0x1e8] sm:$0xf]
        %v2221 = vld [vmem:[#allocation7 + $0x1ec] sm:$0xff]
        %v2222 = vld [vmem:[#allocation7 + $0x1f4] sm:$0xf]
        %v2223 = vld [vmem:[#allocation7 + $0x1f8] sm:$0xff]
        %v2224 = vld [vmem:[#allocation7 + $0x200] sm:$0xf]
        %v2225 = vld [vmem:[#allocation7 + $0x204] sm:$0xff]
        %v2226 = vld [vmem:[#allocation7 + $0x20c] sm:$0xf]
        %v2227 = vld [vmem:[#allocation7 + $0x210] sm:$0xff]
        %v2228 = vld [vmem:[#allocation7 + $0x218] sm:$0xf]
        %v2229 = vld [vmem:[#allocation7 + $0x21c] sm:$0xff]
        %v2230 = vld [vmem:[#allocation7 + $0x224] sm:$0xf]
        %v2231 = vld [vmem:[#allocation7 + $0x228] sm:$0xff]
        %v2232 = vld [vmem:[#allocation7 + $0x230] sm:$0xf]
        %v2233 = vld [vmem:[#allocation7 + $0x234] sm:$0xff]
        %v2234 = vld [vmem:[#allocation7 + $0x23c] sm:$0xf]
        %v2235 = vld [vmem:[#allocation7 + $0x240] sm:$0xff]
        %v2236 = vld [vmem:[#allocation7 + $0x248] sm:$0xf]
        %v2237 = vld [vmem:[#allocation7 + $0x24c] sm:$0xff]
        %v2238 = vld [vmem:[#allocation7 + $0x254] sm:$0xf]
        %v2239 = vld [vmem:[#allocation7 + $0x258] sm:$0xff]
        %v2240 = vld [vmem:[#allocation7 + $0x260] sm:$0xf]
        %v2241 = vld [vmem:[#allocation7 + $0x264] sm:$0xff]
        %v2242 = vld [vmem:[#allocation7 + $0x26c] sm:$0xf]
        %v2243 = vld [vmem:[#allocation7 + $0x270] sm:$0xff]
        %v2244 = vld [vmem:[#allocation7 + $0x278] sm:$0xf]
        %v2245 = vld [vmem:[#allocation7 + $0x27c] sm:$0xff]
        %v2246 = vld [vmem:[#allocation7 + $0x284] sm:$0xf]
        %v2247 = vld [vmem:[#allocation7 + $0x288] sm:$0xff]
        %v2248 = vld [vmem:[#allocation7 + $0x290] sm:$0xf]
        %v2249 = vld [vmem:[#allocation7 + $0x294] sm:$0xff]
        %v2250 = vld [vmem:[#allocation7 + $0x29c] sm:$0xf]
        %v2251 = vld [vmem:[#allocation7 + $0x2a0] sm:$0xff]
        %v2252 = vld [vmem:[#allocation7 + $0x2a8] sm:$0xf]
        %v2253 = vld [vmem:[#allocation7 + $0x2ac] sm:$0xff]
        %v2254 = vld [vmem:[#allocation7 + $0x2b4] sm:$0xf]
        %v2255 = vld [vmem:[#allocation7 + $0x2b8] sm:$0xff]
        %v2256 = vld [vmem:[#allocation7 + $0x2c0] sm:$0xf]
        %v2257 = vld [vmem:[#allocation7 + $0x2c4] sm:$0xff]
        %v2258 = vld [vmem:[#allocation7 + $0x2cc] sm:$0xf]
        %v2259 = vld [vmem:[#allocation7 + $0x2d0] sm:$0xff]
        %v2260 = vld [vmem:[#allocation7 + $0x2d8] sm:$0xf]
        %v2261 = vld [vmem:[#allocation7 + $0x2dc] sm:$0xff]
        %v2262 = vld [vmem:[#allocation7 + $0x2e4] sm:$0xf]
        %v2263 = vld [vmem:[#allocation7 + $0x2e8] sm:$0xff]
        %v2264 = vld [vmem:[#allocation7 + $0x2f0] sm:$0xf]
        %v2265 = vld [vmem:[#allocation7 + $0x2f4] sm:$0xff]
        %v2266 = vld [vmem:[#allocation7 + $0x2fc] sm:$0xf]
        %v2267 = vld [vmem:[#allocation7 + $0x300] sm:$0xff]
        %v2268 = vld [vmem:[#allocation7 + $0x308] sm:$0xf]
        %v2269 = vld [vmem:[#allocation7 + $0x30c] sm:$0xff]
        %v2270 = vld [vmem:[#allocation7 + $0x314] sm:$0xf]
        %v2271 = vld [vmem:[#allocation7 + $0x318] sm:$0xff]
        %v2272 = vld [vmem:[#allocation7 + $0x320] sm:$0xf]
        %v2273 = vld [vmem:[#allocation7 + $0x324] sm:$0xff]
        %v2274 = vld [vmem:[#allocation7 + $0x32c] sm:$0xf]
        %v2275 = vld [vmem:[#allocation7 + $0x330] sm:$0xff]
        %v2276 = vld [vmem:[#allocation7 + $0x338] sm:$0xf]
        %v2277 = vld [vmem:[#allocation7 + $0x33c] sm:$0xff]
        %v2278 = vld [vmem:[#allocation7 + $0x344] sm:$0xf]
        %v2279 = vld [vmem:[#allocation7 + $0x348] sm:$0xff]
        %v2280 = vld [vmem:[#allocation7 + $0x350] sm:$0xf]
        %v2281 = vld [vmem:[#allocation7 + $0x354] sm:$0xff]
        %v2282 = vld [vmem:[#allocation7 + $0x35c] sm:$0xf]
        %v2283 = vld [vmem:[#allocation7 + $0x360] sm:$0xff]
        %v2284 = vld [vmem:[#allocation7 + $0x368] sm:$0xf]
        %v2285 = vld [vmem:[#allocation7 + $0x36c] sm:$0xff]
        %v2286 = vld [vmem:[#allocation7 + $0x374] sm:$0xf]
        %v2287 = vld [vmem:[#allocation7 + $0x378] sm:$0xff]
        %v2288 = vld [vmem:[#allocation7 + $0x380] sm:$0xf]
        %v2289 = vld [vmem:[#allocation7 + $0x384] sm:$0xff]
        %v2290 = vld [vmem:[#allocation7 + $0x38c] sm:$0xf]
        %v2291 = vld [vmem:[#allocation7 + $0x390] sm:$0xff]
        %v2292 = vld [vmem:[#allocation7 + $0x398] sm:$0xf]
        %v2293 = vld [vmem:[#allocation7 + $0x39c] sm:$0xff]
        %v2294 = vld [vmem:[#allocation7 + $0x3a4] sm:$0xf]
        %v2295 = vld [vmem:[#allocation7 + $0x3a8] sm:$0xff]
        %v2296 = vld [vmem:[#allocation7 + $0x3b0] sm:$0xf]
        %v2297 = vld [vmem:[#allocation7 + $0x3b4] sm:$0xff]
        %v2298 = vld [vmem:[#allocation7 + $0x3bc] sm:$0xf]
        %v2299 = vld [vmem:[#allocation7 + $0x3c0] sm:$0xff]
        %v2300 = vld [vmem:[#allocation7 + $0x3c8] sm:$0xf]
        %v2301 = vld [vmem:[#allocation7 + $0x3cc] sm:$0xff]
        %v2302 = vld [vmem:[#allocation7 + $0x3d4] sm:$0xf]
        %v2303 = vld [vmem:[#allocation7 + $0x3d8] sm:$0xff]
        %v2304 = vld [vmem:[#allocation7 + $0x3e0] sm:$0xf]
        %v2305 = vld [vmem:[#allocation7 + $0x3e4] sm:$0xff]
        %v2306 = vld [vmem:[#allocation7 + $0x3ec] sm:$0xf]
        %v2307 = vld [vmem:[#allocation7 + $0x3f0] sm:$0xff]
        %v2308 = vld [vmem:[#allocation7 + $0x3f8] sm:$0xf]
        %v2309 = vld [vmem:[#allocation7 + $0x3fc] sm:$0xff]
        %v2310 = vld [vmem:[#allocation7 + $0x404] sm:$0xf]
        %v2311 = vld [vmem:[#allocation7 + $0x408] sm:$0xff]
        %v2312 = vld [vmem:[#allocation7 + $0x410] sm:$0xf]
        %v2313 = vld [vmem:[#allocation7 + $0x414] sm:$0xff]
        %v2314 = vld [vmem:[#allocation7 + $0x41c] sm:$0xf]
        %v2315 = vld [vmem:[#allocation7 + $0x420] sm:$0xff]
        %v2316 = vld [vmem:[#allocation7 + $0x428] sm:$0xf]
        %v2317 = vld [vmem:[#allocation7 + $0x42c] sm:$0xff]
        %v2318 = vld [vmem:[#allocation7 + $0x434] sm:$0xf]
        %v2319 = vld [vmem:[#allocation7 + $0x438] sm:$0xff]
        %v2320 = vld [vmem:[#allocation7 + $0x440] sm:$0xf]
        %v2321 = vld [vmem:[#allocation7 + $0x444] sm:$0xff]
        %v2322 = vld [vmem:[#allocation7 + $0x44c] sm:$0xf]
        %v2507 = vunpack.c.l.b16 %v2139
        %v2508 = vunpack.c.h.b16 %v2139
        %v2509 = vunpack.c.l.b16 %v2140
        %v2510 = vunpack.c.l.b16 %v2141
        %v2511 = vunpack.c.h.b16 %v2141
        %v2512 = vunpack.c.l.b16 %v2142
        %v2513 = vunpack.c.l.b16 %v2143
        %v2514 = vunpack.c.h.b16 %v2143
        %v2515 = vunpack.c.l.b16 %v2144
        %v2516 = vunpack.c.l.b16 %v2145
        %v2517 = vunpack.c.h.b16 %v2145
        %v2518 = vunpack.c.l.b16 %v2146
        %v2519 = vunpack.c.l.b16 %v2147
        %v2520 = vunpack.c.h.b16 %v2147
        %v2521 = vunpack.c.l.b16 %v2148
        %v2522 = vunpack.c.l.b16 %v2149
        %v2523 = vunpack.c.h.b16 %v2149
        %v2524 = vunpack.c.l.b16 %v2150
        %v2525 = vunpack.c.l.b16 %v2151
        %v2526 = vunpack.c.h.b16 %v2151
        %v2527 = vunpack.c.l.b16 %v2152
        %v2528 = vunpack.c.l.b16 %v2153
        %v2529 = vunpack.c.h.b16 %v2153
        %v2530 = vunpack.c.l.b16 %v2154
        %v2531 = vunpack.c.l.b16 %v2155
        %v2532 = vunpack.c.h.b16 %v2155
        %v2533 = vunpack.c.l.b16 %v2156
        %v2534 = vunpack.c.l.b16 %v2157
        %v2535 = vunpack.c.h.b16 %v2157
        %v2536 = vunpack.c.l.b16 %v2158
        %v2537 = vunpack.c.l.b16 %v2159
        %v2538 = vunpack.c.h.b16 %v2159
        %v2539 = vunpack.c.l.b16 %v2160
        %v2540 = vunpack.c.l.b16 %v2161
        %v2541 = vunpack.c.h.b16 %v2161
        %v2542 = vunpack.c.l.b16 %v2162
        %v2543 = vunpack.c.l.b16 %v2163
        %v2544 = vunpack.c.h.b16 %v2163
        %v2545 = vunpack.c.l.b16 %v2164
        %v2546 = vunpack.c.l.b16 %v2165
        %v2547 = vunpack.c.h.b16 %v2165
        %v2548 = vunpack.c.l.b16 %v2166
        %v2549 = vunpack.c.l.b16 %v2167
        %v2550 = vunpack.c.h.b16 %v2167
        %v2551 = vunpack.c.l.b16 %v2168
        %v2552 = vunpack.c.l.b16 %v2169
        %v2553 = vunpack.c.h.b16 %v2169
        %v2554 = vunpack.c.l.b16 %v2170
        %v2555 = vunpack.c.l.b16 %v2171
        %v2556 = vunpack.c.h.b16 %v2171
        %v2557 = vunpack.c.l.b16 %v2172
        %v2558 = vunpack.c.l.b16 %v2173
        %v2559 = vunpack.c.h.b16 %v2173
        %v2560 = vunpack.c.l.b16 %v2174
        %v2561 = vunpack.c.l.b16 %v2175
        %v2562 = vunpack.c.h.b16 %v2175
        %v2563 = vunpack.c.l.b16 %v2176
        %v2564 = vunpack.c.l.b16 %v2177
        %v2565 = vunpack.c.h.b16 %v2177
        %v2566 = vunpack.c.l.b16 %v2178
        %v2567 = vunpack.c.l.b16 %v2179
        %v2568 = vunpack.c.h.b16 %v2179
        %v2569 = vunpack.c.l.b16 %v2180
        %v2570 = vunpack.c.l.b16 %v2181
        %v2571 = vunpack.c.h.b16 %v2181
        %v2572 = vunpack.c.l.b16 %v2182
        %v2573 = vunpack.c.l.b16 %v2183
        %v2574 = vunpack.c.h.b16 %v2183
        %v2575 = vunpack.c.l.b16 %v2184
        %v2576 = vunpack.c.l.b16 %v2185
        %v2577 = vunpack.c.h.b16 %v2185
        %v2578 = vunpack.c.l.b16 %v2186
        %v2579 = vunpack.c.l.b16 %v2187
        %v2580 = vunpack.c.h.b16 %v2187
        %v2581 = vunpack.c.l.b16 %v2188
        %v2582 = vunpack.c.l.b16 %v2189
        %v2583 = vunpack.c.h.b16 %v2189
        %v2584 = vunpack.c.l.b16 %v2190
        %v2585 = vunpack.c.l.b16 %v2191
        %v2586 = vunpack.c.h.b16 %v2191
        %v2587 = vunpack.c.l.b16 %v2192
        %v2588 = vunpack.c.l.b16 %v2193
        %v2589 = vunpack.c.h.b16 %v2193
        %v2590 = vunpack.c.l.b16 %v2194
        %v2591 = vunpack.c.l.b16 %v2195
        %v2592 = vunpack.c.h.b16 %v2195
        %v2593 = vunpack.c.l.b16 %v2196
        %v2594 = vunpack.c.l.b16 %v2197
        %v2595 = vunpack.c.h.b16 %v2197
        %v2596 = vunpack.c.l.b16 %v2198
        %v2597 = vunpack.c.l.b16 %v2199
        %v2598 = vunpack.c.h.b16 %v2199
        %v2599 = vunpack.c.l.b16 %v2200
        %v2600 = vunpack.c.l.b16 %v2201
        %v2601 = vunpack.c.h.b16 %v2201
        %v2602 = vunpack.c.l.b16 %v2202
        %v2603 = vunpack.c.l.b16 %v2203
        %v2604 = vunpack.c.h.b16 %v2203
        %v2605 = vunpack.c.l.b16 %v2204
        %v2606 = vunpack.c.l.b16 %v2205
        %v2607 = vunpack.c.h.b16 %v2205
        %v2608 = vunpack.c.l.b16 %v2206
        %v2609 = vunpack.c.l.b16 %v2207
        %v2610 = vunpack.c.h.b16 %v2207
        %v2611 = vunpack.c.l.b16 %v2208
        %v2612 = vunpack.c.l.b16 %v2209
        %v2613 = vunpack.c.h.b16 %v2209
        %v2614 = vunpack.c.l.b16 %v2210
        %v2615 = vunpack.c.l.b16 %v2211
        %v2616 = vunpack.c.h.b16 %v2211
        %v2617 = vunpack.c.l.b16 %v2212
        %v2618 = vunpack.c.l.b16 %v2213
        %v2619 = vunpack.c.h.b16 %v2213
        %v2620 = vunpack.c.l.b16 %v2214
        %v2621 = vunpack.c.l.b16 %v2215
        %v2622 = vunpack.c.h.b16 %v2215
        %v2623 = vunpack.c.l.b16 %v2216
        %v2624 = vunpack.c.l.b16 %v2217
        %v2625 = vunpack.c.h.b16 %v2217
        %v2626 = vunpack.c.l.b16 %v2218
        %v2627 = vunpack.c.l.b16 %v2219
        %v2628 = vunpack.c.h.b16 %v2219
        %v2629 = vunpack.c.l.b16 %v2220
        %v2630 = vunpack.c.l.b16 %v2221
        %v2631 = vunpack.c.h.b16 %v2221
        %v2632 = vunpack.c.l.b16 %v2222
        %v2633 = vunpack.c.l.b16 %v2223
        %v2634 = vunpack.c.h.b16 %v2223
        %v2635 = vunpack.c.l.b16 %v2224
        %v2636 = vunpack.c.l.b16 %v2225
        %v2637 = vunpack.c.h.b16 %v2225
        %v2638 = vunpack.c.l.b16 %v2226
        %v2639 = vunpack.c.l.b16 %v2227
        %v2640 = vunpack.c.h.b16 %v2227
        %v2641 = vunpack.c.l.b16 %v2228
        %v2642 = vunpack.c.l.b16 %v2229
        %v2643 = vunpack.c.h.b16 %v2229
        %v2644 = vunpack.c.l.b16 %v2230
        %v2645 = vunpack.c.l.b16 %v2231
        %v2646 = vunpack.c.h.b16 %v2231
        %v2647 = vunpack.c.l.b16 %v2232
        %v2648 = vunpack.c.l.b16 %v2233
        %v2649 = vunpack.c.h.b16 %v2233
        %v2650 = vunpack.c.l.b16 %v2234
        %v2651 = vunpack.c.l.b16 %v2235
        %v2652 = vunpack.c.h.b16 %v2235
        %v2653 = vunpack.c.l.b16 %v2236
        %v2654 = vunpack.c.l.b16 %v2237
        %v2655 = vunpack.c.h.b16 %v2237
        %v2656 = vunpack.c.l.b16 %v2238
        %v2657 = vunpack.c.l.b16 %v2239
        %v2658 = vunpack.c.h.b16 %v2239
        %v2659 = vunpack.c.l.b16 %v2240
        %v2660 = vunpack.c.l.b16 %v2241
        %v2661 = vunpack.c.h.b16 %v2241
        %v2662 = vunpack.c.l.b16 %v2242
        %v2663 = vunpack.c.l.b16 %v2243
        %v2664 = vunpack.c.h.b16 %v2243
        %v2665 = vunpack.c.l.b16 %v2244
        %v2666 = vunpack.c.l.b16 %v2245
        %v2667 = vunpack.c.h.b16 %v2245
        %v2668 = vunpack.c.l.b16 %v2246
        %v2669 = vunpack.c.l.b16 %v2247
        %v2670 = vunpack.c.h.b16 %v2247
        %v2671 = vunpack.c.l.b16 %v2248
        %v2672 = vunpack.c.l.b16 %v2249
        %v2673 = vunpack.c.h.b16 %v2249
        %v2674 = vunpack.c.l.b16 %v2250
        %v2675 = vunpack.c.l.b16 %v2251
        %v2676 = vunpack.c.h.b16 %v2251
        %v2677 = vunpack.c.l.b16 %v2252
        %v2678 = vunpack.c.l.b16 %v2253
        %v2679 = vunpack.c.h.b16 %v2253
        %v2680 = vunpack.c.l.b16 %v2254
        %v2681 = vunpack.c.l.b16 %v2255
        %v2682 = vunpack.c.h.b16 %v2255
        %v2683 = vunpack.c.l.b16 %v2256
        %v2684 = vunpack.c.l.b16 %v2257
        %v2685 = vunpack.c.h.b16 %v2257
        %v2686 = vunpack.c.l.b16 %v2258
        %v2687 = vunpack.c.l.b16 %v2259
        %v2688 = vunpack.c.h.b16 %v2259
        %v2689 = vunpack.c.l.b16 %v2260
        %v2690 = vunpack.c.l.b16 %v2261
        %v2691 = vunpack.c.h.b16 %v2261
        %v2692 = vunpack.c.l.b16 %v2262
        %v2693 = vunpack.c.l.b16 %v2263
        %v2694 = vunpack.c.h.b16 %v2263
        %v2695 = vunpack.c.l.b16 %v2264
        %v2696 = vunpack.c.l.b16 %v2265
        %v2697 = vunpack.c.h.b16 %v2265
        %v2698 = vunpack.c.l.b16 %v2266
        %v2699 = vunpack.c.l.b16 %v2267
        %v2700 = vunpack.c.h.b16 %v2267
        %v2701 = vunpack.c.l.b16 %v2268
        %v2702 = vunpack.c.l.b16 %v2269
        %v2703 = vunpack.c.h.b16 %v2269
        %v2704 = vunpack.c.l.b16 %v2270
        %v2705 = vunpack.c.l.b16 %v2271
        %v2706 = vunpack.c.h.b16 %v2271
        %v2707 = vunpack.c.l.b16 %v2272
        %v2708 = vunpack.c.l.b16 %v2273
        %v2709 = vunpack.c.h.b16 %v2273
        %v2710 = vunpack.c.l.b16 %v2274
        %v2711 = vunpack.c.l.b16 %v2275
        %v2712 = vunpack.c.h.b16 %v2275
        %v2713 = vunpack.c.l.b16 %v2276
        %v2714 = vunpack.c.l.b16 %v2277
        %v2715 = vunpack.c.h.b16 %v2277
        %v2716 = vunpack.c.l.b16 %v2278
        %v2717 = vunpack.c.l.b16 %v2279
        %v2718 = vunpack.c.h.b16 %v2279
        %v2719 = vunpack.c.l.b16 %v2280
        %v2720 = vunpack.c.l.b16 %v2281
        %v2721 = vunpack.c.h.b16 %v2281
        %v2722 = vunpack.c.l.b16 %v2282
        %v2723 = vunpack.c.l.b16 %v2283
        %v2724 = vunpack.c.h.b16 %v2283
        %v2725 = vunpack.c.l.b16 %v2284
        %v2726 = vunpack.c.l.b16 %v2285
        %v2727 = vunpack.c.h.b16 %v2285
        %v2728 = vunpack.c.l.b16 %v2286
        %v2729 = vunpack.c.l.b16 %v2287
        %v2730 = vunpack.c.h.b16 %v2287
        %v2731 = vunpack.c.l.b16 %v2288
        %v2732 = vunpack.c.l.b16 %v2289
        %v2733 = vunpack.c.h.b16 %v2289
        %v2734 = vunpack.c.l.b16 %v2290
        %v2735 = vunpack.c.l.b16 %v2291
        %v2736 = vunpack.c.h.b16 %v2291
        %v2737 = vunpack.c.l.b16 %v2292
        %v2738 = vunpack.c.l.b16 %v2293
        %v2739 = vunpack.c.h.b16 %v2293
        %v2740 = vunpack.c.l.b16 %v2294
        %v2741 = vunpack.c.l.b16 %v2295
        %v2742 = vunpack.c.h.b16 %v2295
        %v2743 = vunpack.c.l.b16 %v2296
        %v2744 = vunpack.c.l.b16 %v2297
        %v2745 = vunpack.c.h.b16 %v2297
        %v2746 = vunpack.c.l.b16 %v2298
        %v2747 = vunpack.c.l.b16 %v2299
        %v2748 = vunpack.c.h.b16 %v2299
        %v2749 = vunpack.c.l.b16 %v2300
        %v2750 = vunpack.c.l.b16 %v2301
        %v2751 = vunpack.c.h.b16 %v2301
        %v2752 = vunpack.c.l.b16 %v2302
        %v2753 = vunpack.c.l.b16 %v2303
        %v2754 = vunpack.c.h.b16 %v2303
        %v2755 = vunpack.c.l.b16 %v2304
        %v2756 = vunpack.c.l.b16 %v2305
        %v2757 = vunpack.c.h.b16 %v2305
        %v2758 = vunpack.c.l.b16 %v2306
        %v2759 = vunpack.c.l.b16 %v2307
        %v2760 = vunpack.c.h.b16 %v2307
        %v2761 = vunpack.c.l.b16 %v2308
        %v2762 = vunpack.c.l.b16 %v2309
        %v2763 = vunpack.c.h.b16 %v2309
        %v2764 = vunpack.c.l.b16 %v2310
        %v2765 = vunpack.c.l.b16 %v2311
        %v2766 = vunpack.c.h.b16 %v2311
        %v2767 = vunpack.c.l.b16 %v2312
        %v2768 = vunpack.c.l.b16 %v2313
        %v2769 = vunpack.c.h.b16 %v2313
        %v2770 = vunpack.c.l.b16 %v2314
        %v2771 = vunpack.c.l.b16 %v2315
        %v2772 = vunpack.c.h.b16 %v2315
        %v2773 = vunpack.c.l.b16 %v2316
        %v2774 = vunpack.c.l.b16 %v2317
        %v2775 = vunpack.c.h.b16 %v2317
        %v2776 = vunpack.c.l.b16 %v2318
        %v2777 = vunpack.c.l.b16 %v2319
        %v2778 = vunpack.c.h.b16 %v2319
        %v2779 = vunpack.c.l.b16 %v2320
        %v2780 = vunpack.c.l.b16 %v2321
        %v2781 = vunpack.c.h.b16 %v2321
        %v2782 = vunpack.c.l.b16 %v2322
        %v2783 = vpack.c.b16 %v2510, %v2507
        %v2784 = vpack.c.b16 %v2511, %v2508
        %v2785 = vpack.c.b16 %v2512, %v2509
        %v2786 = vpack.c.b16 %v2516, %v2513
        %v2787 = vpack.c.b16 %v2517, %v2514
        %v2788 = vpack.c.b16 %v2518, %v2515
        %v2789 = vpack.c.b16 %v2522, %v2519
        %v2790 = vpack.c.b16 %v2523, %v2520
        %v2791 = vpack.c.b16 %v2524, %v2521
        %v2792 = vpack.c.b16 %v2528, %v2525
        %v2793 = vpack.c.b16 %v2529, %v2526
        %v2794 = vpack.c.b16 %v2530, %v2527
        %v2795 = vpack.c.b16 %v2534, %v2531
        %v2796 = vpack.c.b16 %v2535, %v2532
        %v2797 = vpack.c.b16 %v2536, %v2533
        %v2798 = vpack.c.b16 %v2540, %v2537
        %v2799 = vpack.c.b16 %v2541, %v2538
        %v2800 = vpack.c.b16 %v2542, %v2539
        %v2801 = vpack.c.b16 %v2546, %v2543
        %v2802 = vpack.c.b16 %v2547, %v2544
        %v2803 = vpack.c.b16 %v2548, %v2545
        %v2804 = vpack.c.b16 %v2552, %v2549
        %v2805 = vpack.c.b16 %v2553, %v2550
        %v2806 = vpack.c.b16 %v2554, %v2551
        %v2807 = vpack.c.b16 %v2558, %v2555
        %v2808 = vpack.c.b16 %v2559, %v2556
        %v2809 = vpack.c.b16 %v2560, %v2557
        %v2810 = vpack.c.b16 %v2564, %v2561
        %v2811 = vpack.c.b16 %v2565, %v2562
        %v2812 = vpack.c.b16 %v2566, %v2563
        %v2813 = vpack.c.b16 %v2570, %v2567
        %v2814 = vpack.c.b16 %v2571, %v2568
        %v2815 = vpack.c.b16 %v2572, %v2569
        %v2816 = vpack.c.b16 %v2576, %v2573
        %v2817 = vpack.c.b16 %v2577, %v2574
        %v2818 = vpack.c.b16 %v2578, %v2575
        %v2819 = vpack.c.b16 %v2582, %v2579
        %v2820 = vpack.c.b16 %v2583, %v2580
        %v2821 = vpack.c.b16 %v2584, %v2581
        %v2822 = vpack.c.b16 %v2588, %v2585
        %v2823 = vpack.c.b16 %v2589, %v2586
        %v2824 = vpack.c.b16 %v2590, %v2587
        %v2825 = vpack.c.b16 %v2594, %v2591
        %v2826 = vpack.c.b16 %v2595, %v2592
        %v2827 = vpack.c.b16 %v2596, %v2593
        %v2828 = vpack.c.b16 %v2600, %v2597
        %v2829 = vpack.c.b16 %v2601, %v2598
        %v2830 = vpack.c.b16 %v2602, %v2599
        %v2831 = vpack.c.b16 %v2606, %v2603
        %v2832 = vpack.c.b16 %v2607, %v2604
        %v2833 = vpack.c.b16 %v2608, %v2605
        %v2834 = vpack.c.b16 %v2612, %v2609
        %v2835 = vpack.c.b16 %v2613, %v2610
        %v2836 = vpack.c.b16 %v2614, %v2611
        %v2837 = vpack.c.b16 %v2618, %v2615
        %v2838 = vpack.c.b16 %v2619, %v2616
        %v2839 = vpack.c.b16 %v2620, %v2617
        %v2840 = vpack.c.b16 %v2624, %v2621
        %v2841 = vpack.c.b16 %v2625, %v2622
        %v2842 = vpack.c.b16 %v2626, %v2623
        %v2843 = vpack.c.b16 %v2630, %v2627
        %v2844 = vpack.c.b16 %v2631, %v2628
        %v2845 = vpack.c.b16 %v2632, %v2629
        %v2846 = vpack.c.b16 %v2636, %v2633
        %v2847 = vpack.c.b16 %v2637, %v2634
        %v2848 = vpack.c.b16 %v2638, %v2635
        %v2849 = vpack.c.b16 %v2642, %v2639
        %v2850 = vpack.c.b16 %v2643, %v2640
        %v2851 = vpack.c.b16 %v2644, %v2641
        %v2852 = vpack.c.b16 %v2648, %v2645
        %v2853 = vpack.c.b16 %v2649, %v2646
        %v2854 = vpack.c.b16 %v2650, %v2647
        %v2855 = vpack.c.b16 %v2654, %v2651
        %v2856 = vpack.c.b16 %v2655, %v2652
        %v2857 = vpack.c.b16 %v2656, %v2653
        %v2858 = vpack.c.b16 %v2660, %v2657
        %v2859 = vpack.c.b16 %v2661, %v2658
        %v2860 = vpack.c.b16 %v2662, %v2659
        %v2861 = vpack.c.b16 %v2666, %v2663
        %v2862 = vpack.c.b16 %v2667, %v2664
        %v2863 = vpack.c.b16 %v2668, %v2665
        %v2864 = vpack.c.b16 %v2672, %v2669
        %v2865 = vpack.c.b16 %v2673, %v2670
        %v2866 = vpack.c.b16 %v2674, %v2671
        %v2867 = vpack.c.b16 %v2678, %v2675
        %v2868 = vpack.c.b16 %v2679, %v2676
        %v2869 = vpack.c.b16 %v2680, %v2677
        %v2870 = vpack.c.b16 %v2684, %v2681
        %v2871 = vpack.c.b16 %v2685, %v2682
        %v2872 = vpack.c.b16 %v2686, %v2683
        %v2873 = vpack.c.b16 %v2690, %v2687
        %v2874 = vpack.c.b16 %v2691, %v2688
        %v2875 = vpack.c.b16 %v2692, %v2689
        %v2876 = vpack.c.b16 %v2696, %v2693
        %v2877 = vpack.c.b16 %v2697, %v2694
        %v2878 = vpack.c.b16 %v2698, %v2695
        %v2879 = vpack.c.b16 %v2702, %v2699
        %v2880 = vpack.c.b16 %v2703, %v2700
        %v2881 = vpack.c.b16 %v2704, %v2701
        %v2882 = vpack.c.b16 %v2708, %v2705
        %v2883 = vpack.c.b16 %v2709, %v2706
        %v2884 = vpack.c.b16 %v2710, %v2707
        %v2885 = vpack.c.b16 %v2714, %v2711
        %v2886 = vpack.c.b16 %v2715, %v2712
        %v2887 = vpack.c.b16 %v2716, %v2713
        %v2888 = vpack.c.b16 %v2720, %v2717
        %v2889 = vpack.c.b16 %v2721, %v2718
        %v2890 = vpack.c.b16 %v2722, %v2719
        %v2891 = vpack.c.b16 %v2726, %v2723
        %v2892 = vpack.c.b16 %v2727, %v2724
        %v2893 = vpack.c.b16 %v2728, %v2725
        %v2894 = vpack.c.b16 %v2732, %v2729
        %v2895 = vpack.c.b16 %v2733, %v2730
        %v2896 = vpack.c.b16 %v2734, %v2731
        %v2897 = vpack.c.b16 %v2738, %v2735
        %v2898 = vpack.c.b16 %v2739, %v2736
        %v2899 = vpack.c.b16 %v2740, %v2737
        %v2900 = vpack.c.b16 %v2744, %v2741
        %v2901 = vpack.c.b16 %v2745, %v2742
        %v2902 = vpack.c.b16 %v2746, %v2743
        %v2903 = vpack.c.b16 %v2750, %v2747
        %v2904 = vpack.c.b16 %v2751, %v2748
        %v2905 = vpack.c.b16 %v2752, %v2749
        %v2906 = vpack.c.b16 %v2756, %v2753
        %v2907 = vpack.c.b16 %v2757, %v2754
        %v2908 = vpack.c.b16 %v2758, %v2755
        %v2909 = vpack.c.b16 %v2762, %v2759
        %v2910 = vpack.c.b16 %v2763, %v2760
        %v2911 = vpack.c.b16 %v2764, %v2761
        %v2912 = vpack.c.b16 %v2768, %v2765
        %v2913 = vpack.c.b16 %v2769, %v2766
        %v2914 = vpack.c.b16 %v2770, %v2767
        %v2915 = vpack.c.b16 %v2774, %v2771
        %v2916 = vpack.c.b16 %v2775, %v2772
        %v2917 = vpack.c.b16 %v2776, %v2773
        %v2918 = vpack.c.b16 %v2780, %v2777
        %v2919 = vpack.c.b16 %v2781, %v2778
        %v2920 = vpack.c.b16 %v2782, %v2779
        %v3060 = vsel %vm1822, %v2138, 0
        %3062 = vmatprep.subr.bf16.mxu0 %v2784
        %3063 = vmatpush1.bf16.msra.mxu0 %v2783
        %3064 = vmatprep.subr.bf16.mxu0 %v2787
        %3065 = vmatpush1.bf16.msra.mxu0 %v2786
        %3066 = vmatprep.subr.bf16.mxu0 %v2790
        %3067 = vmatpush1.bf16.msra.mxu0 %v2789
        %3068 = vmatprep.subr.bf16.mxu0 %v2793
        %3069 = vmatpush1.bf16.msra.mxu0 %v2792
        %3070 = vmatprep.subr.bf16.mxu0 %v2796
        %3071 = vmatpush1.bf16.msra.mxu0 %v2795
        %3072 = vmatprep.subr.bf16.mxu0 %v2799
        %3073 = vmatpush1.bf16.msra.mxu0 %v2798
        %3074 = vmatprep.subr.bf16.mxu0 %v2802
        %3075 = vmatpush1.bf16.msra.mxu0 %v2801
        %3076 = vmatprep.subr.bf16.mxu0 %v2805
        %3077 = vmatpush1.bf16.msra.mxu0 %v2804
        %3078 = vmatprep.subr.bf16.mxu0 %v2808
        %3079 = vmatpush1.bf16.msra.mxu0 %v2807
        %3080 = vmatprep.subr.bf16.mxu0 %v2811
        %3081 = vmatpush1.bf16.msra.mxu0 %v2810
        %3082 = vmatprep.subr.bf16.mxu0 %v2814
        %3083 = vmatpush1.bf16.msra.mxu0 %v2813
        %3084 = vmatprep.subr.bf16.mxu0 %v2817
        %3085 = vmatpush1.bf16.msra.mxu0 %v2816
        %3086 = vmatprep.subr.bf16.mxu0 %v2820
        %3087 = vmatpush1.bf16.msra.mxu0 %v2819
        %3088 = vmatprep.subr.bf16.mxu0 %v2823
        %3089 = vmatpush1.bf16.msra.mxu0 %v2822
        %3090 = vmatprep.subr.bf16.mxu0 %v2826
        %3091 = vmatpush1.bf16.msra.mxu0 %v2825
        %3092 = vmatprep.subr.bf16.mxu0 %v2829
        %3093 = vmatpush1.bf16.msra.mxu0 %v2828
        %3094 = vmatprep.mubr.bf16.mxu0 %v2134
        %3095 = vmatmul.mubr.bf16.gmra.mrb[0].mxu0 %v2133
        %v3096 = vpop.f32.mrb[0].mxu0
        %v3097 = vadd.f32 0.0, %v3096
        %v3098 = vpop.f32.mrb[0].mxu0
        %v3099 = vadd.f32 0.0, %v3098
        %v3100 = vpop.f32.mrb[0].mxu0
        %v3101 = vadd.f32 0.0, %v3100
        %v3102 = vpop.f32.mrb[0].mxu0
        %v3103 = vadd.f32 0.0, %v3102
        %3104 = vdwg.mxu0
        %3105 = vmatprep.subr.bf16.mxu0 %v2832
        %3106 = vmatpush1.bf16.msra.mxu0 %v2831
        %3107 = vmatprep.subr.bf16.mxu0 %v2835
        %3108 = vmatpush1.bf16.msra.mxu0 %v2834
        %3109 = vmatprep.subr.bf16.mxu0 %v2838
        %3110 = vmatpush1.bf16.msra.mxu0 %v2837
        %3111 = vmatprep.subr.bf16.mxu0 %v2841
        %3112 = vmatpush1.bf16.msra.mxu0 %v2840
        %3113 = vmatprep.subr.bf16.mxu0 %v2844
        %3114 = vmatpush1.bf16.msra.mxu0 %v2843
        %3115 = vmatprep.subr.bf16.mxu0 %v2847
        %3116 = vmatpush1.bf16.msra.mxu0 %v2846
        %3117 = vmatprep.subr.bf16.mxu0 %v2850
        %3118 = vmatpush1.bf16.msra.mxu0 %v2849
        %3119 = vmatprep.subr.bf16.mxu0 %v2853
        %3120 = vmatpush1.bf16.msra.mxu0 %v2852
        %3121 = vmatprep.subr.bf16.mxu0 %v2856
        %3122 = vmatpush1.bf16.msra.mxu0 %v2855
        %3123 = vmatprep.subr.bf16.mxu0 %v2859
        %3124 = vmatpush1.bf16.msra.mxu0 %v2858
        %3125 = vmatprep.subr.bf16.mxu0 %v2862
        %3126 = vmatpush1.bf16.msra.mxu0 %v2861
        %3127 = vmatprep.subr.bf16.mxu0 %v2865
        %3128 = vmatpush1.bf16.msra.mxu0 %v2864
        %3129 = vmatprep.subr.bf16.mxu0 %v2868
        %3130 = vmatpush1.bf16.msra.mxu0 %v2867
        %3131 = vmatprep.subr.bf16.mxu0 %v2871
        %3132 = vmatpush1.bf16.msra.mxu0 %v2870
        %3133 = vmatprep.subr.bf16.mxu0 %v2874
        %3134 = vmatpush1.bf16.msra.mxu0 %v2873
        %3135 = vmatprep.subr.bf16.mxu0 %v2877
        %3136 = vmatpush1.bf16.msra.mxu0 %v2876
        %3137 = vmatprep.mubr.bf16.mxu0 %v2136
        %3138 = vmatmul.mubr.bf16.gmra.mrb[0].mxu0 %v2135
        %v3139 = vpop.f32.mrb[0].mxu0
        %v3140 = vadd.f32 %v3097, %v3139
        %v3141 = vpop.f32.mrb[0].mxu0
        %v3142 = vadd.f32 %v3099, %v3141
        %v3143 = vpop.f32.mrb[0].mxu0
        %v3144 = vadd.f32 %v3101, %v3143
        %v3145 = vpop.f32.mrb[0].mxu0
        %v3146 = vadd.f32 %v3103, %v3145
        %3147 = vdwg.mxu0
        %3148 = vmatprep.subr.bf16.mxu0 %v2880
        %3149 = vmatpush1.bf16.msra.mxu0 %v2879
        %3150 = vmatprep.subr.bf16.mxu0 %v2883
        %3151 = vmatpush1.bf16.msra.mxu0 %v2882
        %3152 = vmatprep.subr.bf16.mxu0 %v2886
        %3153 = vmatpush1.bf16.msra.mxu0 %v2885
        %3154 = vmatprep.subr.bf16.mxu0 %v2889
        %3155 = vmatpush1.bf16.msra.mxu0 %v2888
        %3156 = vmatprep.subr.bf16.mxu0 %v2892
        %3157 = vmatpush1.bf16.msra.mxu0 %v2891
        %3158 = vmatprep.subr.bf16.mxu0 %v2895
        %3159 = vmatpush1.bf16.msra.mxu0 %v2894
        %3160 = vmatprep.subr.bf16.mxu0 %v2898
        %3161 = vmatpush1.bf16.msra.mxu0 %v2897
        %3162 = vmatprep.subr.bf16.mxu0 %v2901
        %3163 = vmatpush1.bf16.msra.mxu0 %v2900
        %3164 = vmatprep.subr.bf16.mxu0 %v2904
        %3165 = vmatpush1.bf16.msra.mxu0 %v2903
        %3166 = vmatprep.subr.bf16.mxu0 %v2907
        %3167 = vmatpush1.bf16.msra.mxu0 %v2906
        %3168 = vmatprep.subr.bf16.mxu0 %v2910
        %3169 = vmatpush1.bf16.msra.mxu0 %v2909
        %3170 = vmatprep.subr.bf16.mxu0 %v2913
        %3171 = vmatpush1.bf16.msra.mxu0 %v2912
        %3172 = vmatprep.subr.bf16.mxu0 %v2916
        %3173 = vmatpush1.bf16.msra.mxu0 %v2915
        %3174 = vmatprep.subr.bf16.mxu0 %v2919
        %3175 = vmatpush1.bf16.msra.mxu0 %v2918
        %3176 = vmatprep.subr.bf16.mxu0 0
        %3177 = vmatpush1.bf16.msra.mxu0 0
        %3178 = vmatprep.subr.bf16.mxu0 0
        %3179 = vmatpush1.bf16.msra.mxu0 0
        %3180 = vmatprep.mubr.bf16.mxu0 %v3060
        %3181 = vmatmul.mubr.bf16.gmra.mrb[0].mxu0 %v2137
        %v3182 = vpop.f32.mrb[0].mxu0
        %v3183 = vadd.f32 %v3140, %v3182
        %v3184 = vpop.f32.mrb[0].mxu0
        %v3185 = vadd.f32 %v3142, %v3184
        %v3186 = vpop.f32.mrb[0].mxu0
        %v3187 = vadd.f32 %v3144, %v3186
        %v3188 = vpop.f32.mrb[0].mxu0
        %v3189 = vadd.f32 %v3146, %v3188
        %3190 = vdwg.mxu0
        %3191 = vmatprep.subr.bf16.mxu0 0
        %3192 = vmatpush1.bf16.msra.mxu0 %v2785
        %3193 = vmatprep.subr.bf16.mxu0 0
        %3194 = vmatpush1.bf16.msra.mxu0 %v2788
        %3195 = vmatprep.subr.bf16.mxu0 0
        %3196 = vmatpush1.bf16.msra.mxu0 %v2791
        %3197 = vmatprep.subr.bf16.mxu0 0
        %3198 = vmatpush1.bf16.msra.mxu0 %v2794
        %3199 = vmatprep.subr.bf16.mxu0 0
        %3200 = vmatpush1.bf16.msra.mxu0 %v2797
        %3201 = vmatprep.subr.bf16.mxu0 0
        %3202 = vmatpush1.bf16.msra.mxu0 %v2800
        %3203 = vmatprep.subr.bf16.mxu0 0
        %3204 = vmatpush1.bf16.msra.mxu0 %v2803
        %3205 = vmatprep.subr.bf16.mxu0 0
        %3206 = vmatpush1.bf16.msra.mxu0 %v2806
        %3207 = vmatprep.subr.bf16.mxu0 0
        %3208 = vmatpush1.bf16.msra.mxu0 %v2809
        %3209 = vmatprep.subr.bf16.mxu0 0
        %3210 = vmatpush1.bf16.msra.mxu0 %v2812
        %3211 = vmatprep.subr.bf16.mxu0 0
        %3212 = vmatpush1.bf16.msra.mxu0 %v2815
        %3213 = vmatprep.subr.bf16.mxu0 0
        %3214 = vmatpush1.bf16.msra.mxu0 %v2818
        %3215 = vmatprep.subr.bf16.mxu0 0
        %3216 = vmatpush1.bf16.msra.mxu0 %v2821
        %3217 = vmatprep.subr.bf16.mxu0 0
        %3218 = vmatpush1.bf16.msra.mxu0 %v2824
        %3219 = vmatprep.subr.bf16.mxu0 0
        %3220 = vmatpush1.bf16.msra.mxu0 %v2827
        %3221 = vmatprep.subr.bf16.mxu0 0
        %3222 = vmatpush1.bf16.msra.mxu0 %v2830
        %3223 = vmatprep.mubr.bf16.mxu0 %v2134
        %3224 = vmatmul.mubr.bf16.gmra.mrb[0].mxu0 %v2133
        %v3225 = vpop.f32.mrb[0].mxu0
        %v3226 = vadd.f32 0.0, %v3225
        %v3227 = vpop.f32.mrb[0].mxu0
        %v3228 = vpop.f32.mrb[0].mxu0
        %v3229 = vadd.f32 0.0, %v3228
        %v3230 = vpop.f32.mrb[0].mxu0
        %3231 = vdwg.mxu0
        %3232 = vmatprep.subr.bf16.mxu0 0
        %3233 = vmatpush1.bf16.msra.mxu0 %v2833
        %3234 = vmatprep.subr.bf16.mxu0 0
        %3235 = vmatpush1.bf16.msra.mxu0 %v2836
        %3236 = vmatprep.subr.bf16.mxu0 0
        %3237 = vmatpush1.bf16.msra.mxu0 %v2839
        %3238 = vmatprep.subr.bf16.mxu0 0
        %3239 = vmatpush1.bf16.msra.mxu0 %v2842
        %3240 = vmatprep.subr.bf16.mxu0 0
        %3241 = vmatpush1.bf16.msra.mxu0 %v2845
        %3242 = vmatprep.subr.bf16.mxu0 0
        %3243 = vmatpush1.bf16.msra.mxu0 %v2848
        %3244 = vmatprep.subr.bf16.mxu0 0
        %3245 = vmatpush1.bf16.msra.mxu0 %v2851
        %3246 = vmatprep.subr.bf16.mxu0 0
        %3247 = vmatpush1.bf16.msra.mxu0 %v2854
        %3248 = vmatprep.subr.bf16.mxu0 0
        %3249 = vmatpush1.bf16.msra.mxu0 %v2857
        %3250 = vmatprep.subr.bf16.mxu0 0
        %3251 = vmatpush1.bf16.msra.mxu0 %v2860
        %3252 = vmatprep.subr.bf16.mxu0 0
        %3253 = vmatpush1.bf16.msra.mxu0 %v2863
        %3254 = vmatprep.subr.bf16.mxu0 0
        %3255 = vmatpush1.bf16.msra.mxu0 %v2866
        %3256 = vmatprep.subr.bf16.mxu0 0
        %3257 = vmatpush1.bf16.msra.mxu0 %v2869
        %3258 = vmatprep.subr.bf16.mxu0 0
        %3259 = vmatpush1.bf16.msra.mxu0 %v2872
        %3260 = vmatprep.subr.bf16.mxu0 0
        %3261 = vmatpush1.bf16.msra.mxu0 %v2875
        %3262 = vmatprep.subr.bf16.mxu0 0
        %3263 = vmatpush1.bf16.msra.mxu0 %v2878
        %3264 = vmatprep.mubr.bf16.mxu0 %v2136
        %3265 = vmatmul.mubr.bf16.gmra.mrb[0].mxu0 %v2135
        %v3266 = vpop.f32.mrb[0].mxu0
        %v3267 = vadd.f32 %v3226, %v3266
        %v3268 = vpop.f32.mrb[0].mxu0
        %v3269 = vpop.f32.mrb[0].mxu0
        %v3270 = vadd.f32 %v3229, %v3269
        %v3271 = vpop.f32.mrb[0].mxu0
        %3272 = vdwg.mxu0
        %3273 = vmatprep.subr.bf16.mxu0 0
        %3274 = vmatpush1.bf16.msra.mxu0 %v2881
        %3275 = vmatprep.subr.bf16.mxu0 0
        %3276 = vmatpush1.bf16.msra.mxu0 %v2884
        %3277 = vmatprep.subr.bf16.mxu0 0
        %3278 = vmatpush1.bf16.msra.mxu0 %v2887
        %3279 = vmatprep.subr.bf16.mxu0 0
        %3280 = vmatpush1.bf16.msra.mxu0 %v2890
        %3281 = vmatprep.subr.bf16.mxu0 0
        %3282 = vmatpush1.bf16.msra.mxu0 %v2893
        %3283 = vmatprep.subr.bf16.mxu0 0
        %3284 = vmatpush1.bf16.msra.mxu0 %v2896
        %3285 = vmatprep.subr.bf16.mxu0 0
        %3286 = vmatpush1.bf16.msra.mxu0 %v2899
        %3287 = vmatprep.subr.bf16.mxu0 0
        %3288 = vmatpush1.bf16.msra.mxu0 %v2902
        %3289 = vmatprep.subr.bf16.mxu0 0
        %3290 = vmatpush1.bf16.msra.mxu0 %v2905
        %3291 = vmatprep.subr.bf16.mxu0 0
        %3292 = vmatpush1.bf16.msra.mxu0 %v2908
        %3293 = vmatprep.subr.bf16.mxu0 0
        %3294 = vmatpush1.bf16.msra.mxu0 %v2911
        %3295 = vmatprep.subr.bf16.mxu0 0
        %3296 = vmatpush1.bf16.msra.mxu0 %v2914
        %3297 = vmatprep.subr.bf16.mxu0 0
        %3298 = vmatpush1.bf16.msra.mxu0 %v2917
        %3299 = vmatprep.subr.bf16.mxu0 0
        %3300 = vmatpush1.bf16.msra.mxu0 %v2920
        %3301 = vmatprep.subr.bf16.mxu0 0
        %3302 = vmatpush1.bf16.msra.mxu0 0
        %3303 = vmatprep.subr.bf16.mxu0 0
        %3304 = vmatpush1.bf16.msra.mxu0 0
        %3305 = vmatprep.mubr.bf16.mxu0 %v3060
        %3306 = vmatmul.mubr.bf16.gmra.mrb[0].mxu0 %v2137
        %v3307 = vpop.f32.mrb[0].mxu0
        %v3308 = vadd.f32 %v3267, %v3307
        %v3309 = vpop.f32.mrb[0].mxu0
        %v3310 = vpop.f32.mrb[0].mxu0
        %v3311 = vadd.f32 %v3270, %v3310
        %v3312 = vpop.f32.mrb[0].mxu0
        %3313 = vdwg.mxu0
        %v3314 = vpack.c.bf16 %v3187, %v3183
        %v3315 = vpack.c.bf16 %v3189, %v3185
        %v3316 = vpack.c.bf16 %v3311, %v3308
        %v3317 = vld [vmem:[#allocation9] sm:$0xff]
        %v3318 = vld [vmem:[#allocation9 + $0x8] sm:$0xff]
        %v3319 = vld [vmem:[#allocation9 + $0x10] sm:$0xff]
        %v3320 = vld [vmem:[#allocation9 + $0x18] sm:$0xff]
        %v3321 = vld [vmem:[#allocation9 + $0x20] sm:$0xff]
        %v3322 = vld [vmem:[#allocation9 + $0x28] sm:$0xff]
        %v3323 = vld [vmem:[#allocation9 + $0x30] sm:$0xff]
        %v3324 = vld [vmem:[#allocation9 + $0x38] sm:$0xff]
        %v3325 = vld [vmem:[#allocation9 + $0x40] sm:$0xff]
        %v3326 = vld [vmem:[#allocation9 + $0x48] sm:$0xff]
        %v3327 = vld [vmem:[#allocation9 + $0x50] sm:$0xff]
        %v3328 = vld [vmem:[#allocation9 + $0x58] sm:$0xff]
        %v3329 = vld [vmem:[#allocation9 + $0x60] sm:$0xff]
        %v3330 = vld [vmem:[#allocation9 + $0x68] sm:$0xff]
        %v3331 = vld [vmem:[#allocation9 + $0x70] sm:$0xff]
        %v3332 = vld [vmem:[#allocation9 + $0x78] sm:$0xff]
        %v3333 = vld [vmem:[#allocation9 + $0x80] sm:$0xff]
        %v3334 = vld [vmem:[#allocation9 + $0x88] sm:$0xff]
        %v3335 = vld [vmem:[#allocation9 + $0x90] sm:$0xff]
        %v3336 = vld [vmem:[#allocation9 + $0x98] sm:$0xff]
        %v3337 = vld [vmem:[#allocation9 + $0xa0] sm:$0xff]
        %v3338 = vld [vmem:[#allocation9 + $0xa8] sm:$0xff]
        %v3339 = vld [vmem:[#allocation9 + $0xb0] sm:$0xff]
        %v3340 = vld [vmem:[#allocation9 + $0xb8] sm:$0xff]
        %v3341 = vld [vmem:[#allocation9 + $0xc0] sm:$0xff]
        %v3342 = vld [vmem:[#allocation9 + $0xc8] sm:$0xff]
        %v3343 = vld [vmem:[#allocation9 + $0xd0] sm:$0xff]
        %v3344 = vld [vmem:[#allocation9 + $0xd8] sm:$0xff]
        %v3345 = vld [vmem:[#allocation9 + $0xe0] sm:$0xff]
        %v3346 = vld [vmem:[#allocation9 + $0xe8] sm:$0xff]
        %v3347 = vld [vmem:[#allocation9 + $0xf0] sm:$0xff]
        %v3348 = vld [vmem:[#allocation9 + $0xf8] sm:$0xff]
        %v3349 = vld [vmem:[#allocation9 + $0x100] sm:$0xff]
        %v3350 = vld [vmem:[#allocation9 + $0x108] sm:$0xff]
        %v3351 = vld [vmem:[#allocation9 + $0x110] sm:$0xff]
        %v3352 = vld [vmem:[#allocation9 + $0x118] sm:$0xff]
        %v3353 = vld [vmem:[#allocation9 + $0x120] sm:$0xff]
        %v3354 = vld [vmem:[#allocation9 + $0x128] sm:$0xff]
        %v3355 = vld [vmem:[#allocation9 + $0x130] sm:$0xff]
        %v3356 = vld [vmem:[#allocation9 + $0x138] sm:$0xff]
        %v3357 = vld [vmem:[#allocation9 + $0x140] sm:$0xff]
        %v3358 = vld [vmem:[#allocation9 + $0x148] sm:$0xff]
        %v3359 = vld [vmem:[#allocation9 + $0x150] sm:$0xff]
        %v3360 = vld [vmem:[#allocation9 + $0x158] sm:$0xff]
        %v3361 = vld [vmem:[#allocation9 + $0x160] sm:$0xff]
        %v3362 = vld [vmem:[#allocation9 + $0x168] sm:$0xff]
        %v3363 = vld [vmem:[#allocation9 + $0x170] sm:$0xff]
        %v3364 = vld [vmem:[#allocation9 + $0x178] sm:$0xff]
        %v3365 = vld [vmem:[#allocation9 + $0x180] sm:$0xff]
        %v3366 = vld [vmem:[#allocation9 + $0x188] sm:$0xff]
        %v3367 = vld [vmem:[#allocation9 + $0x190] sm:$0xff]
        %v3368 = vld [vmem:[#allocation9 + $0x198] sm:$0xff]
        %v3369 = vld [vmem:[#allocation9 + $0x1a0] sm:$0xff]
        %v3370 = vld [vmem:[#allocation9 + $0x1a8] sm:$0xff]
        %v3371 = vld [vmem:[#allocation9 + $0x1b0] sm:$0xff]
        %v3372 = vld [vmem:[#allocation9 + $0x1b8] sm:$0xff]
        %v3373 = vld [vmem:[#allocation9 + $0x1c0] sm:$0xff]
        %v3374 = vld [vmem:[#allocation9 + $0x1c8] sm:$0xff]
        %v3375 = vld [vmem:[#allocation9 + $0x1d0] sm:$0xff]
        %v3376 = vld [vmem:[#allocation9 + $0x1d8] sm:$0xff]
        %v3377 = vld [vmem:[#allocation9 + $0x1e0] sm:$0xff]
        %v3378 = vld [vmem:[#allocation9 + $0x1e8] sm:$0xff]
        %v3379 = vld [vmem:[#allocation9 + $0x1f0] sm:$0xff]
        %v3380 = vld [vmem:[#allocation9 + $0x1f8] sm:$0xff]
        %v3381 = vld [vmem:[#allocation9 + $0x200] sm:$0xff]
        %v3382 = vld [vmem:[#allocation9 + $0x208] sm:$0xff]
        %v3383 = vld [vmem:[#allocation9 + $0x210] sm:$0xff]
        %v3384 = vld [vmem:[#allocation9 + $0x218] sm:$0xff]
        %v3385 = vld [vmem:[#allocation9 + $0x220] sm:$0xff]
        %v3386 = vld [vmem:[#allocation9 + $0x228] sm:$0xff]
        %v3387 = vld [vmem:[#allocation9 + $0x230] sm:$0xff]
        %v3388 = vld [vmem:[#allocation9 + $0x238] sm:$0xff]
        %v3389 = vld [vmem:[#allocation9 + $0x240] sm:$0xff]
        %v3390 = vld [vmem:[#allocation9 + $0x248] sm:$0xff]
        %v3391 = vld [vmem:[#allocation9 + $0x250] sm:$0xff]
        %v3392 = vld [vmem:[#allocation9 + $0x258] sm:$0xff]
        %v3393 = vld [vmem:[#allocation9 + $0x260] sm:$0xff]
        %v3394 = vld [vmem:[#allocation9 + $0x268] sm:$0xff]
        %v3395 = vld [vmem:[#allocation9 + $0x270] sm:$0xff]
        %v3396 = vld [vmem:[#allocation9 + $0x278] sm:$0xff]
        %v3397 = vld [vmem:[#allocation9 + $0x280] sm:$0xff]
        %v3398 = vld [vmem:[#allocation9 + $0x288] sm:$0xff]
        %v3399 = vld [vmem:[#allocation9 + $0x290] sm:$0xff]
        %v3400 = vld [vmem:[#allocation9 + $0x298] sm:$0xff]
        %v3401 = vld [vmem:[#allocation9 + $0x2a0] sm:$0xff]
        %v3402 = vld [vmem:[#allocation9 + $0x2a8] sm:$0xff]
        %v3403 = vld [vmem:[#allocation9 + $0x2b0] sm:$0xff]
        %v3404 = vld [vmem:[#allocation9 + $0x2b8] sm:$0xff]
        %v3405 = vld [vmem:[#allocation9 + $0x2c0] sm:$0xff]
        %v3406 = vld [vmem:[#allocation9 + $0x2c8] sm:$0xff]
        %v3407 = vld [vmem:[#allocation9 + $0x2d0] sm:$0xff]
        %v3408 = vld [vmem:[#allocation9 + $0x2d8] sm:$0xff]
        %v3409 = vld [vmem:[#allocation9 + $0x2e0] sm:$0xff]
        %v3410 = vld [vmem:[#allocation9 + $0x2e8] sm:$0xff]
        %v3411 = vld [vmem:[#allocation9 + $0x2f0] sm:$0xff]
        %v3412 = vld [vmem:[#allocation9 + $0x2f8] sm:$0xff]
        %s3413 = scalar_lea.vmem [#allocation9], 768
        %v3414 = vld [vmem:[%s3413] sm:$0xff]
        %v3415 = vld [vmem:[%s3413 + $0x8] sm:$0xff]
        %v3416 = vld [vmem:[%s3413 + $0x10] sm:$0xff]
        %v3417 = vld [vmem:[%s3413 + $0x18] sm:$0xff]
        %v3418 = vld [vmem:[%s3413 + $0x20] sm:$0xff]
        %v3419 = vld [vmem:[%s3413 + $0x28] sm:$0xff]
        %v3420 = vld [vmem:[%s3413 + $0x30] sm:$0xff]
        %v3421 = vld [vmem:[%s3413 + $0x38] sm:$0xff]
        %v3422 = vld [vmem:[%s3413 + $0x40] sm:$0xff]
        %v3423 = vld [vmem:[%s3413 + $0x48] sm:$0xff]
        %v3424 = vld [vmem:[%s3413 + $0x50] sm:$0xff]
        %v3425 = vld [vmem:[%s3413 + $0x58] sm:$0xff]
        %v3426 = vld [vmem:[%s3413 + $0x60] sm:$0xff]
        %v3427 = vld [vmem:[%s3413 + $0x68] sm:$0xff]
        %v3428 = vld [vmem:[%s3413 + $0x70] sm:$0xff]
        %v3429 = vld [vmem:[%s3413 + $0x78] sm:$0xff]
        %v3430 = vld [vmem:[%s3413 + $0x80] sm:$0xff]
        %v3431 = vld [vmem:[%s3413 + $0x88] sm:$0xff]
        %v3432 = vld [vmem:[%s3413 + $0x90] sm:$0xff]
        %v3433 = vld [vmem:[%s3413 + $0x98] sm:$0xff]
        %v3434 = vld [vmem:[%s3413 + $0xa0] sm:$0xff]
        %v3435 = vld [vmem:[%s3413 + $0xa8] sm:$0xff]
        %v3436 = vld [vmem:[%s3413 + $0xb0] sm:$0xff]
        %v3437 = vld [vmem:[%s3413 + $0xb8] sm:$0xff]
        %v3438 = vld [vmem:[%s3413 + $0xc0] sm:$0xff]
        %v3439 = vld [vmem:[%s3413 + $0xc8] sm:$0xff]
        %v3440 = vld [vmem:[%s3413 + $0xd0] sm:$0xff]
        %v3441 = vld [vmem:[%s3413 + $0xd8] sm:$0xff]
        %v3442 = vld [vmem:[%s3413 + $0xe0] sm:$0xff]
        %v3443 = vld [vmem:[%s3413 + $0xe8] sm:$0xff]
        %v3444 = vld [vmem:[%s3413 + $0xf0] sm:$0xff]
        %v3445 = vld [vmem:[%s3413 + $0xf8] sm:$0xff]
        %v3446 = vld [vmem:[%s3413 + $0x100] sm:$0xff]
        %v3447 = vld [vmem:[%s3413 + $0x108] sm:$0xff]
        %v3448 = vld [vmem:[%s3413 + $0x110] sm:$0xff]
        %v3449 = vld [vmem:[%s3413 + $0x118] sm:$0xff]
        %v3450 = vld [vmem:[%s3413 + $0x120] sm:$0xff]
        %v3451 = vld [vmem:[%s3413 + $0x128] sm:$0xff]
        %v3452 = vld [vmem:[%s3413 + $0x130] sm:$0xff]
        %v3453 = vld [vmem:[%s3413 + $0x138] sm:$0xff]
        %v3454 = vld [vmem:[%s3413 + $0x140] sm:$0xff]
        %v3455 = vld [vmem:[%s3413 + $0x148] sm:$0xff]
        %v3456 = vld [vmem:[%s3413 + $0x150] sm:$0xff]
        %v3457 = vld [vmem:[%s3413 + $0x158] sm:$0xff]
        %v3458 = vld [vmem:[%s3413 + $0x160] sm:$0xff]
        %v3459 = vld [vmem:[%s3413 + $0x168] sm:$0xff]
        %v3460 = vld [vmem:[%s3413 + $0x170] sm:$0xff]
        %v3461 = vld [vmem:[%s3413 + $0x178] sm:$0xff]
        %v3462 = vld [vmem:[%s3413 + $0x180] sm:$0xff]
        %v3463 = vld [vmem:[%s3413 + $0x188] sm:$0xff]
        %v3464 = vld [vmem:[%s3413 + $0x190] sm:$0xff]
        %v3465 = vld [vmem:[%s3413 + $0x198] sm:$0xff]
        %v3466 = vld [vmem:[%s3413 + $0x1a0] sm:$0xff]
        %v3467 = vld [vmem:[%s3413 + $0x1a8] sm:$0xff]
        %v3468 = vld [vmem:[%s3413 + $0x1b0] sm:$0xff]
        %v3469 = vld [vmem:[%s3413 + $0x1b8] sm:$0xff]
        %v3470 = vld [vmem:[%s3413 + $0x1c0] sm:$0xff]
        %v3471 = vld [vmem:[%s3413 + $0x1c8] sm:$0xff]
        %v3472 = vld [vmem:[%s3413 + $0x1d0] sm:$0xff]
        %v3473 = vld [vmem:[%s3413 + $0x1d8] sm:$0xff]
        %v3474 = vld [vmem:[%s3413 + $0x1e0] sm:$0xff]
        %v3475 = vld [vmem:[%s3413 + $0x1e8] sm:$0xff]
        %v3476 = vld [vmem:[%s3413 + $0x1f0] sm:$0xff]
        %v3477 = vld [vmem:[%s3413 + $0x1f8] sm:$0xff]
        %v3478 = vld [vmem:[%s3413 + $0x200] sm:$0xff]
        %v3479 = vld [vmem:[%s3413 + $0x208] sm:$0xff]
        %v3480 = vld [vmem:[%s3413 + $0x210] sm:$0xff]
        %v3481 = vld [vmem:[%s3413 + $0x218] sm:$0xff]
        %v3482 = vld [vmem:[%s3413 + $0x220] sm:$0xff]
        %v3483 = vld [vmem:[%s3413 + $0x228] sm:$0xff]
        %v3484 = vld [vmem:[%s3413 + $0x230] sm:$0xff]
        %v3485 = vld [vmem:[%s3413 + $0x238] sm:$0xff]
        %v3486 = vld [vmem:[%s3413 + $0x240] sm:$0xff]
        %v3487 = vld [vmem:[%s3413 + $0x248] sm:$0xff]
        %v3488 = vld [vmem:[%s3413 + $0x250] sm:$0xff]
        %v3489 = vld [vmem:[%s3413 + $0x258] sm:$0xff]
        %v3490 = vld [vmem:[%s3413 + $0x260] sm:$0xff]
        %v3491 = vld [vmem:[%s3413 + $0x268] sm:$0xff]
        %v3492 = vld [vmem:[%s3413 + $0x270] sm:$0xff]
        %v3493 = vld [vmem:[%s3413 + $0x278] sm:$0xff]
        %v3494 = vld [vmem:[%s3413 + $0x280] sm:$0xff]
        %v3495 = vld [vmem:[%s3413 + $0x288] sm:$0xff]
        %v3496 = vld [vmem:[%s3413 + $0x290] sm:$0xff]
        %v3497 = vld [vmem:[%s3413 + $0x298] sm:$0xff]
        %v3498 = vld [vmem:[%s3413 + $0x2a0] sm:$0xff]
        %v3499 = vld [vmem:[%s3413 + $0x2a8] sm:$0xff]
        %v3500 = vld [vmem:[%s3413 + $0x2b0] sm:$0xff]
        %v3501 = vld [vmem:[%s3413 + $0x2b8] sm:$0xff]
        %v3502 = vld [vmem:[%s3413 + $0x2c0] sm:$0xff]
        %v3503 = vld [vmem:[%s3413 + $0x2c8] sm:$0xff]
        %v3504 = vld [vmem:[%s3413 + $0x2d0] sm:$0xff]
        %v3505 = vld [vmem:[%s3413 + $0x2d8] sm:$0xff]
        %v3506 = vld [vmem:[%s3413 + $0x2e0] sm:$0xff]
        %v3507 = vld [vmem:[%s3413 + $0x2e8] sm:$0xff]
        %v3508 = vld [vmem:[%s3413 + $0x2f0] sm:$0xff]
        %v3509 = vld [vmem:[%s3413 + $0x2f8] sm:$0xff]
        %v3511 = vshrl.u32 %v3314, 16
        %v3513 = vshll.u32 %v3314, 16
        %v3515 = vrot.slane %v3513, 1
        %v3516 = vor.u32 %v3511, %v3515
        %v3518 = vshrl.u32 %v3315, 16
        %v3520 = vshll.u32 %v3315, 16
        %v3522 = vrot.slane %v3520, 1
        %v3523 = vor.u32 %v3518, %v3522
        %v3525 = vshrl.u32 %v3316, 16
        %v3527 = vshll.u32 %v3316, 16
        %v3529 = vrot.slane %v3527, 1
        %v3530 = vor.u32 %v3525, %v3529
        %v3630 = vunpack.c.l.b16 %v3414
        %v3631 = vunpack.c.h.b16 %v3414
        %v3632 = vunpack.c.l.b16 %v3415
        %v3633 = vunpack.c.h.b16 %v3415
        %v3634 = vunpack.c.l.b16 %v3416
        %v3635 = vunpack.c.h.b16 %v3416
        %v3636 = vunpack.c.l.b16 %v3417
        %v3637 = vunpack.c.h.b16 %v3417
        %v3638 = vunpack.c.l.b16 %v3418
        %v3639 = vunpack.c.h.b16 %v3418
        %v3640 = vunpack.c.l.b16 %v3419
        %v3641 = vunpack.c.h.b16 %v3419
        %v3642 = vunpack.c.l.b16 %v3420
        %v3643 = vunpack.c.h.b16 %v3420
        %v3644 = vunpack.c.l.b16 %v3421
        %v3645 = vunpack.c.h.b16 %v3421
        %v3646 = vunpack.c.l.b16 %v3422
        %v3647 = vunpack.c.h.b16 %v3422
        %v3648 = vunpack.c.l.b16 %v3423
        %v3649 = vunpack.c.h.b16 %v3423
        %v3650 = vunpack.c.l.b16 %v3424
        %v3651 = vunpack.c.h.b16 %v3424
        %v3652 = vunpack.c.l.b16 %v3425
        %v3653 = vunpack.c.h.b16 %v3425
        %v3654 = vunpack.c.l.b16 %v3426
        %v3655 = vunpack.c.h.b16 %v3426
        %v3656 = vunpack.c.l.b16 %v3427
        %v3657 = vunpack.c.h.b16 %v3427
        %v3658 = vunpack.c.l.b16 %v3428
        %v3659 = vunpack.c.h.b16 %v3428
        %v3660 = vunpack.c.l.b16 %v3429
        %v3661 = vunpack.c.h.b16 %v3429
        %v3662 = vunpack.c.l.b16 %v3430
        %v3663 = vunpack.c.h.b16 %v3430
        %v3664 = vunpack.c.l.b16 %v3431
        %v3665 = vunpack.c.h.b16 %v3431
        %v3666 = vunpack.c.l.b16 %v3432
        %v3667 = vunpack.c.h.b16 %v3432
        %v3668 = vunpack.c.l.b16 %v3433
        %v3669 = vunpack.c.h.b16 %v3433
        %v3670 = vunpack.c.l.b16 %v3434
        %v3671 = vunpack.c.h.b16 %v3434
        %v3672 = vunpack.c.l.b16 %v3435
        %v3673 = vunpack.c.h.b16 %v3435
        %v3674 = vunpack.c.l.b16 %v3436
        %v3675 = vunpack.c.h.b16 %v3436
        %v3676 = vunpack.c.l.b16 %v3437
        %v3677 = vunpack.c.h.b16 %v3437
        %v3678 = vunpack.c.l.b16 %v3438
        %v3679 = vunpack.c.h.b16 %v3438
        %v3680 = vunpack.c.l.b16 %v3439
        %v3681 = vunpack.c.h.b16 %v3439
        %v3682 = vunpack.c.l.b16 %v3440
        %v3683 = vunpack.c.h.b16 %v3440
        %v3684 = vunpack.c.l.b16 %v3441
        %v3685 = vunpack.c.h.b16 %v3441
        %v3686 = vunpack.c.l.b16 %v3442
        %v3687 = vunpack.c.h.b16 %v3442
        %v3688 = vunpack.c.l.b16 %v3443
        %v3689 = vunpack.c.h.b16 %v3443
        %v3690 = vunpack.c.l.b16 %v3444
        %v3691 = vunpack.c.h.b16 %v3444
        %v3692 = vunpack.c.l.b16 %v3445
        %v3693 = vunpack.c.h.b16 %v3445
        %v3694 = vunpack.c.l.b16 %v3446
        %v3695 = vunpack.c.h.b16 %v3446
        %v3696 = vunpack.c.l.b16 %v3447
        %v3697 = vunpack.c.h.b16 %v3447
        %v3698 = vunpack.c.l.b16 %v3448
        %v3699 = vunpack.c.h.b16 %v3448
        %v3700 = vunpack.c.l.b16 %v3449
        %v3701 = vunpack.c.h.b16 %v3449
        %v3702 = vunpack.c.l.b16 %v3450
        %v3703 = vunpack.c.h.b16 %v3450
        %v3704 = vunpack.c.l.b16 %v3451
        %v3705 = vunpack.c.h.b16 %v3451
        %v3706 = vunpack.c.l.b16 %v3452
        %v3707 = vunpack.c.h.b16 %v3452
        %v3708 = vunpack.c.l.b16 %v3453
        %v3709 = vunpack.c.h.b16 %v3453
        %v3710 = vunpack.c.l.b16 %v3454
        %v3711 = vunpack.c.h.b16 %v3454
        %v3712 = vunpack.c.l.b16 %v3455
        %v3713 = vunpack.c.h.b16 %v3455
        %v3714 = vunpack.c.l.b16 %v3456
        %v3715 = vunpack.c.h.b16 %v3456
        %v3716 = vunpack.c.l.b16 %v3457
        %v3717 = vunpack.c.h.b16 %v3457
        %v3718 = vunpack.c.l.b16 %v3458
        %v3719 = vunpack.c.h.b16 %v3458
        %v3720 = vunpack.c.l.b16 %v3459
        %v3721 = vunpack.c.h.b16 %v3459
        %v3722 = vunpack.c.l.b16 %v3460
        %v3723 = vunpack.c.h.b16 %v3460
        %v3724 = vunpack.c.l.b16 %v3461
        %v3725 = vunpack.c.h.b16 %v3461
        %v3726 = vunpack.c.l.b16 %v3462
        %v3727 = vunpack.c.h.b16 %v3462
        %v3728 = vunpack.c.l.b16 %v3463
        %v3729 = vunpack.c.h.b16 %v3463
        %v3730 = vunpack.c.l.b16 %v3464
        %v3731 = vunpack.c.h.b16 %v3464
        %v3732 = vunpack.c.l.b16 %v3465
        %v3733 = vunpack.c.h.b16 %v3465
        %v3734 = vunpack.c.l.b16 %v3466
        %v3735 = vunpack.c.h.b16 %v3466
        %v3736 = vunpack.c.l.b16 %v3467
        %v3737 = vunpack.c.h.b16 %v3467
        %v3738 = vunpack.c.l.b16 %v3468
        %v3739 = vunpack.c.h.b16 %v3468
        %v3740 = vunpack.c.l.b16 %v3469
        %v3741 = vunpack.c.h.b16 %v3469
        %v3742 = vunpack.c.l.b16 %v3470
        %v3743 = vunpack.c.h.b16 %v3470
        %v3744 = vunpack.c.l.b16 %v3471
        %v3745 = vunpack.c.h.b16 %v3471
        %v3746 = vunpack.c.l.b16 %v3472
        %v3747 = vunpack.c.h.b16 %v3472
        %v3748 = vunpack.c.l.b16 %v3473
        %v3749 = vunpack.c.h.b16 %v3473
        %v3750 = vunpack.c.l.b16 %v3474
        %v3751 = vunpack.c.h.b16 %v3474
        %v3752 = vunpack.c.l.b16 %v3475
        %v3753 = vunpack.c.h.b16 %v3475
        %v3754 = vunpack.c.l.b16 %v3476
        %v3755 = vunpack.c.h.b16 %v3476
        %v3756 = vunpack.c.l.b16 %v3477
        %v3757 = vunpack.c.h.b16 %v3477
        %v3758 = vunpack.c.l.b16 %v3478
        %v3759 = vunpack.c.h.b16 %v3478
        %v3760 = vunpack.c.l.b16 %v3479
        %v3761 = vunpack.c.h.b16 %v3479
        %v3762 = vunpack.c.l.b16 %v3480
        %v3763 = vunpack.c.h.b16 %v3480
        %v3764 = vunpack.c.l.b16 %v3481
        %v3765 = vunpack.c.h.b16 %v3481
        %v3766 = vunpack.c.l.b16 %v3482
        %v3767 = vunpack.c.h.b16 %v3482
        %v3768 = vunpack.c.l.b16 %v3483
        %v3769 = vunpack.c.h.b16 %v3483
        %v3770 = vunpack.c.l.b16 %v3484
        %v3771 = vunpack.c.h.b16 %v3484
        %v3772 = vunpack.c.l.b16 %v3485
        %v3773 = vunpack.c.h.b16 %v3485
        %v3774 = vunpack.c.l.b16 %v3486
        %v3775 = vunpack.c.h.b16 %v3486
        %v3776 = vunpack.c.l.b16 %v3487
        %v3777 = vunpack.c.h.b16 %v3487
        %v3778 = vunpack.c.l.b16 %v3488
        %v3779 = vunpack.c.h.b16 %v3488
        %v3780 = vunpack.c.l.b16 %v3489
        %v3781 = vunpack.c.h.b16 %v3489
        %v3782 = vunpack.c.l.b16 %v3490
        %v3783 = vunpack.c.h.b16 %v3490
        %v3784 = vunpack.c.l.b16 %v3491
        %v3785 = vunpack.c.h.b16 %v3491
        %v3786 = vunpack.c.l.b16 %v3492
        %v3787 = vunpack.c.h.b16 %v3492
        %v3788 = vunpack.c.l.b16 %v3493
        %v3789 = vunpack.c.h.b16 %v3493
        %v3790 = vunpack.c.l.b16 %v3494
        %v3791 = vunpack.c.h.b16 %v3494
        %v3792 = vunpack.c.l.b16 %v3495
        %v3793 = vunpack.c.h.b16 %v3495
        %v3794 = vunpack.c.l.b16 %v3496
        %v3795 = vunpack.c.h.b16 %v3496
        %v3796 = vunpack.c.l.b16 %v3497
        %v3797 = vunpack.c.h.b16 %v3497
        %v3798 = vunpack.c.l.b16 %v3498
        %v3799 = vunpack.c.h.b16 %v3498
        %v3800 = vunpack.c.l.b16 %v3499
        %v3801 = vunpack.c.h.b16 %v3499
        %v3802 = vunpack.c.l.b16 %v3500
        %v3803 = vunpack.c.h.b16 %v3500
        %v3804 = vunpack.c.l.b16 %v3501
        %v3805 = vunpack.c.h.b16 %v3501
        %v3806 = vunpack.c.l.b16 %v3502
        %v3807 = vunpack.c.h.b16 %v3502
        %v3808 = vunpack.c.l.b16 %v3503
        %v3809 = vunpack.c.h.b16 %v3503
        %v3810 = vunpack.c.l.b16 %v3504
        %v3811 = vunpack.c.h.b16 %v3504
        %v3812 = vunpack.c.l.b16 %v3505
        %v3813 = vunpack.c.h.b16 %v3505
        %v3814 = vunpack.c.l.b16 %v3506
        %v3815 = vunpack.c.h.b16 %v3506
        %v3816 = vunpack.c.l.b16 %v3507
        %v3817 = vunpack.c.h.b16 %v3507
        %v3818 = vunpack.c.l.b16 %v3508
        %v3819 = vunpack.c.h.b16 %v3508
        %v3820 = vunpack.c.l.b16 %v3509
        %v3821 = vunpack.c.h.b16 %v3509
        %v3822 = vpack.c.b16 %v3634, %v3630
        %v3823 = vpack.c.b16 %v3635, %v3631
        %v3824 = vpack.c.b16 %v3636, %v3632
        %v3825 = vpack.c.b16 %v3637, %v3633
        %v3826 = vpack.c.b16 %v3642, %v3638
        %v3827 = vpack.c.b16 %v3643, %v3639
        %v3828 = vpack.c.b16 %v3644, %v3640
        %v3829 = vpack.c.b16 %v3645, %v3641
        %v3830 = vpack.c.b16 %v3650, %v3646
        %v3831 = vpack.c.b16 %v3651, %v3647
        %v3832 = vpack.c.b16 %v3652, %v3648
        %v3833 = vpack.c.b16 %v3653, %v3649
        %v3834 = vpack.c.b16 %v3658, %v3654
        %v3835 = vpack.c.b16 %v3659, %v3655
        %v3836 = vpack.c.b16 %v3660, %v3656
        %v3837 = vpack.c.b16 %v3661, %v3657
        %v3838 = vpack.c.b16 %v3666, %v3662
        %v3839 = vpack.c.b16 %v3667, %v3663
        %v3840 = vpack.c.b16 %v3668, %v3664
        %v3841 = vpack.c.b16 %v3669, %v3665
        %v3842 = vpack.c.b16 %v3674, %v3670
        %v3843 = vpack.c.b16 %v3675, %v3671
        %v3844 = vpack.c.b16 %v3676, %v3672
        %v3845 = vpack.c.b16 %v3677, %v3673
        %v3846 = vpack.c.b16 %v3682, %v3678
        %v3847 = vpack.c.b16 %v3683, %v3679
        %v3848 = vpack.c.b16 %v3684, %v3680
        %v3849 = vpack.c.b16 %v3685, %v3681
        %v3850 = vpack.c.b16 %v3690, %v3686
        %v3851 = vpack.c.b16 %v3691, %v3687
        %v3852 = vpack.c.b16 %v3692, %v3688
        %v3853 = vpack.c.b16 %v3693, %v3689
        %v3854 = vpack.c.b16 %v3698, %v3694
        %v3855 = vpack.c.b16 %v3699, %v3695
        %v3856 = vpack.c.b16 %v3700, %v3696
        %v3857 = vpack.c.b16 %v3701, %v3697
        %v3858 = vpack.c.b16 %v3706, %v3702
        %v3859 = vpack.c.b16 %v3707, %v3703
        %v3860 = vpack.c.b16 %v3708, %v3704
        %v3861 = vpack.c.b16 %v3709, %v3705
        %v3862 = vpack.c.b16 %v3714, %v3710
        %v3863 = vpack.c.b16 %v3715, %v3711
        %v3864 = vpack.c.b16 %v3716, %v3712
        %v3865 = vpack.c.b16 %v3717, %v3713
        %v3866 = vpack.c.b16 %v3722, %v3718
        %v3867 = vpack.c.b16 %v3723, %v3719
        %v3868 = vpack.c.b16 %v3724, %v3720
        %v3869 = vpack.c.b16 %v3725, %v3721
        %v3870 = vpack.c.b16 %v3730, %v3726
        %v3871 = vpack.c.b16 %v3731, %v3727
        %v3872 = vpack.c.b16 %v3732, %v3728
        %v3873 = vpack.c.b16 %v3733, %v3729
        %v3874 = vpack.c.b16 %v3738, %v3734
        %v3875 = vpack.c.b16 %v3739, %v3735
        %v3876 = vpack.c.b16 %v3740, %v3736
        %v3877 = vpack.c.b16 %v3741, %v3737
        %v3878 = vpack.c.b16 %v3746, %v3742
        %v3879 = vpack.c.b16 %v3747, %v3743
        %v3880 = vpack.c.b16 %v3748, %v3744
        %v3881 = vpack.c.b16 %v3749, %v3745
        %v3882 = vpack.c.b16 %v3754, %v3750
        %v3883 = vpack.c.b16 %v3755, %v3751
        %v3884 = vpack.c.b16 %v3756, %v3752
        %v3885 = vpack.c.b16 %v3757, %v3753
        %v3886 = vpack.c.b16 %v3762, %v3758
        %v3887 = vpack.c.b16 %v3763, %v3759
        %v3888 = vpack.c.b16 %v3764, %v3760
        %v3889 = vpack.c.b16 %v3765, %v3761
        %v3890 = vpack.c.b16 %v3770, %v3766
        %v3891 = vpack.c.b16 %v3771, %v3767
        %v3892 = vpack.c.b16 %v3772, %v3768
        %v3893 = vpack.c.b16 %v3773, %v3769
        %v3894 = vpack.c.b16 %v3778, %v3774
        %v3895 = vpack.c.b16 %v3779, %v3775
        %v3896 = vpack.c.b16 %v3780, %v3776
        %v3897 = vpack.c.b16 %v3781, %v3777
        %v3898 = vpack.c.b16 %v3786, %v3782
        %v3899 = vpack.c.b16 %v3787, %v3783
        %v3900 = vpack.c.b16 %v3788, %v3784
        %v3901 = vpack.c.b16 %v3789, %v3785
        %v3902 = vpack.c.b16 %v3794, %v3790
        %v3903 = vpack.c.b16 %v3795, %v3791
        %v3904 = vpack.c.b16 %v3796, %v3792
        %v3905 = vpack.c.b16 %v3797, %v3793
        %v3906 = vpack.c.b16 %v3802, %v3798
        %v3907 = vpack.c.b16 %v3803, %v3799
        %v3908 = vpack.c.b16 %v3804, %v3800
        %v3909 = vpack.c.b16 %v3805, %v3801
        %v3910 = vpack.c.b16 %v3810, %v3806
        %v3911 = vpack.c.b16 %v3811, %v3807
        %v3912 = vpack.c.b16 %v3812, %v3808
        %v3913 = vpack.c.b16 %v3813, %v3809
        %v3914 = vpack.c.b16 %v3818, %v3814
        %v3915 = vpack.c.b16 %v3819, %v3815
        %v3916 = vpack.c.b16 %v3820, %v3816
        %v3917 = vpack.c.b16 %v3821, %v3817
        %4014 = vmatprep.subr.bf16.mxu0 %v3823
        %4015 = vmatpush1.bf16.msra.mxu0 %v3822
        %4016 = vmatprep.subr.bf16.mxu0 %v3827
        %4017 = vmatpush1.bf16.msra.mxu0 %v3826
        %4018 = vmatprep.subr.bf16.mxu0 %v3831
        %4019 = vmatpush1.bf16.msra.mxu0 %v3830
        %4020 = vmatprep.subr.bf16.mxu0 %v3835
        %4021 = vmatpush1.bf16.msra.mxu0 %v3834
        %4022 = vmatprep.subr.bf16.mxu0 %v3839
        %4023 = vmatpush1.bf16.msra.mxu0 %v3838
        %4024 = vmatprep.subr.bf16.mxu0 %v3843
        %4025 = vmatpush1.bf16.msra.mxu0 %v3842
        %4026 = vmatprep.subr.bf16.mxu0 %v3847
        %4027 = vmatpush1.bf16.msra.mxu0 %v3846
        %4028 = vmatprep.subr.bf16.mxu0 %v3851
        %4029 = vmatpush1.bf16.msra.mxu0 %v3850
        %4030 = vmatprep.subr.bf16.mxu0 %v3855
        %4031 = vmatpush1.bf16.msra.mxu0 %v3854
        %4032 = vmatprep.subr.bf16.mxu0 %v3859
        %4033 = vmatpush1.bf16.msra.mxu0 %v3858
        %4034 = vmatprep.subr.bf16.mxu0 %v3863
        %4035 = vmatpush1.bf16.msra.mxu0 %v3862
        %4036 = vmatprep.subr.bf16.mxu0 %v3867
        %4037 = vmatpush1.bf16.msra.mxu0 %v3866
        %4038 = vmatprep.subr.bf16.mxu0 %v3871
        %4039 = vmatpush1.bf16.msra.mxu0 %v3870
        %4040 = vmatprep.subr.bf16.mxu0 %v3875
        %4041 = vmatpush1.bf16.msra.mxu0 %v3874
        %4042 = vmatprep.subr.bf16.mxu0 %v3879
        %4043 = vmatpush1.bf16.msra.mxu0 %v3878
        %4044 = vmatprep.subr.bf16.mxu0 %v3883
        %4045 = vmatpush1.bf16.msra.mxu0 %v3882
        %4046 = vmatprep.mubr.bf16.mxu0 %v3523
        %4047 = vmatmul.mubr.bf16.gmra.mrb[0].mxu0 %v3516
        %v4048 = vpop.f32.mrb[0].mxu0
        %v4049 = vadd.f32 0.0, %v4048
        %v4050 = vpop.f32.mrb[0].mxu0
        %v4051 = vadd.f32 0.0, %v4050
        %v4052 = vpop.f32.mrb[0].mxu0
        %v4053 = vpop.f32.mrb[0].mxu0
        %4054 = vdwg.mxu0
        %4055 = vmatprep.subr.bf16.mxu0 %v3887
        %4056 = vmatpush1.bf16.msra.mxu0 %v3886
        %4057 = vmatprep.subr.bf16.mxu0 %v3891
        %4058 = vmatpush1.bf16.msra.mxu0 %v3890
        %4059 = vmatprep.subr.bf16.mxu0 %v3895
        %4060 = vmatpush1.bf16.msra.mxu0 %v3894
        %4061 = vmatprep.subr.bf16.mxu0 %v3899
        %4062 = vmatpush1.bf16.msra.mxu0 %v3898
        %4063 = vmatprep.subr.bf16.mxu0 %v3903
        %4064 = vmatpush1.bf16.msra.mxu0 %v3902
        %4065 = vmatprep.subr.bf16.mxu0 %v3907
        %4066 = vmatpush1.bf16.msra.mxu0 %v3906
        %4067 = vmatprep.subr.bf16.mxu0 %v3911
        %4068 = vmatpush1.bf16.msra.mxu0 %v3910
        %4069 = vmatprep.subr.bf16.mxu0 %v3915
        %4070 = vmatpush1.bf16.msra.mxu0 %v3914
        %4071 = vmatprep.subr.bf16.mxu0 0
        %4072 = vmatpush1.bf16.msra.mxu0 0
        %4073 = vmatprep.subr.bf16.mxu0 0
        %4074 = vmatpush1.bf16.msra.mxu0 0
        %4075 = vmatprep.subr.bf16.mxu0 0
        %4076 = vmatpush1.bf16.msra.mxu0 0
        %4077 = vmatprep.subr.bf16.mxu0 0
        %4078 = vmatpush1.bf16.msra.mxu0 0
        %4079 = vmatprep.subr.bf16.mxu0 0
        %4080 = vmatpush1.bf16.msra.mxu0 0
        %4081 = vmatprep.subr.bf16.mxu0 0
        %4082 = vmatpush1.bf16.msra.mxu0 0
        %4083 = vmatprep.subr.bf16.mxu0 0
        %4084 = vmatpush1.bf16.msra.mxu0 0
        %4085 = vmatprep.subr.bf16.mxu0 0
        %4086 = vmatpush1.bf16.msra.mxu0 0
        %4087 = vmatprep.mubr.bf16.mxu0 0
        %4088 = vmatmul.mubr.bf16.gmra.mrb[0].mxu0 %v3530
        %v4089 = vpop.f32.mrb[0].mxu0
        %v4090 = vadd.f32 %v4049, %v4089
        %v4091 = vpop.f32.mrb[0].mxu0
        %v4092 = vadd.f32 %v4051, %v4091
        %v4093 = vpop.f32.mrb[0].mxu0
        %v4094 = vpop.f32.mrb[0].mxu0
        %4095 = vdwg.mxu0
        %4096 = vmatprep.subr.bf16.mxu0 %v3825
        %4097 = vmatpush1.bf16.msra.mxu0 %v3824
        %4098 = vmatprep.subr.bf16.mxu0 %v3829
        %4099 = vmatpush1.bf16.msra.mxu0 %v3828
        %4100 = vmatprep.subr.bf16.mxu0 %v3833
        %4101 = vmatpush1.bf16.msra.mxu0 %v3832
        %4102 = vmatprep.subr.bf16.mxu0 %v3837
        %4103 = vmatpush1.bf16.msra.mxu0 %v3836
        %4104 = vmatprep.subr.bf16.mxu0 %v3841
        %4105 = vmatpush1.bf16.msra.mxu0 %v3840
        %4106 = vmatprep.subr.bf16.mxu0 %v3845
        %4107 = vmatpush1.bf16.msra.mxu0 %v3844
        %4108 = vmatprep.subr.bf16.mxu0 %v3849
        %4109 = vmatpush1.bf16.msra.mxu0 %v3848
        %4110 = vmatprep.subr.bf16.mxu0 %v3853
        %4111 = vmatpush1.bf16.msra.mxu0 %v3852
        %4112 = vmatprep.subr.bf16.mxu0 %v3857
        %4113 = vmatpush1.bf16.msra.mxu0 %v3856
        %4114 = vmatprep.subr.bf16.mxu0 %v3861
        %4115 = vmatpush1.bf16.msra.mxu0 %v3860
        %4116 = vmatprep.subr.bf16.mxu0 %v3865
        %4117 = vmatpush1.bf16.msra.mxu0 %v3864
        %4118 = vmatprep.subr.bf16.mxu0 %v3869
        %4119 = vmatpush1.bf16.msra.mxu0 %v3868
        %4120 = vmatprep.subr.bf16.mxu0 %v3873
        %4121 = vmatpush1.bf16.msra.mxu0 %v3872
        %4122 = vmatprep.subr.bf16.mxu0 %v3877
        %4123 = vmatpush1.bf16.msra.mxu0 %v3876
        %4124 = vmatprep.subr.bf16.mxu0 %v3881
        %4125 = vmatpush1.bf16.msra.mxu0 %v3880
        %4126 = vmatprep.subr.bf16.mxu0 %v3885
        %4127 = vmatpush1.bf16.msra.mxu0 %v3884
        %4128 = vmatprep.mubr.bf16.mxu0 %v3523
        %4129 = vmatmul.mubr.bf16.gmra.mrb[0].mxu0 %v3516
        %v4130 = vpop.f32.mrb[0].mxu0
        %v4131 = vadd.f32 0.0, %v4130
        %v4132 = vpop.f32.mrb[0].mxu0
        %v4133 = vadd.f32 0.0, %v4132
        %v4134 = vpop.f32.mrb[0].mxu0
        %v4135 = vpop.f32.mrb[0].mxu0
        %4136 = vdwg.mxu0
        %4137 = vmatprep.subr.bf16.mxu0 %v3889
        %4138 = vmatpush1.bf16.msra.mxu0 %v3888
        %4139 = vmatprep.subr.bf16.mxu0 %v3893
        %4140 = vmatpush1.bf16.msra.mxu0 %v3892
        %4141 = vmatprep.subr.bf16.mxu0 %v3897
        %4142 = vmatpush1.bf16.msra.mxu0 %v3896
        %4143 = vmatprep.subr.bf16.mxu0 %v3901
        %4144 = vmatpush1.bf16.msra.mxu0 %v3900
        %4145 = vmatprep.subr.bf16.mxu0 %v3905
        %4146 = vmatpush1.bf16.msra.mxu0 %v3904
        %4147 = vmatprep.subr.bf16.mxu0 %v3909
        %4148 = vmatpush1.bf16.msra.mxu0 %v3908
        %4149 = vmatprep.subr.bf16.mxu0 %v3913
        %4150 = vmatpush1.bf16.msra.mxu0 %v3912
        %4151 = vmatprep.subr.bf16.mxu0 %v3917
        %4152 = vmatpush1.bf16.msra.mxu0 %v3916
        %4153 = vmatprep.subr.bf16.mxu0 0
        %4154 = vmatpush1.bf16.msra.mxu0 0
        %4155 = vmatprep.subr.bf16.mxu0 0
        %4156 = vmatpush1.bf16.msra.mxu0 0
        %4157 = vmatprep.subr.bf16.mxu0 0
        %4158 = vmatpush1.bf16.msra.mxu0 0
        %4159 = vmatprep.subr.bf16.mxu0 0
        %4160 = vmatpush1.bf16.msra.mxu0 0
        %4161 = vmatprep.subr.bf16.mxu0 0
        %4162 = vmatpush1.bf16.msra.mxu0 0
        %4163 = vmatprep.subr.bf16.mxu0 0
        %4164 = vmatpush1.bf16.msra.mxu0 0
        %4165 = vmatprep.subr.bf16.mxu0 0
        %4166 = vmatpush1.bf16.msra.mxu0 0
        %4167 = vmatprep.subr.bf16.mxu0 0
        %4168 = vmatpush1.bf16.msra.mxu0 0
        %4169 = vmatprep.mubr.bf16.mxu0 0
        %4170 = vmatmul.mubr.bf16.gmra.mrb[0].mxu0 %v3530
        %v4171 = vpop.f32.mrb[0].mxu0
        %v4172 = vadd.f32 %v4131, %v4171
        %v4173 = vpop.f32.mrb[0].mxu0
        %v4174 = vadd.f32 %v4133, %v4173
        %v4175 = vpop.f32.mrb[0].mxu0
        %v4176 = vpop.f32.mrb[0].mxu0
        %4177 = vdwg.mxu0
        %v4274 = vunpack.c.l.b16 %v3317
        %v4275 = vunpack.c.h.b16 %v3317
        %v4276 = vunpack.c.l.b16 %v3318
        %v4277 = vunpack.c.h.b16 %v3318
        %v4278 = vunpack.c.l.b16 %v3319
        %v4279 = vunpack.c.h.b16 %v3319
        %v4280 = vunpack.c.l.b16 %v3320
        %v4281 = vunpack.c.h.b16 %v3320
        %v4282 = vunpack.c.l.b16 %v3321
        %v4283 = vunpack.c.h.b16 %v3321
        %v4284 = vunpack.c.l.b16 %v3322
        %v4285 = vunpack.c.h.b16 %v3322
        %v4286 = vunpack.c.l.b16 %v3323
        %v4287 = vunpack.c.h.b16 %v3323
        %v4288 = vunpack.c.l.b16 %v3324
        %v4289 = vunpack.c.h.b16 %v3324
        %v4290 = vunpack.c.l.b16 %v3325
        %v4291 = vunpack.c.h.b16 %v3325
        %v4292 = vunpack.c.l.b16 %v3326
        %v4293 = vunpack.c.h.b16 %v3326
        %v4294 = vunpack.c.l.b16 %v3327
        %v4295 = vunpack.c.h.b16 %v3327
        %v4296 = vunpack.c.l.b16 %v3328
        %v4297 = vunpack.c.h.b16 %v3328
        %v4298 = vunpack.c.l.b16 %v3329
        %v4299 = vunpack.c.h.b16 %v3329
        %v4300 = vunpack.c.l.b16 %v3330
        %v4301 = vunpack.c.h.b16 %v3330
        %v4302 = vunpack.c.l.b16 %v3331
        %v4303 = vunpack.c.h.b16 %v3331
        %v4304 = vunpack.c.l.b16 %v3332
        %v4305 = vunpack.c.h.b16 %v3332
        %v4306 = vunpack.c.l.b16 %v3333
        %v4307 = vunpack.c.h.b16 %v3333
        %v4308 = vunpack.c.l.b16 %v3334
        %v4309 = vunpack.c.h.b16 %v3334
        %v4310 = vunpack.c.l.b16 %v3335
        %v4311 = vunpack.c.h.b16 %v3335
        %v4312 = vunpack.c.l.b16 %v3336
        %v4313 = vunpack.c.h.b16 %v3336
        %v4314 = vunpack.c.l.b16 %v3337
        %v4315 = vunpack.c.h.b16 %v3337
        %v4316 = vunpack.c.l.b16 %v3338
        %v4317 = vunpack.c.h.b16 %v3338
        %v4318 = vunpack.c.l.b16 %v3339
        %v4319 = vunpack.c.h.b16 %v3339
        %v4320 = vunpack.c.l.b16 %v3340
        %v4321 = vunpack.c.h.b16 %v3340
        %v4322 = vunpack.c.l.b16 %v3341
        %v4323 = vunpack.c.h.b16 %v3341
        %v4324 = vunpack.c.l.b16 %v3342
        %v4325 = vunpack.c.h.b16 %v3342
        %v4326 = vunpack.c.l.b16 %v3343
        %v4327 = vunpack.c.h.b16 %v3343
        %v4328 = vunpack.c.l.b16 %v3344
        %v4329 = vunpack.c.h.b16 %v3344
        %v4330 = vunpack.c.l.b16 %v3345
        %v4331 = vunpack.c.h.b16 %v3345
        %v4332 = vunpack.c.l.b16 %v3346
        %v4333 = vunpack.c.h.b16 %v3346
        %v4334 = vunpack.c.l.b16 %v3347
        %v4335 = vunpack.c.h.b16 %v3347
        %v4336 = vunpack.c.l.b16 %v3348
        %v4337 = vunpack.c.h.b16 %v3348
        %v4338 = vunpack.c.l.b16 %v3349
        %v4339 = vunpack.c.h.b16 %v3349
        %v4340 = vunpack.c.l.b16 %v3350
        %v4341 = vunpack.c.h.b16 %v3350
        %v4342 = vunpack.c.l.b16 %v3351
        %v4343 = vunpack.c.h.b16 %v3351
        %v4344 = vunpack.c.l.b16 %v3352
        %v4345 = vunpack.c.h.b16 %v3352
        %v4346 = vunpack.c.l.b16 %v3353
        %v4347 = vunpack.c.h.b16 %v3353
        %v4348 = vunpack.c.l.b16 %v3354
        %v4349 = vunpack.c.h.b16 %v3354
        %v4350 = vunpack.c.l.b16 %v3355
        %v4351 = vunpack.c.h.b16 %v3355
        %v4352 = vunpack.c.l.b16 %v3356
        %v4353 = vunpack.c.h.b16 %v3356
        %v4354 = vunpack.c.l.b16 %v3357
        %v4355 = vunpack.c.h.b16 %v3357
        %v4356 = vunpack.c.l.b16 %v3358
        %v4357 = vunpack.c.h.b16 %v3358
        %v4358 = vunpack.c.l.b16 %v3359
        %v4359 = vunpack.c.h.b16 %v3359
        %v4360 = vunpack.c.l.b16 %v3360
        %v4361 = vunpack.c.h.b16 %v3360
        %v4362 = vunpack.c.l.b16 %v3361
        %v4363 = vunpack.c.h.b16 %v3361
        %v4364 = vunpack.c.l.b16 %v3362
        %v4365 = vunpack.c.h.b16 %v3362
        %v4366 = vunpack.c.l.b16 %v3363
        %v4367 = vunpack.c.h.b16 %v3363
        %v4368 = vunpack.c.l.b16 %v3364
        %v4369 = vunpack.c.h.b16 %v3364
        %v4370 = vunpack.c.l.b16 %v3365
        %v4371 = vunpack.c.h.b16 %v3365
        %v4372 = vunpack.c.l.b16 %v3366
        %v4373 = vunpack.c.h.b16 %v3366
        %v4374 = vunpack.c.l.b16 %v3367
        %v4375 = vunpack.c.h.b16 %v3367
        %v4376 = vunpack.c.l.b16 %v3368
        %v4377 = vunpack.c.h.b16 %v3368
        %v4378 = vunpack.c.l.b16 %v3369
        %v4379 = vunpack.c.h.b16 %v3369
        %v4380 = vunpack.c.l.b16 %v3370
        %v4381 = vunpack.c.h.b16 %v3370
        %v4382 = vunpack.c.l.b16 %v3371
        %v4383 = vunpack.c.h.b16 %v3371
        %v4384 = vunpack.c.l.b16 %v3372
        %v4385 = vunpack.c.h.b16 %v3372
        %v4386 = vunpack.c.l.b16 %v3373
        %v4387 = vunpack.c.h.b16 %v3373
        %v4388 = vunpack.c.l.b16 %v3374
        %v4389 = vunpack.c.h.b16 %v3374
        %v4390 = vunpack.c.l.b16 %v3375
        %v4391 = vunpack.c.h.b16 %v3375
        %v4392 = vunpack.c.l.b16 %v3376
        %v4393 = vunpack.c.h.b16 %v3376
        %v4394 = vunpack.c.l.b16 %v3377
        %v4395 = vunpack.c.h.b16 %v3377
        %v4396 = vunpack.c.l.b16 %v3378
        %v4397 = vunpack.c.h.b16 %v3378
        %v4398 = vunpack.c.l.b16 %v3379
        %v4399 = vunpack.c.h.b16 %v3379
        %v4400 = vunpack.c.l.b16 %v3380
        %v4401 = vunpack.c.h.b16 %v3380
        %v4402 = vunpack.c.l.b16 %v3381
        %v4403 = vunpack.c.h.b16 %v3381
        %v4404 = vunpack.c.l.b16 %v3382
        %v4405 = vunpack.c.h.b16 %v3382
        %v4406 = vunpack.c.l.b16 %v3383
        %v4407 = vunpack.c.h.b16 %v3383
        %v4408 = vunpack.c.l.b16 %v3384
        %v4409 = vunpack.c.h.b16 %v3384
        %v4410 = vunpack.c.l.b16 %v3385
        %v4411 = vunpack.c.h.b16 %v3385
        %v4412 = vunpack.c.l.b16 %v3386
        %v4413 = vunpack.c.h.b16 %v3386
        %v4414 = vunpack.c.l.b16 %v3387
        %v4415 = vunpack.c.h.b16 %v3387
        %v4416 = vunpack.c.l.b16 %v3388
        %v4417 = vunpack.c.h.b16 %v3388
        %v4418 = vunpack.c.l.b16 %v3389
        %v4419 = vunpack.c.h.b16 %v3389
        %v4420 = vunpack.c.l.b16 %v3390
        %v4421 = vunpack.c.h.b16 %v3390
        %v4422 = vunpack.c.l.b16 %v3391
        %v4423 = vunpack.c.h.b16 %v3391
        %v4424 = vunpack.c.l.b16 %v3392
        %v4425 = vunpack.c.h.b16 %v3392
        %v4426 = vunpack.c.l.b16 %v3393
        %v4427 = vunpack.c.h.b16 %v3393
        %v4428 = vunpack.c.l.b16 %v3394
        %v4429 = vunpack.c.h.b16 %v3394
        %v4430 = vunpack.c.l.b16 %v3395
        %v4431 = vunpack.c.h.b16 %v3395
        %v4432 = vunpack.c.l.b16 %v3396
        %v4433 = vunpack.c.h.b16 %v3396
        %v4434 = vunpack.c.l.b16 %v3397
        %v4435 = vunpack.c.h.b16 %v3397
        %v4436 = vunpack.c.l.b16 %v3398
        %v4437 = vunpack.c.h.b16 %v3398
        %v4438 = vunpack.c.l.b16 %v3399
        %v4439 = vunpack.c.h.b16 %v3399
        %v4440 = vunpack.c.l.b16 %v3400
        %v4441 = vunpack.c.h.b16 %v3400
        %v4442 = vunpack.c.l.b16 %v3401
        %v4443 = vunpack.c.h.b16 %v3401
        %v4444 = vunpack.c.l.b16 %v3402
        %v4445 = vunpack.c.h.b16 %v3402
        %v4446 = vunpack.c.l.b16 %v3403
        %v4447 = vunpack.c.h.b16 %v3403
        %v4448 = vunpack.c.l.b16 %v3404
        %v4449 = vunpack.c.h.b16 %v3404
        %v4450 = vunpack.c.l.b16 %v3405
        %v4451 = vunpack.c.h.b16 %v3405
        %v4452 = vunpack.c.l.b16 %v3406
        %v4453 = vunpack.c.h.b16 %v3406
        %v4454 = vunpack.c.l.b16 %v3407
        %v4455 = vunpack.c.h.b16 %v3407
        %v4456 = vunpack.c.l.b16 %v3408
        %v4457 = vunpack.c.h.b16 %v3408
        %v4458 = vunpack.c.l.b16 %v3409
        %v4459 = vunpack.c.h.b16 %v3409
        %v4460 = vunpack.c.l.b16 %v3410
        %v4461 = vunpack.c.h.b16 %v3410
        %v4462 = vunpack.c.l.b16 %v3411
        %v4463 = vunpack.c.h.b16 %v3411
        %v4464 = vunpack.c.l.b16 %v3412
        %v4465 = vunpack.c.h.b16 %v3412
        %v4466 = vpack.c.b16 %v4278, %v4274
        %v4467 = vpack.c.b16 %v4279, %v4275
        %v4468 = vpack.c.b16 %v4280, %v4276
        %v4469 = vpack.c.b16 %v4281, %v4277
        %v4470 = vpack.c.b16 %v4286, %v4282
        %v4471 = vpack.c.b16 %v4287, %v4283
        %v4472 = vpack.c.b16 %v4288, %v4284
        %v4473 = vpack.c.b16 %v4289, %v4285
        %v4474 = vpack.c.b16 %v4294, %v4290
        %v4475 = vpack.c.b16 %v4295, %v4291
        %v4476 = vpack.c.b16 %v4296, %v4292
        %v4477 = vpack.c.b16 %v4297, %v4293
        %v4478 = vpack.c.b16 %v4302, %v4298
        %v4479 = vpack.c.b16 %v4303, %v4299
        %v4480 = vpack.c.b16 %v4304, %v4300
        %v4481 = vpack.c.b16 %v4305, %v4301
        %v4482 = vpack.c.b16 %v4310, %v4306
        %v4483 = vpack.c.b16 %v4311, %v4307
        %v4484 = vpack.c.b16 %v4312, %v4308
        %v4485 = vpack.c.b16 %v4313, %v4309
        %v4486 = vpack.c.b16 %v4318, %v4314
        %v4487 = vpack.c.b16 %v4319, %v4315
        %v4488 = vpack.c.b16 %v4320, %v4316
        %v4489 = vpack.c.b16 %v4321, %v4317
        %v4490 = vpack.c.b16 %v4326, %v4322
        %v4491 = vpack.c.b16 %v4327, %v4323
        %v4492 = vpack.c.b16 %v4328, %v4324
        %v4493 = vpack.c.b16 %v4329, %v4325
        %v4494 = vpack.c.b16 %v4334, %v4330
        %v4495 = vpack.c.b16 %v4335, %v4331
        %v4496 = vpack.c.b16 %v4336, %v4332
        %v4497 = vpack.c.b16 %v4337, %v4333
        %v4498 = vpack.c.b16 %v4342, %v4338
        %v4499 = vpack.c.b16 %v4343, %v4339
        %v4500 = vpack.c.b16 %v4344, %v4340
        %v4501 = vpack.c.b16 %v4345, %v4341
        %v4502 = vpack.c.b16 %v4350, %v4346
        %v4503 = vpack.c.b16 %v4351, %v4347
        %v4504 = vpack.c.b16 %v4352, %v4348
        %v4505 = vpack.c.b16 %v4353, %v4349
        %v4506 = vpack.c.b16 %v4358, %v4354
        %v4507 = vpack.c.b16 %v4359, %v4355
        %v4508 = vpack.c.b16 %v4360, %v4356
        %v4509 = vpack.c.b16 %v4361, %v4357
        %v4510 = vpack.c.b16 %v4366, %v4362
        %v4511 = vpack.c.b16 %v4367, %v4363
        %v4512 = vpack.c.b16 %v4368, %v4364
        %v4513 = vpack.c.b16 %v4369, %v4365
        %v4514 = vpack.c.b16 %v4374, %v4370
        %v4515 = vpack.c.b16 %v4375, %v4371
        %v4516 = vpack.c.b16 %v4376, %v4372
        %v4517 = vpack.c.b16 %v4377, %v4373
        %v4518 = vpack.c.b16 %v4382, %v4378
        %v4519 = vpack.c.b16 %v4383, %v4379
        %v4520 = vpack.c.b16 %v4384, %v4380
        %v4521 = vpack.c.b16 %v4385, %v4381
        %v4522 = vpack.c.b16 %v4390, %v4386
        %v4523 = vpack.c.b16 %v4391, %v4387
        %v4524 = vpack.c.b16 %v4392, %v4388
        %v4525 = vpack.c.b16 %v4393, %v4389
        %v4526 = vpack.c.b16 %v4398, %v4394
        %v4527 = vpack.c.b16 %v4399, %v4395
        %v4528 = vpack.c.b16 %v4400, %v4396
        %v4529 = vpack.c.b16 %v4401, %v4397
        %v4530 = vpack.c.b16 %v4406, %v4402
        %v4531 = vpack.c.b16 %v4407, %v4403
        %v4532 = vpack.c.b16 %v4408, %v4404
        %v4533 = vpack.c.b16 %v4409, %v4405
        %v4534 = vpack.c.b16 %v4414, %v4410
        %v4535 = vpack.c.b16 %v4415, %v4411
        %v4536 = vpack.c.b16 %v4416, %v4412
        %v4537 = vpack.c.b16 %v4417, %v4413
        %v4538 = vpack.c.b16 %v4422, %v4418
        %v4539 = vpack.c.b16 %v4423, %v4419
        %v4540 = vpack.c.b16 %v4424, %v4420
        %v4541 = vpack.c.b16 %v4425, %v4421
        %v4542 = vpack.c.b16 %v4430, %v4426
        %v4543 = vpack.c.b16 %v4431, %v4427
        %v4544 = vpack.c.b16 %v4432, %v4428
        %v4545 = vpack.c.b16 %v4433, %v4429
        %v4546 = vpack.c.b16 %v4438, %v4434
        %v4547 = vpack.c.b16 %v4439, %v4435
        %v4548 = vpack.c.b16 %v4440, %v4436
        %v4549 = vpack.c.b16 %v4441, %v4437
        %v4550 = vpack.c.b16 %v4446, %v4442
        %v4551 = vpack.c.b16 %v4447, %v4443
        %v4552 = vpack.c.b16 %v4448, %v4444
        %v4553 = vpack.c.b16 %v4449, %v4445
        %v4554 = vpack.c.b16 %v4454, %v4450
        %v4555 = vpack.c.b16 %v4455, %v4451
        %v4556 = vpack.c.b16 %v4456, %v4452
        %v4557 = vpack.c.b16 %v4457, %v4453
        %v4558 = vpack.c.b16 %v4462, %v4458
        %v4559 = vpack.c.b16 %v4463, %v4459
        %v4560 = vpack.c.b16 %v4464, %v4460
        %v4561 = vpack.c.b16 %v4465, %v4461
        %4658 = vmatprep.subr.bf16.mxu0 %v4467
        %4659 = vmatpush1.bf16.msra.mxu0 %v4466
        %4660 = vmatprep.subr.bf16.mxu0 %v4471
        %4661 = vmatpush1.bf16.msra.mxu0 %v4470
        %4662 = vmatprep.subr.bf16.mxu0 %v4475
        %4663 = vmatpush1.bf16.msra.mxu0 %v4474
        %4664 = vmatprep.subr.bf16.mxu0 %v4479
        %4665 = vmatpush1.bf16.msra.mxu0 %v4478
        %4666 = vmatprep.subr.bf16.mxu0 %v4483
        %4667 = vmatpush1.bf16.msra.mxu0 %v4482
        %4668 = vmatprep.subr.bf16.mxu0 %v4487
        %4669 = vmatpush1.bf16.msra.mxu0 %v4486
        %4670 = vmatprep.subr.bf16.mxu0 %v4491
        %4671 = vmatpush1.bf16.msra.mxu0 %v4490
        %4672 = vmatprep.subr.bf16.mxu0 %v4495
        %4673 = vmatpush1.bf16.msra.mxu0 %v4494
        %4674 = vmatprep.subr.bf16.mxu0 %v4499
        %4675 = vmatpush1.bf16.msra.mxu0 %v4498
        %4676 = vmatprep.subr.bf16.mxu0 %v4503
        %4677 = vmatpush1.bf16.msra.mxu0 %v4502
        %4678 = vmatprep.subr.bf16.mxu0 %v4507
        %4679 = vmatpush1.bf16.msra.mxu0 %v4506
        %4680 = vmatprep.subr.bf16.mxu0 %v4511
        %4681 = vmatpush1.bf16.msra.mxu0 %v4510
        %4682 = vmatprep.subr.bf16.mxu0 %v4515
        %4683 = vmatpush1.bf16.msra.mxu0 %v4514
        %4684 = vmatprep.subr.bf16.mxu0 %v4519
        %4685 = vmatpush1.bf16.msra.mxu0 %v4518
        %4686 = vmatprep.subr.bf16.mxu0 %v4523
        %4687 = vmatpush1.bf16.msra.mxu0 %v4522
        %4688 = vmatprep.subr.bf16.mxu0 %v4527
        %4689 = vmatpush1.bf16.msra.mxu0 %v4526
        %4690 = vmatprep.mubr.bf16.mxu0 %v3315
        %4691 = vmatmul.mubr.bf16.gmra.mrb[0].mxu0 %v3314
        %v4692 = vpop.f32.mrb[0].mxu0
        %v4693 = vadd.f32 %v4090, %v4692
        %v4694 = vpop.f32.mrb[0].mxu0
        %v4695 = vadd.f32 %v4092, %v4694
        %v4696 = vpop.f32.mrb[0].mxu0
        %v4697 = vpop.f32.mrb[0].mxu0
        %4698 = vdwg.mxu0
        %4699 = vmatprep.subr.bf16.mxu0 %v4531
        %4700 = vmatpush1.bf16.msra.mxu0 %v4530
        %4701 = vmatprep.subr.bf16.mxu0 %v4535
        %4702 = vmatpush1.bf16.msra.mxu0 %v4534
        %4703 = vmatprep.subr.bf16.mxu0 %v4539
        %4704 = vmatpush1.bf16.msra.mxu0 %v4538
        %4705 = vmatprep.subr.bf16.mxu0 %v4543
        %4706 = vmatpush1.bf16.msra.mxu0 %v4542
        %4707 = vmatprep.subr.bf16.mxu0 %v4547
        %4708 = vmatpush1.bf16.msra.mxu0 %v4546
        %4709 = vmatprep.subr.bf16.mxu0 %v4551
        %4710 = vmatpush1.bf16.msra.mxu0 %v4550
        %4711 = vmatprep.subr.bf16.mxu0 %v4555
        %4712 = vmatpush1.bf16.msra.mxu0 %v4554
        %4713 = vmatprep.subr.bf16.mxu0 %v4559
        %4714 = vmatpush1.bf16.msra.mxu0 %v4558
        %4715 = vmatprep.subr.bf16.mxu0 0
        %4716 = vmatpush1.bf16.msra.mxu0 0
        %4717 = vmatprep.subr.bf16.mxu0 0
        %4718 = vmatpush1.bf16.msra.mxu0 0
        %4719 = vmatprep.subr.bf16.mxu0 0
        %4720 = vmatpush1.bf16.msra.mxu0 0
        %4721 = vmatprep.subr.bf16.mxu0 0
        %4722 = vmatpush1.bf16.msra.mxu0 0
        %4723 = vmatprep.subr.bf16.mxu0 0
        %4724 = vmatpush1.bf16.msra.mxu0 0
        %4725 = vmatprep.subr.bf16.mxu0 0
        %4726 = vmatpush1.bf16.msra.mxu0 0
        %4727 = vmatprep.subr.bf16.mxu0 0
        %4728 = vmatpush1.bf16.msra.mxu0 0
        %4729 = vmatprep.subr.bf16.mxu0 0
        %4730 = vmatpush1.bf16.msra.mxu0 0
        %4731 = vmatprep.mubr.bf16.mxu0 0
        %4732 = vmatmul.mubr.bf16.gmra.mrb[0].mxu0 %v3316
        %v4733 = vpop.f32.mrb[0].mxu0
        %v4734 = vadd.f32 %v4693, %v4733
        %v4735 = vpop.f32.mrb[0].mxu0
        %v4736 = vadd.f32 %v4695, %v4735
        %v4737 = vpop.f32.mrb[0].mxu0
        %v4738 = vpop.f32.mrb[0].mxu0
        %4739 = vdwg.mxu0
        %4740 = vmatprep.subr.bf16.mxu0 %v4469
        %4741 = vmatpush1.bf16.msra.mxu0 %v4468
        %4742 = vmatprep.subr.bf16.mxu0 %v4473
        %4743 = vmatpush1.bf16.msra.mxu0 %v4472
        %4744 = vmatprep.subr.bf16.mxu0 %v4477
        %4745 = vmatpush1.bf16.msra.mxu0 %v4476
        %4746 = vmatprep.subr.bf16.mxu0 %v4481
        %4747 = vmatpush1.bf16.msra.mxu0 %v4480
        %4748 = vmatprep.subr.bf16.mxu0 %v4485
        %4749 = vmatpush1.bf16.msra.mxu0 %v4484
        %4750 = vmatprep.subr.bf16.mxu0 %v4489
        %4751 = vmatpush1.bf16.msra.mxu0 %v4488
        %4752 = vmatprep.subr.bf16.mxu0 %v4493
        %4753 = vmatpush1.bf16.msra.mxu0 %v4492
        %4754 = vmatprep.subr.bf16.mxu0 %v4497
        %4755 = vmatpush1.bf16.msra.mxu0 %v4496
        %4756 = vmatprep.subr.bf16.mxu0 %v4501
        %4757 = vmatpush1.bf16.msra.mxu0 %v4500
        %4758 = vmatprep.subr.bf16.mxu0 %v4505
        %4759 = vmatpush1.bf16.msra.mxu0 %v4504
        %4760 = vmatprep.subr.bf16.mxu0 %v4509
        %4761 = vmatpush1.bf16.msra.mxu0 %v4508
        %4762 = vmatprep.subr.bf16.mxu0 %v4513
        %4763 = vmatpush1.bf16.msra.mxu0 %v4512
        %4764 = vmatprep.subr.bf16.mxu0 %v4517
        %4765 = vmatpush1.bf16.msra.mxu0 %v4516
        %4766 = vmatprep.subr.bf16.mxu0 %v4521
        %4767 = vmatpush1.bf16.msra.mxu0 %v4520
        %4768 = vmatprep.subr.bf16.mxu0 %v4525
        %4769 = vmatpush1.bf16.msra.mxu0 %v4524
        %4770 = vmatprep.subr.bf16.mxu0 %v4529
        %4771 = vmatpush1.bf16.msra.mxu0 %v4528
        %4772 = vmatprep.mubr.bf16.mxu0 %v3315
        %4773 = vmatmul.mubr.bf16.gmra.mrb[0].mxu0 %v3314
        %v4774 = vpop.f32.mrb[0].mxu0
        %v4775 = vadd.f32 %v4172, %v4774
        %v4776 = vpop.f32.mrb[0].mxu0
        %v4777 = vadd.f32 %v4174, %v4776
        %v4778 = vpop.f32.mrb[0].mxu0
        %v4779 = vpop.f32.mrb[0].mxu0
        %4780 = vdwg.mxu0
        %4781 = vmatprep.subr.bf16.mxu0 %v4533
        %4782 = vmatpush1.bf16.msra.mxu0 %v4532
        %4783 = vmatprep.subr.bf16.mxu0 %v4537
        %4784 = vmatpush1.bf16.msra.mxu0 %v4536
        %4785 = vmatprep.subr.bf16.mxu0 %v4541
        %4786 = vmatpush1.bf16.msra.mxu0 %v4540
        %4787 = vmatprep.subr.bf16.mxu0 %v4545
        %4788 = vmatpush1.bf16.msra.mxu0 %v4544
        %4789 = vmatprep.subr.bf16.mxu0 %v4549
        %4790 = vmatpush1.bf16.msra.mxu0 %v4548
        %4791 = vmatprep.subr.bf16.mxu0 %v4553
        %4792 = vmatpush1.bf16.msra.mxu0 %v4552
        %4793 = vmatprep.subr.bf16.mxu0 %v4557
        %4794 = vmatpush1.bf16.msra.mxu0 %v4556
        %4795 = vmatprep.subr.bf16.mxu0 %v4561
        %4796 = vmatpush1.bf16.msra.mxu0 %v4560
        %4797 = vmatprep.subr.bf16.mxu0 0
        %4798 = vmatpush1.bf16.msra.mxu0 0
        %4799 = vmatprep.subr.bf16.mxu0 0
        %4800 = vmatpush1.bf16.msra.mxu0 0
        %4801 = vmatprep.subr.bf16.mxu0 0
        %4802 = vmatpush1.bf16.msra.mxu0 0
        %4803 = vmatprep.subr.bf16.mxu0 0
        %4804 = vmatpush1.bf16.msra.mxu0 0
        %4805 = vmatprep.subr.bf16.mxu0 0
        %4806 = vmatpush1.bf16.msra.mxu0 0
        %4807 = vmatprep.subr.bf16.mxu0 0
        %4808 = vmatpush1.bf16.msra.mxu0 0
        %4809 = vmatprep.subr.bf16.mxu0 0
        %4810 = vmatpush1.bf16.msra.mxu0 0
        %4811 = vmatprep.subr.bf16.mxu0 0
        %4812 = vmatpush1.bf16.msra.mxu0 0
        %4813 = vmatprep.mubr.bf16.mxu0 0
        %4814 = vmatmul.mubr.bf16.gmra.mrb[0].mxu0 %v3316
        %v4815 = vpop.f32.mrb[0].mxu0
        %v4816 = vadd.f32 %v4775, %v4815
        %v4817 = vpop.f32.mrb[0].mxu0
        %v4818 = vadd.f32 %v4777, %v4817
        %v4819 = vpop.f32.mrb[0].mxu0
        %v4820 = vpop.f32.mrb[0].mxu0
        %4821 = vdwg.mxu0
        %s4822 = scalar_lea.vmem [#allocation9], 1536
        %v4823 = vld [vmem:[%s4822] sm:$0xff]
        %v4824 = vld [vmem:[%s4822 + $0x8] sm:$0xff]
        %v4825 = vld [vmem:[%s4822 + $0x10] sm:$0xff]
        %v4826 = vld [vmem:[%s4822 + $0x18] sm:$0xff]
        %v4827 = vld [vmem:[%s4822 + $0x20] sm:$0xff]
        %v4828 = vld [vmem:[%s4822 + $0x28] sm:$0xff]
        %v4829 = vld [vmem:[%s4822 + $0x30] sm:$0xff]
        %v4830 = vld [vmem:[%s4822 + $0x38] sm:$0xff]
        %v4831 = vld [vmem:[%s4822 + $0x40] sm:$0xff]
        %v4832 = vld [vmem:[%s4822 + $0x48] sm:$0xff]
        %v4833 = vld [vmem:[%s4822 + $0x50] sm:$0xff]
        %v4834 = vld [vmem:[%s4822 + $0x58] sm:$0xff]
        %v4835 = vld [vmem:[%s4822 + $0x60] sm:$0xff]
        %v4836 = vld [vmem:[%s4822 + $0x68] sm:$0xff]
        %v4837 = vld [vmem:[%s4822 + $0x70] sm:$0xff]
        %v4838 = vld [vmem:[%s4822 + $0x78] sm:$0xff]
        %v4839 = vld [vmem:[%s4822 + $0x80] sm:$0xff]
        %v4840 = vld [vmem:[%s4822 + $0x88] sm:$0xff]
        %v4841 = vld [vmem:[%s4822 + $0x90] sm:$0xff]
        %v4842 = vld [vmem:[%s4822 + $0x98] sm:$0xff]
        %v4843 = vld [vmem:[%s4822 + $0xa0] sm:$0xff]
        %v4844 = vld [vmem:[%s4822 + $0xa8] sm:$0xff]
        %v4845 = vld [vmem:[%s4822 + $0xb0] sm:$0xff]
        %v4846 = vld [vmem:[%s4822 + $0xb8] sm:$0xff]
        %v4847 = vld [vmem:[%s4822 + $0xc0] sm:$0xff]
        %v4848 = vld [vmem:[%s4822 + $0xc8] sm:$0xff]
        %v4849 = vld [vmem:[%s4822 + $0xd0] sm:$0xff]
        %v4850 = vld [vmem:[%s4822 + $0xd8] sm:$0xff]
        %v4851 = vld [vmem:[%s4822 + $0xe0] sm:$0xff]
        %v4852 = vld [vmem:[%s4822 + $0xe8] sm:$0xff]
        %v4853 = vld [vmem:[%s4822 + $0xf0] sm:$0xff]
        %v4854 = vld [vmem:[%s4822 + $0xf8] sm:$0xff]
        %v4855 = vld [vmem:[%s4822 + $0x100] sm:$0xff]
        %v4856 = vld [vmem:[%s4822 + $0x108] sm:$0xff]
        %v4857 = vld [vmem:[%s4822 + $0x110] sm:$0xff]
        %v4858 = vld [vmem:[%s4822 + $0x118] sm:$0xff]
        %v4859 = vld [vmem:[%s4822 + $0x120] sm:$0xff]
        %v4860 = vld [vmem:[%s4822 + $0x128] sm:$0xff]
        %v4861 = vld [vmem:[%s4822 + $0x130] sm:$0xff]
        %v4862 = vld [vmem:[%s4822 + $0x138] sm:$0xff]
        %v4863 = vld [vmem:[%s4822 + $0x140] sm:$0xff]
        %v4864 = vld [vmem:[%s4822 + $0x148] sm:$0xff]
        %v4865 = vld [vmem:[%s4822 + $0x150] sm:$0xff]
        %v4866 = vld [vmem:[%s4822 + $0x158] sm:$0xff]
        %v4867 = vld [vmem:[%s4822 + $0x160] sm:$0xff]
        %v4868 = vld [vmem:[%s4822 + $0x168] sm:$0xff]
        %v4869 = vld [vmem:[%s4822 + $0x170] sm:$0xff]
        %v4870 = vld [vmem:[%s4822 + $0x178] sm:$0xff]
        %v4871 = vld [vmem:[%s4822 + $0x180] sm:$0xff]
        %v4872 = vld [vmem:[%s4822 + $0x188] sm:$0xff]
        %v4873 = vld [vmem:[%s4822 + $0x190] sm:$0xff]
        %v4874 = vld [vmem:[%s4822 + $0x198] sm:$0xff]
        %v4875 = vld [vmem:[%s4822 + $0x1a0] sm:$0xff]
        %v4876 = vld [vmem:[%s4822 + $0x1a8] sm:$0xff]
        %v4877 = vld [vmem:[%s4822 + $0x1b0] sm:$0xff]
        %v4878 = vld [vmem:[%s4822 + $0x1b8] sm:$0xff]
        %v4879 = vld [vmem:[%s4822 + $0x1c0] sm:$0xff]
        %v4880 = vld [vmem:[%s4822 + $0x1c8] sm:$0xff]
        %v4881 = vld [vmem:[%s4822 + $0x1d0] sm:$0xff]
        %v4882 = vld [vmem:[%s4822 + $0x1d8] sm:$0xff]
        %v4883 = vld [vmem:[%s4822 + $0x1e0] sm:$0xff]
        %v4884 = vld [vmem:[%s4822 + $0x1e8] sm:$0xff]
        %v4885 = vld [vmem:[%s4822 + $0x1f0] sm:$0xff]
        %v4886 = vld [vmem:[%s4822 + $0x1f8] sm:$0xff]
        %v4887 = vld [vmem:[%s4822 + $0x200] sm:$0xff]
        %v4888 = vld [vmem:[%s4822 + $0x208] sm:$0xff]
        %v4889 = vld [vmem:[%s4822 + $0x210] sm:$0xff]
        %v4890 = vld [vmem:[%s4822 + $0x218] sm:$0xff]
        %v4891 = vld [vmem:[%s4822 + $0x220] sm:$0xff]
        %v4892 = vld [vmem:[%s4822 + $0x228] sm:$0xff]
        %v4893 = vld [vmem:[%s4822 + $0x230] sm:$0xff]
        %v4894 = vld [vmem:[%s4822 + $0x238] sm:$0xff]
        %v4895 = vld [vmem:[%s4822 + $0x240] sm:$0xff]
        %v4896 = vld [vmem:[%s4822 + $0x248] sm:$0xff]
        %v4897 = vld [vmem:[%s4822 + $0x250] sm:$0xff]
        %v4898 = vld [vmem:[%s4822 + $0x258] sm:$0xff]
        %v4899 = vld [vmem:[%s4822 + $0x260] sm:$0xff]
        %v4900 = vld [vmem:[%s4822 + $0x268] sm:$0xff]
        %v4901 = vld [vmem:[%s4822 + $0x270] sm:$0xff]
        %v4902 = vld [vmem:[%s4822 + $0x278] sm:$0xff]
        %v4903 = vld [vmem:[%s4822 + $0x280] sm:$0xff]
        %v4904 = vld [vmem:[%s4822 + $0x288] sm:$0xff]
        %v4905 = vld [vmem:[%s4822 + $0x290] sm:$0xff]
        %v4906 = vld [vmem:[%s4822 + $0x298] sm:$0xff]
        %v4907 = vld [vmem:[%s4822 + $0x2a0] sm:$0xff]
        %v4908 = vld [vmem:[%s4822 + $0x2a8] sm:$0xff]
        %v4909 = vld [vmem:[%s4822 + $0x2b0] sm:$0xff]
        %v4910 = vld [vmem:[%s4822 + $0x2b8] sm:$0xff]
        %v4911 = vld [vmem:[%s4822 + $0x2c0] sm:$0xff]
        %v4912 = vld [vmem:[%s4822 + $0x2c8] sm:$0xff]
        %v4913 = vld [vmem:[%s4822 + $0x2d0] sm:$0xff]
        %v4914 = vld [vmem:[%s4822 + $0x2d8] sm:$0xff]
        %v4915 = vld [vmem:[%s4822 + $0x2e0] sm:$0xff]
        %v4916 = vld [vmem:[%s4822 + $0x2e8] sm:$0xff]
        %v4917 = vld [vmem:[%s4822 + $0x2f0] sm:$0xff]
        %v4918 = vld [vmem:[%s4822 + $0x2f8] sm:$0xff]
        %v4922 = vrot.slane %v3314, 1
        %v4923 = vrot.slane %v3315, 1
        %v4924 = vrot.slane %v3316, 1
        %v5024 = vunpack.c.l.b16 %v4823
        %v5025 = vunpack.c.h.b16 %v4823
        %v5026 = vunpack.c.l.b16 %v4824
        %v5027 = vunpack.c.h.b16 %v4824
        %v5028 = vunpack.c.l.b16 %v4825
        %v5029 = vunpack.c.h.b16 %v4825
        %v5030 = vunpack.c.l.b16 %v4826
        %v5031 = vunpack.c.h.b16 %v4826
        %v5032 = vunpack.c.l.b16 %v4827
        %v5033 = vunpack.c.h.b16 %v4827
        %v5034 = vunpack.c.l.b16 %v4828
        %v5035 = vunpack.c.h.b16 %v4828
        %v5036 = vunpack.c.l.b16 %v4829
        %v5037 = vunpack.c.h.b16 %v4829
        %v5038 = vunpack.c.l.b16 %v4830
        %v5039 = vunpack.c.h.b16 %v4830
        %v5040 = vunpack.c.l.b16 %v4831
        %v5041 = vunpack.c.h.b16 %v4831
        %v5042 = vunpack.c.l.b16 %v4832
        %v5043 = vunpack.c.h.b16 %v4832
        %v5044 = vunpack.c.l.b16 %v4833
        %v5045 = vunpack.c.h.b16 %v4833
        %v5046 = vunpack.c.l.b16 %v4834
        %v5047 = vunpack.c.h.b16 %v4834
        %v5048 = vunpack.c.l.b16 %v4835
        %v5049 = vunpack.c.h.b16 %v4835
        %v5050 = vunpack.c.l.b16 %v4836
        %v5051 = vunpack.c.h.b16 %v4836
        %v5052 = vunpack.c.l.b16 %v4837
        %v5053 = vunpack.c.h.b16 %v4837
        %v5054 = vunpack.c.l.b16 %v4838
        %v5055 = vunpack.c.h.b16 %v4838
        %v5056 = vunpack.c.l.b16 %v4839
        %v5057 = vunpack.c.h.b16 %v4839
        %v5058 = vunpack.c.l.b16 %v4840
        %v5059 = vunpack.c.h.b16 %v4840
        %v5060 = vunpack.c.l.b16 %v4841
        %v5061 = vunpack.c.h.b16 %v4841
        %v5062 = vunpack.c.l.b16 %v4842
        %v5063 = vunpack.c.h.b16 %v4842
        %v5064 = vunpack.c.l.b16 %v4843
        %v5065 = vunpack.c.h.b16 %v4843
        %v5066 = vunpack.c.l.b16 %v4844
        %v5067 = vunpack.c.h.b16 %v4844
        %v5068 = vunpack.c.l.b16 %v4845
        %v5069 = vunpack.c.h.b16 %v4845
        %v5070 = vunpack.c.l.b16 %v4846
        %v5071 = vunpack.c.h.b16 %v4846
        %v5072 = vunpack.c.l.b16 %v4847
        %v5073 = vunpack.c.h.b16 %v4847
        %v5074 = vunpack.c.l.b16 %v4848
        %v5075 = vunpack.c.h.b16 %v4848
        %v5076 = vunpack.c.l.b16 %v4849
        %v5077 = vunpack.c.h.b16 %v4849
        %v5078 = vunpack.c.l.b16 %v4850
        %v5079 = vunpack.c.h.b16 %v4850
        %v5080 = vunpack.c.l.b16 %v4851
        %v5081 = vunpack.c.h.b16 %v4851
        %v5082 = vunpack.c.l.b16 %v4852
        %v5083 = vunpack.c.h.b16 %v4852
        %v5084 = vunpack.c.l.b16 %v4853
        %v5085 = vunpack.c.h.b16 %v4853
        %v5086 = vunpack.c.l.b16 %v4854
        %v5087 = vunpack.c.h.b16 %v4854
        %v5088 = vunpack.c.l.b16 %v4855
        %v5089 = vunpack.c.h.b16 %v4855
        %v5090 = vunpack.c.l.b16 %v4856
        %v5091 = vunpack.c.h.b16 %v4856
        %v5092 = vunpack.c.l.b16 %v4857
        %v5093 = vunpack.c.h.b16 %v4857
        %v5094 = vunpack.c.l.b16 %v4858
        %v5095 = vunpack.c.h.b16 %v4858
        %v5096 = vunpack.c.l.b16 %v4859
        %v5097 = vunpack.c.h.b16 %v4859
        %v5098 = vunpack.c.l.b16 %v4860
        %v5099 = vunpack.c.h.b16 %v4860
        %v5100 = vunpack.c.l.b16 %v4861
        %v5101 = vunpack.c.h.b16 %v4861
        %v5102 = vunpack.c.l.b16 %v4862
        %v5103 = vunpack.c.h.b16 %v4862
        %v5104 = vunpack.c.l.b16 %v4863
        %v5105 = vunpack.c.h.b16 %v4863
        %v5106 = vunpack.c.l.b16 %v4864
        %v5107 = vunpack.c.h.b16 %v4864
        %v5108 = vunpack.c.l.b16 %v4865
        %v5109 = vunpack.c.h.b16 %v4865
        %v5110 = vunpack.c.l.b16 %v4866
        %v5111 = vunpack.c.h.b16 %v4866
        %v5112 = vunpack.c.l.b16 %v4867
        %v5113 = vunpack.c.h.b16 %v4867
        %v5114 = vunpack.c.l.b16 %v4868
        %v5115 = vunpack.c.h.b16 %v4868
        %v5116 = vunpack.c.l.b16 %v4869
        %v5117 = vunpack.c.h.b16 %v4869
        %v5118 = vunpack.c.l.b16 %v4870
        %v5119 = vunpack.c.h.b16 %v4870
        %v5120 = vunpack.c.l.b16 %v4871
        %v5121 = vunpack.c.h.b16 %v4871
        %v5122 = vunpack.c.l.b16 %v4872
        %v5123 = vunpack.c.h.b16 %v4872
        %v5124 = vunpack.c.l.b16 %v4873
        %v5125 = vunpack.c.h.b16 %v4873
        %v5126 = vunpack.c.l.b16 %v4874
        %v5127 = vunpack.c.h.b16 %v4874
        %v5128 = vunpack.c.l.b16 %v4875
        %v5129 = vunpack.c.h.b16 %v4875
        %v5130 = vunpack.c.l.b16 %v4876
        %v5131 = vunpack.c.h.b16 %v4876
        %v5132 = vunpack.c.l.b16 %v4877
        %v5133 = vunpack.c.h.b16 %v4877
        %v5134 = vunpack.c.l.b16 %v4878
        %v5135 = vunpack.c.h.b16 %v4878
        %v5136 = vunpack.c.l.b16 %v4879
        %v5137 = vunpack.c.h.b16 %v4879
        %v5138 = vunpack.c.l.b16 %v4880
        %v5139 = vunpack.c.h.b16 %v4880
        %v5140 = vunpack.c.l.b16 %v4881
        %v5141 = vunpack.c.h.b16 %v4881
        %v5142 = vunpack.c.l.b16 %v4882
        %v5143 = vunpack.c.h.b16 %v4882
        %v5144 = vunpack.c.l.b16 %v4883
        %v5145 = vunpack.c.h.b16 %v4883
        %v5146 = vunpack.c.l.b16 %v4884
        %v5147 = vunpack.c.h.b16 %v4884
        %v5148 = vunpack.c.l.b16 %v4885
        %v5149 = vunpack.c.h.b16 %v4885
        %v5150 = vunpack.c.l.b16 %v4886
        %v5151 = vunpack.c.h.b16 %v4886
        %v5152 = vunpack.c.l.b16 %v4887
        %v5153 = vunpack.c.h.b16 %v4887
        %v5154 = vunpack.c.l.b16 %v4888
        %v5155 = vunpack.c.h.b16 %v4888
        %v5156 = vunpack.c.l.b16 %v4889
        %v5157 = vunpack.c.h.b16 %v4889
        %v5158 = vunpack.c.l.b16 %v4890
        %v5159 = vunpack.c.h.b16 %v4890
        %v5160 = vunpack.c.l.b16 %v4891
        %v5161 = vunpack.c.h.b16 %v4891
        %v5162 = vunpack.c.l.b16 %v4892
        %v5163 = vunpack.c.h.b16 %v4892
        %v5164 = vunpack.c.l.b16 %v4893
        %v5165 = vunpack.c.h.b16 %v4893
        %v5166 = vunpack.c.l.b16 %v4894
        %v5167 = vunpack.c.h.b16 %v4894
        %v5168 = vunpack.c.l.b16 %v4895
        %v5169 = vunpack.c.h.b16 %v4895
        %v5170 = vunpack.c.l.b16 %v4896
        %v5171 = vunpack.c.h.b16 %v4896
        %v5172 = vunpack.c.l.b16 %v4897
        %v5173 = vunpack.c.h.b16 %v4897
        %v5174 = vunpack.c.l.b16 %v4898
        %v5175 = vunpack.c.h.b16 %v4898
        %v5176 = vunpack.c.l.b16 %v4899
        %v5177 = vunpack.c.h.b16 %v4899
        %v5178 = vunpack.c.l.b16 %v4900
        %v5179 = vunpack.c.h.b16 %v4900
        %v5180 = vunpack.c.l.b16 %v4901
        %v5181 = vunpack.c.h.b16 %v4901
        %v5182 = vunpack.c.l.b16 %v4902
        %v5183 = vunpack.c.h.b16 %v4902
        %v5184 = vunpack.c.l.b16 %v4903
        %v5185 = vunpack.c.h.b16 %v4903
        %v5186 = vunpack.c.l.b16 %v4904
        %v5187 = vunpack.c.h.b16 %v4904
        %v5188 = vunpack.c.l.b16 %v4905
        %v5189 = vunpack.c.h.b16 %v4905
        %v5190 = vunpack.c.l.b16 %v4906
        %v5191 = vunpack.c.h.b16 %v4906
        %v5192 = vunpack.c.l.b16 %v4907
        %v5193 = vunpack.c.h.b16 %v4907
        %v5194 = vunpack.c.l.b16 %v4908
        %v5195 = vunpack.c.h.b16 %v4908
        %v5196 = vunpack.c.l.b16 %v4909
        %v5197 = vunpack.c.h.b16 %v4909
        %v5198 = vunpack.c.l.b16 %v4910
        %v5199 = vunpack.c.h.b16 %v4910
        %v5200 = vunpack.c.l.b16 %v4911
        %v5201 = vunpack.c.h.b16 %v4911
        %v5202 = vunpack.c.l.b16 %v4912
        %v5203 = vunpack.c.h.b16 %v4912
        %v5204 = vunpack.c.l.b16 %v4913
        %v5205 = vunpack.c.h.b16 %v4913
        %v5206 = vunpack.c.l.b16 %v4914
        %v5207 = vunpack.c.h.b16 %v4914
        %v5208 = vunpack.c.l.b16 %v4915
        %v5209 = vunpack.c.h.b16 %v4915
        %v5210 = vunpack.c.l.b16 %v4916
        %v5211 = vunpack.c.h.b16 %v4916
        %v5212 = vunpack.c.l.b16 %v4917
        %v5213 = vunpack.c.h.b16 %v4917
        %v5214 = vunpack.c.l.b16 %v4918
        %v5215 = vunpack.c.h.b16 %v4918
        %v5216 = vpack.c.b16 %v5028, %v5024
        %v5217 = vpack.c.b16 %v5029, %v5025
        %v5218 = vpack.c.b16 %v5030, %v5026
        %v5219 = vpack.c.b16 %v5031, %v5027
        %v5220 = vpack.c.b16 %v5036, %v5032
        %v5221 = vpack.c.b16 %v5037, %v5033
        %v5222 = vpack.c.b16 %v5038, %v5034
        %v5223 = vpack.c.b16 %v5039, %v5035
        %v5224 = vpack.c.b16 %v5044, %v5040
        %v5225 = vpack.c.b16 %v5045, %v5041
        %v5226 = vpack.c.b16 %v5046, %v5042
        %v5227 = vpack.c.b16 %v5047, %v5043
        %v5228 = vpack.c.b16 %v5052, %v5048
        %v5229 = vpack.c.b16 %v5053, %v5049
        %v5230 = vpack.c.b16 %v5054, %v5050
        %v5231 = vpack.c.b16 %v5055, %v5051
        %v5232 = vpack.c.b16 %v5060, %v5056
        %v5233 = vpack.c.b16 %v5061, %v5057
        %v5234 = vpack.c.b16 %v5062, %v5058
        %v5235 = vpack.c.b16 %v5063, %v5059
        %v5236 = vpack.c.b16 %v5068, %v5064
        %v5237 = vpack.c.b16 %v5069, %v5065
        %v5238 = vpack.c.b16 %v5070, %v5066
        %v5239 = vpack.c.b16 %v5071, %v5067
        %v5240 = vpack.c.b16 %v5076, %v5072
        %v5241 = vpack.c.b16 %v5077, %v5073
        %v5242 = vpack.c.b16 %v5078, %v5074
        %v5243 = vpack.c.b16 %v5079, %v5075
        %v5244 = vpack.c.b16 %v5084, %v5080
        %v5245 = vpack.c.b16 %v5085, %v5081
        %v5246 = vpack.c.b16 %v5086, %v5082
        %v5247 = vpack.c.b16 %v5087, %v5083
        %v5248 = vpack.c.b16 %v5092, %v5088
        %v5249 = vpack.c.b16 %v5093, %v5089
        %v5250 = vpack.c.b16 %v5094, %v5090
        %v5251 = vpack.c.b16 %v5095, %v5091
        %v5252 = vpack.c.b16 %v5100, %v5096
        %v5253 = vpack.c.b16 %v5101, %v5097
        %v5254 = vpack.c.b16 %v5102, %v5098
        %v5255 = vpack.c.b16 %v5103, %v5099
        %v5256 = vpack.c.b16 %v5108, %v5104
        %v5257 = vpack.c.b16 %v5109, %v5105
        %v5258 = vpack.c.b16 %v5110, %v5106
        %v5259 = vpack.c.b16 %v5111, %v5107
        %v5260 = vpack.c.b16 %v5116, %v5112
        %v5261 = vpack.c.b16 %v5117, %v5113
        %v5262 = vpack.c.b16 %v5118, %v5114
        %v5263 = vpack.c.b16 %v5119, %v5115
        %v5264 = vpack.c.b16 %v5124, %v5120
        %v5265 = vpack.c.b16 %v5125, %v5121
        %v5266 = vpack.c.b16 %v5126, %v5122
        %v5267 = vpack.c.b16 %v5127, %v5123
        %v5268 = vpack.c.b16 %v5132, %v5128
        %v5269 = vpack.c.b16 %v5133, %v5129
        %v5270 = vpack.c.b16 %v5134, %v5130
        %v5271 = vpack.c.b16 %v5135, %v5131
        %v5272 = vpack.c.b16 %v5140, %v5136
        %v5273 = vpack.c.b16 %v5141, %v5137
        %v5274 = vpack.c.b16 %v5142, %v5138
        %v5275 = vpack.c.b16 %v5143, %v5139
        %v5276 = vpack.c.b16 %v5148, %v5144
        %v5277 = vpack.c.b16 %v5149, %v5145
        %v5278 = vpack.c.b16 %v5150, %v5146
        %v5279 = vpack.c.b16 %v5151, %v5147
        %v5280 = vpack.c.b16 %v5156, %v5152
        %v5281 = vpack.c.b16 %v5157, %v5153
        %v5282 = vpack.c.b16 %v5158, %v5154
        %v5283 = vpack.c.b16 %v5159, %v5155
        %v5284 = vpack.c.b16 %v5164, %v5160
        %v5285 = vpack.c.b16 %v5165, %v5161
        %v5286 = vpack.c.b16 %v5166, %v5162
        %v5287 = vpack.c.b16 %v5167, %v5163
        %v5288 = vpack.c.b16 %v5172, %v5168
        %v5289 = vpack.c.b16 %v5173, %v5169
        %v5290 = vpack.c.b16 %v5174, %v5170
        %v5291 = vpack.c.b16 %v5175, %v5171
        %v5292 = vpack.c.b16 %v5180, %v5176
        %v5293 = vpack.c.b16 %v5181, %v5177
        %v5294 = vpack.c.b16 %v5182, %v5178
        %v5295 = vpack.c.b16 %v5183, %v5179
        %v5296 = vpack.c.b16 %v5188, %v5184
        %v5297 = vpack.c.b16 %v5189, %v5185
        %v5298 = vpack.c.b16 %v5190, %v5186
        %v5299 = vpack.c.b16 %v5191, %v5187
        %v5300 = vpack.c.b16 %v5196, %v5192
        %v5301 = vpack.c.b16 %v5197, %v5193
        %v5302 = vpack.c.b16 %v5198, %v5194
        %v5303 = vpack.c.b16 %v5199, %v5195
        %v5304 = vpack.c.b16 %v5204, %v5200
        %v5305 = vpack.c.b16 %v5205, %v5201
        %v5306 = vpack.c.b16 %v5206, %v5202
        %v5307 = vpack.c.b16 %v5207, %v5203
        %v5308 = vpack.c.b16 %v5212, %v5208
        %v5309 = vpack.c.b16 %v5213, %v5209
        %v5310 = vpack.c.b16 %v5214, %v5210
        %v5311 = vpack.c.b16 %v5215, %v5211
        %5408 = vmatprep.subr.bf16.mxu0 %v5217
        %5409 = vmatpush1.bf16.msra.mxu0 %v5216
        %5410 = vmatprep.subr.bf16.mxu0 %v5221
        %5411 = vmatpush1.bf16.msra.mxu0 %v5220
        %5412 = vmatprep.subr.bf16.mxu0 %v5225
        %5413 = vmatpush1.bf16.msra.mxu0 %v5224
        %5414 = vmatprep.subr.bf16.mxu0 %v5229
        %5415 = vmatpush1.bf16.msra.mxu0 %v5228
        %5416 = vmatprep.subr.bf16.mxu0 %v5233
        %5417 = vmatpush1.bf16.msra.mxu0 %v5232
        %5418 = vmatprep.subr.bf16.mxu0 %v5237
        %5419 = vmatpush1.bf16.msra.mxu0 %v5236
        %5420 = vmatprep.subr.bf16.mxu0 %v5241
        %5421 = vmatpush1.bf16.msra.mxu0 %v5240
        %5422 = vmatprep.subr.bf16.mxu0 %v5245
        %5423 = vmatpush1.bf16.msra.mxu0 %v5244
        %5424 = vmatprep.subr.bf16.mxu0 %v5249
        %5425 = vmatpush1.bf16.msra.mxu0 %v5248
        %5426 = vmatprep.subr.bf16.mxu0 %v5253
        %5427 = vmatpush1.bf16.msra.mxu0 %v5252
        %5428 = vmatprep.subr.bf16.mxu0 %v5257
        %5429 = vmatpush1.bf16.msra.mxu0 %v5256
        %5430 = vmatprep.subr.bf16.mxu0 %v5261
        %5431 = vmatpush1.bf16.msra.mxu0 %v5260
        %5432 = vmatprep.subr.bf16.mxu0 %v5265
        %5433 = vmatpush1.bf16.msra.mxu0 %v5264
        %5434 = vmatprep.subr.bf16.mxu0 %v5269
        %5435 = vmatpush1.bf16.msra.mxu0 %v5268
        %5436 = vmatprep.subr.bf16.mxu0 %v5273
        %5437 = vmatpush1.bf16.msra.mxu0 %v5272
        %5438 = vmatprep.subr.bf16.mxu0 %v5277
        %5439 = vmatpush1.bf16.msra.mxu0 %v5276
        %5440 = vmatprep.mubr.bf16.mxu0 %v4923
        %5441 = vmatmul.mubr.bf16.gmra.mrb[0].mxu0 %v4922
        %v5442 = vpop.f32.mrb[0].mxu0
        %v5443 = vadd.f32 0.0, %v5442
        %v5444 = vpop.f32.mrb[0].mxu0
        %v5445 = vadd.f32 0.0, %v5444
        %v5446 = vpop.f32.mrb[0].mxu0
        %v5447 = vpop.f32.mrb[0].mxu0
        %5448 = vdwg.mxu0
        %5449 = vmatprep.subr.bf16.mxu0 %v5281
        %5450 = vmatpush1.bf16.msra.mxu0 %v5280
        %5451 = vmatprep.subr.bf16.mxu0 %v5285
        %5452 = vmatpush1.bf16.msra.mxu0 %v5284
        %5453 = vmatprep.subr.bf16.mxu0 %v5289
        %5454 = vmatpush1.bf16.msra.mxu0 %v5288
        %5455 = vmatprep.subr.bf16.mxu0 %v5293
        %5456 = vmatpush1.bf16.msra.mxu0 %v5292
        %5457 = vmatprep.subr.bf16.mxu0 %v5297
        %5458 = vmatpush1.bf16.msra.mxu0 %v5296
        %5459 = vmatprep.subr.bf16.mxu0 %v5301
        %5460 = vmatpush1.bf16.msra.mxu0 %v5300
        %5461 = vmatprep.subr.bf16.mxu0 %v5305
        %5462 = vmatpush1.bf16.msra.mxu0 %v5304
        %5463 = vmatprep.subr.bf16.mxu0 %v5309
        %5464 = vmatpush1.bf16.msra.mxu0 %v5308
        %5465 = vmatprep.subr.bf16.mxu0 0
        %5466 = vmatpush1.bf16.msra.mxu0 0
        %5467 = vmatprep.subr.bf16.mxu0 0
        %5468 = vmatpush1.bf16.msra.mxu0 0
        %5469 = vmatprep.subr.bf16.mxu0 0
        %5470 = vmatpush1.bf16.msra.mxu0 0
        %5471 = vmatprep.subr.bf16.mxu0 0
        %5472 = vmatpush1.bf16.msra.mxu0 0
        %5473 = vmatprep.subr.bf16.mxu0 0
        %5474 = vmatpush1.bf16.msra.mxu0 0
        %5475 = vmatprep.subr.bf16.mxu0 0
        %5476 = vmatpush1.bf16.msra.mxu0 0
        %5477 = vmatprep.subr.bf16.mxu0 0
        %5478 = vmatpush1.bf16.msra.mxu0 0
        %5479 = vmatprep.subr.bf16.mxu0 0
        %5480 = vmatpush1.bf16.msra.mxu0 0
        %5481 = vmatprep.mubr.bf16.mxu0 0
        %5482 = vmatmul.mubr.bf16.gmra.mrb[0].mxu0 %v4924
        %v5483 = vpop.f32.mrb[0].mxu0
        %v5484 = vadd.f32 %v5443, %v5483
        %v5485 = vpop.f32.mrb[0].mxu0
        %v5486 = vadd.f32 %v5445, %v5485
        %v5487 = vpop.f32.mrb[0].mxu0
        %v5488 = vpop.f32.mrb[0].mxu0
        %5489 = vdwg.mxu0
        %5490 = vmatprep.subr.bf16.mxu0 %v5219
        %5491 = vmatpush1.bf16.msra.mxu0 %v5218
        %5492 = vmatprep.subr.bf16.mxu0 %v5223
        %5493 = vmatpush1.bf16.msra.mxu0 %v5222
        %5494 = vmatprep.subr.bf16.mxu0 %v5227
        %5495 = vmatpush1.bf16.msra.mxu0 %v5226
        %5496 = vmatprep.subr.bf16.mxu0 %v5231
        %5497 = vmatpush1.bf16.msra.mxu0 %v5230
        %5498 = vmatprep.subr.bf16.mxu0 %v5235
        %5499 = vmatpush1.bf16.msra.mxu0 %v5234
        %5500 = vmatprep.subr.bf16.mxu0 %v5239
        %5501 = vmatpush1.bf16.msra.mxu0 %v5238
        %5502 = vmatprep.subr.bf16.mxu0 %v5243
        %5503 = vmatpush1.bf16.msra.mxu0 %v5242
        %5504 = vmatprep.subr.bf16.mxu0 %v5247
        %5505 = vmatpush1.bf16.msra.mxu0 %v5246
        %5506 = vmatprep.subr.bf16.mxu0 %v5251
        %5507 = vmatpush1.bf16.msra.mxu0 %v5250
        %5508 = vmatprep.subr.bf16.mxu0 %v5255
        %5509 = vmatpush1.bf16.msra.mxu0 %v5254
        %5510 = vmatprep.subr.bf16.mxu0 %v5259
        %5511 = vmatpush1.bf16.msra.mxu0 %v5258
        %5512 = vmatprep.subr.bf16.mxu0 %v5263
        %5513 = vmatpush1.bf16.msra.mxu0 %v5262
        %5514 = vmatprep.subr.bf16.mxu0 %v5267
        %5515 = vmatpush1.bf16.msra.mxu0 %v5266
        %5516 = vmatprep.subr.bf16.mxu0 %v5271
        %5517 = vmatpush1.bf16.msra.mxu0 %v5270
        %5518 = vmatprep.subr.bf16.mxu0 %v5275
        %5519 = vmatpush1.bf16.msra.mxu0 %v5274
        %5520 = vmatprep.subr.bf16.mxu0 %v5279
        %5521 = vmatpush1.bf16.msra.mxu0 %v5278
        %5522 = vmatprep.mubr.bf16.mxu0 %v4923
        %5523 = vmatmul.mubr.bf16.gmra.mrb[0].mxu0 %v4922
        %v5524 = vpop.f32.mrb[0].mxu0
        %v5525 = vadd.f32 0.0, %v5524
        %v5526 = vpop.f32.mrb[0].mxu0
        %v5527 = vadd.f32 0.0, %v5526
        %v5528 = vpop.f32.mrb[0].mxu0
        %v5529 = vpop.f32.mrb[0].mxu0
        %5530 = vdwg.mxu0
        %5531 = vmatprep.subr.bf16.mxu0 %v5283
        %5532 = vmatpush1.bf16.msra.mxu0 %v5282
        %5533 = vmatprep.subr.bf16.mxu0 %v5287
        %5534 = vmatpush1.bf16.msra.mxu0 %v5286
        %5535 = vmatprep.subr.bf16.mxu0 %v5291
        %5536 = vmatpush1.bf16.msra.mxu0 %v5290
        %5537 = vmatprep.subr.bf16.mxu0 %v5295
        %5538 = vmatpush1.bf16.msra.mxu0 %v5294
        %5539 = vmatprep.subr.bf16.mxu0 %v5299
        %5540 = vmatpush1.bf16.msra.mxu0 %v5298
        %5541 = vmatprep.subr.bf16.mxu0 %v5303
        %5542 = vmatpush1.bf16.msra.mxu0 %v5302
        %5543 = vmatprep.subr.bf16.mxu0 %v5307
        %5544 = vmatpush1.bf16.msra.mxu0 %v5306
        %5545 = vmatprep.subr.bf16.mxu0 %v5311
        %5546 = vmatpush1.bf16.msra.mxu0 %v5310
        %5547 = vmatprep.subr.bf16.mxu0 0
        %5548 = vmatpush1.bf16.msra.mxu0 0
        %5549 = vmatprep.subr.bf16.mxu0 0
        %5550 = vmatpush1.bf16.msra.mxu0 0
        %5551 = vmatprep.subr.bf16.mxu0 0
        %5552 = vmatpush1.bf16.msra.mxu0 0
        %5553 = vmatprep.subr.bf16.mxu0 0
        %5554 = vmatpush1.bf16.msra.mxu0 0
        %5555 = vmatprep.subr.bf16.mxu0 0
        %5556 = vmatpush1.bf16.msra.mxu0 0
        %5557 = vmatprep.subr.bf16.mxu0 0
        %5558 = vmatpush1.bf16.msra.mxu0 0
        %5559 = vmatprep.subr.bf16.mxu0 0
        %5560 = vmatpush1.bf16.msra.mxu0 0
        %5561 = vmatprep.subr.bf16.mxu0 0
        %5562 = vmatpush1.bf16.msra.mxu0 0
        %5563 = vmatprep.mubr.bf16.mxu0 0
        %5564 = vmatmul.mubr.bf16.gmra.mrb[0].mxu0 %v4924
        %v5565 = vpop.f32.mrb[0].mxu0
        %v5566 = vadd.f32 %v5525, %v5565
        %v5567 = vpop.f32.mrb[0].mxu0
        %v5568 = vadd.f32 %v5527, %v5567
        %v5569 = vpop.f32.mrb[0].mxu0
        %v5570 = vpop.f32.mrb[0].mxu0
        %5571 = vdwg.mxu0
        %v5572 = vadd.f32 %v4734, %v5484
        %v5573 = vadd.f32 %v4736, %v5486
        %v5574 = vadd.f32 %v4816, %v5566
        %v5575 = vadd.f32 %v4818, %v5568
        %s5576 = scalar_lea.vmem [#allocation9], 2304
        %v5577 = vld [vmem:[%s5576] sm:$0xff]
        %v5578 = vld [vmem:[%s5576 + $0x8] sm:$0xff]
        %v5579 = vld [vmem:[%s5576 + $0x10] sm:$0xff]
        %v5580 = vld [vmem:[%s5576 + $0x18] sm:$0xff]
        %v5581 = vld [vmem:[%s5576 + $0x20] sm:$0xff]
        %v5582 = vld [vmem:[%s5576 + $0x28] sm:$0xff]
        %v5583 = vld [vmem:[%s5576 + $0x30] sm:$0xff]
        %v5584 = vld [vmem:[%s5576 + $0x38] sm:$0xff]
        %v5585 = vld [vmem:[%s5576 + $0x40] sm:$0xff]
        %v5586 = vld [vmem:[%s5576 + $0x48] sm:$0xff]
        %v5587 = vld [vmem:[%s5576 + $0x50] sm:$0xff]
        %v5588 = vld [vmem:[%s5576 + $0x58] sm:$0xff]
        %v5589 = vld [vmem:[%s5576 + $0x60] sm:$0xff]
        %v5590 = vld [vmem:[%s5576 + $0x68] sm:$0xff]
        %v5591 = vld [vmem:[%s5576 + $0x70] sm:$0xff]
        %v5592 = vld [vmem:[%s5576 + $0x78] sm:$0xff]
        %v5593 = vld [vmem:[%s5576 + $0x80] sm:$0xff]
        %v5594 = vld [vmem:[%s5576 + $0x88] sm:$0xff]
        %v5595 = vld [vmem:[%s5576 + $0x90] sm:$0xff]
        %v5596 = vld [vmem:[%s5576 + $0x98] sm:$0xff]
        %v5597 = vld [vmem:[%s5576 + $0xa0] sm:$0xff]
        %v5598 = vld [vmem:[%s5576 + $0xa8] sm:$0xff]
        %v5599 = vld [vmem:[%s5576 + $0xb0] sm:$0xff]
        %v5600 = vld [vmem:[%s5576 + $0xb8] sm:$0xff]
        %v5601 = vld [vmem:[%s5576 + $0xc0] sm:$0xff]
        %v5602 = vld [vmem:[%s5576 + $0xc8] sm:$0xff]
        %v5603 = vld [vmem:[%s5576 + $0xd0] sm:$0xff]
        %v5604 = vld [vmem:[%s5576 + $0xd8] sm:$0xff]
        %v5605 = vld [vmem:[%s5576 + $0xe0] sm:$0xff]
        %v5606 = vld [vmem:[%s5576 + $0xe8] sm:$0xff]
        %v5607 = vld [vmem:[%s5576 + $0xf0] sm:$0xff]
        %v5608 = vld [vmem:[%s5576 + $0xf8] sm:$0xff]
        %v5609 = vld [vmem:[%s5576 + $0x100] sm:$0xff]
        %v5610 = vld [vmem:[%s5576 + $0x108] sm:$0xff]
        %v5611 = vld [vmem:[%s5576 + $0x110] sm:$0xff]
        %v5612 = vld [vmem:[%s5576 + $0x118] sm:$0xff]
        %v5613 = vld [vmem:[%s5576 + $0x120] sm:$0xff]
        %v5614 = vld [vmem:[%s5576 + $0x128] sm:$0xff]
        %v5615 = vld [vmem:[%s5576 + $0x130] sm:$0xff]
        %v5616 = vld [vmem:[%s5576 + $0x138] sm:$0xff]
        %v5617 = vld [vmem:[%s5576 + $0x140] sm:$0xff]
        %v5618 = vld [vmem:[%s5576 + $0x148] sm:$0xff]
        %v5619 = vld [vmem:[%s5576 + $0x150] sm:$0xff]
        %v5620 = vld [vmem:[%s5576 + $0x158] sm:$0xff]
        %v5621 = vld [vmem:[%s5576 + $0x160] sm:$0xff]
        %v5622 = vld [vmem:[%s5576 + $0x168] sm:$0xff]
        %v5623 = vld [vmem:[%s5576 + $0x170] sm:$0xff]
        %v5624 = vld [vmem:[%s5576 + $0x178] sm:$0xff]
        %v5625 = vld [vmem:[%s5576 + $0x180] sm:$0xff]
        %v5626 = vld [vmem:[%s5576 + $0x188] sm:$0xff]
        %v5627 = vld [vmem:[%s5576 + $0x190] sm:$0xff]
        %v5628 = vld [vmem:[%s5576 + $0x198] sm:$0xff]
        %v5629 = vld [vmem:[%s5576 + $0x1a0] sm:$0xff]
        %v5630 = vld [vmem:[%s5576 + $0x1a8] sm:$0xff]
        %v5631 = vld [vmem:[%s5576 + $0x1b0] sm:$0xff]
        %v5632 = vld [vmem:[%s5576 + $0x1b8] sm:$0xff]
        %v5633 = vld [vmem:[%s5576 + $0x1c0] sm:$0xff]
        %v5634 = vld [vmem:[%s5576 + $0x1c8] sm:$0xff]
        %v5635 = vld [vmem:[%s5576 + $0x1d0] sm:$0xff]
        %v5636 = vld [vmem:[%s5576 + $0x1d8] sm:$0xff]
        %v5637 = vld [vmem:[%s5576 + $0x1e0] sm:$0xff]
        %v5638 = vld [vmem:[%s5576 + $0x1e8] sm:$0xff]
        %v5639 = vld [vmem:[%s5576 + $0x1f0] sm:$0xff]
        %v5640 = vld [vmem:[%s5576 + $0x1f8] sm:$0xff]
        %v5641 = vld [vmem:[%s5576 + $0x200] sm:$0xff]
        %v5642 = vld [vmem:[%s5576 + $0x208] sm:$0xff]
        %v5643 = vld [vmem:[%s5576 + $0x210] sm:$0xff]
        %v5644 = vld [vmem:[%s5576 + $0x218] sm:$0xff]
        %v5645 = vld [vmem:[%s5576 + $0x220] sm:$0xff]
        %v5646 = vld [vmem:[%s5576 + $0x228] sm:$0xff]
        %v5647 = vld [vmem:[%s5576 + $0x230] sm:$0xff]
        %v5648 = vld [vmem:[%s5576 + $0x238] sm:$0xff]
        %v5649 = vld [vmem:[%s5576 + $0x240] sm:$0xff]
        %v5650 = vld [vmem:[%s5576 + $0x248] sm:$0xff]
        %v5651 = vld [vmem:[%s5576 + $0x250] sm:$0xff]
        %v5652 = vld [vmem:[%s5576 + $0x258] sm:$0xff]
        %v5653 = vld [vmem:[%s5576 + $0x260] sm:$0xff]
        %v5654 = vld [vmem:[%s5576 + $0x268] sm:$0xff]
        %v5655 = vld [vmem:[%s5576 + $0x270] sm:$0xff]
        %v5656 = vld [vmem:[%s5576 + $0x278] sm:$0xff]
        %v5657 = vld [vmem:[%s5576 + $0x280] sm:$0xff]
        %v5658 = vld [vmem:[%s5576 + $0x288] sm:$0xff]
        %v5659 = vld [vmem:[%s5576 + $0x290] sm:$0xff]
        %v5660 = vld [vmem:[%s5576 + $0x298] sm:$0xff]
        %v5661 = vld [vmem:[%s5576 + $0x2a0] sm:$0xff]
        %v5662 = vld [vmem:[%s5576 + $0x2a8] sm:$0xff]
        %v5663 = vld [vmem:[%s5576 + $0x2b0] sm:$0xff]
        %v5664 = vld [vmem:[%s5576 + $0x2b8] sm:$0xff]
        %v5665 = vld [vmem:[%s5576 + $0x2c0] sm:$0xff]
        %v5666 = vld [vmem:[%s5576 + $0x2c8] sm:$0xff]
        %v5667 = vld [vmem:[%s5576 + $0x2d0] sm:$0xff]
        %v5668 = vld [vmem:[%s5576 + $0x2d8] sm:$0xff]
        %v5669 = vld [vmem:[%s5576 + $0x2e0] sm:$0xff]
        %v5670 = vld [vmem:[%s5576 + $0x2e8] sm:$0xff]
        %v5671 = vld [vmem:[%s5576 + $0x2f0] sm:$0xff]
        %v5672 = vld [vmem:[%s5576 + $0x2f8] sm:$0xff]
        %v5673 = vrot.slane %v3511, 1
        %v5674 = vrot.slane %v3513, 2
        %v5675 = vor.u32 %v5673, %v5674
        %v5676 = vrot.slane %v3518, 1
        %v5677 = vrot.slane %v3520, 2
        %v5678 = vor.u32 %v5676, %v5677
        %v5679 = vrot.slane %v3525, 1
        %v5680 = vrot.slane %v3527, 2
        %v5681 = vor.u32 %v5679, %v5680
        %v5781 = vunpack.c.l.b16 %v5577
        %v5782 = vunpack.c.h.b16 %v5577
        %v5783 = vunpack.c.l.b16 %v5578
        %v5784 = vunpack.c.h.b16 %v5578
        %v5785 = vunpack.c.l.b16 %v5579
        %v5786 = vunpack.c.h.b16 %v5579
        %v5787 = vunpack.c.l.b16 %v5580
        %v5788 = vunpack.c.h.b16 %v5580
        %v5789 = vunpack.c.l.b16 %v5581
        %v5790 = vunpack.c.h.b16 %v5581
        %v5791 = vunpack.c.l.b16 %v5582
        %v5792 = vunpack.c.h.b16 %v5582
        %v5793 = vunpack.c.l.b16 %v5583
        %v5794 = vunpack.c.h.b16 %v5583
        %v5795 = vunpack.c.l.b16 %v5584
        %v5796 = vunpack.c.h.b16 %v5584
        %v5797 = vunpack.c.l.b16 %v5585
        %v5798 = vunpack.c.h.b16 %v5585
        %v5799 = vunpack.c.l.b16 %v5586
        %v5800 = vunpack.c.h.b16 %v5586
        %v5801 = vunpack.c.l.b16 %v5587
        %v5802 = vunpack.c.h.b16 %v5587
        %v5803 = vunpack.c.l.b16 %v5588
        %v5804 = vunpack.c.h.b16 %v5588
        %v5805 = vunpack.c.l.b16 %v5589
        %v5806 = vunpack.c.h.b16 %v5589
        %v5807 = vunpack.c.l.b16 %v5590
        %v5808 = vunpack.c.h.b16 %v5590
        %v5809 = vunpack.c.l.b16 %v5591
        %v5810 = vunpack.c.h.b16 %v5591
        %v5811 = vunpack.c.l.b16 %v5592
        %v5812 = vunpack.c.h.b16 %v5592
        %v5813 = vunpack.c.l.b16 %v5593
        %v5814 = vunpack.c.h.b16 %v5593
        %v5815 = vunpack.c.l.b16 %v5594
        %v5816 = vunpack.c.h.b16 %v5594
        %v5817 = vunpack.c.l.b16 %v5595
        %v5818 = vunpack.c.h.b16 %v5595
        %v5819 = vunpack.c.l.b16 %v5596
        %v5820 = vunpack.c.h.b16 %v5596
        %v5821 = vunpack.c.l.b16 %v5597
        %v5822 = vunpack.c.h.b16 %v5597
        %v5823 = vunpack.c.l.b16 %v5598
        %v5824 = vunpack.c.h.b16 %v5598
        %v5825 = vunpack.c.l.b16 %v5599
        %v5826 = vunpack.c.h.b16 %v5599
        %v5827 = vunpack.c.l.b16 %v5600
        %v5828 = vunpack.c.h.b16 %v5600
        %v5829 = vunpack.c.l.b16 %v5601
        %v5830 = vunpack.c.h.b16 %v5601
        %v5831 = vunpack.c.l.b16 %v5602
        %v5832 = vunpack.c.h.b16 %v5602
        %v5833 = vunpack.c.l.b16 %v5603
        %v5834 = vunpack.c.h.b16 %v5603
        %v5835 = vunpack.c.l.b16 %v5604
        %v5836 = vunpack.c.h.b16 %v5604
        %v5837 = vunpack.c.l.b16 %v5605
        %v5838 = vunpack.c.h.b16 %v5605
        %v5839 = vunpack.c.l.b16 %v5606
        %v5840 = vunpack.c.h.b16 %v5606
        %v5841 = vunpack.c.l.b16 %v5607
        %v5842 = vunpack.c.h.b16 %v5607
        %v5843 = vunpack.c.l.b16 %v5608
        %v5844 = vunpack.c.h.b16 %v5608
        %v5845 = vunpack.c.l.b16 %v5609
        %v5846 = vunpack.c.h.b16 %v5609
        %v5847 = vunpack.c.l.b16 %v5610
        %v5848 = vunpack.c.h.b16 %v5610
        %v5849 = vunpack.c.l.b16 %v5611
        %v5850 = vunpack.c.h.b16 %v5611
        %v5851 = vunpack.c.l.b16 %v5612
        %v5852 = vunpack.c.h.b16 %v5612
        %v5853 = vunpack.c.l.b16 %v5613
        %v5854 = vunpack.c.h.b16 %v5613
        %v5855 = vunpack.c.l.b16 %v5614
        %v5856 = vunpack.c.h.b16 %v5614
        %v5857 = vunpack.c.l.b16 %v5615
        %v5858 = vunpack.c.h.b16 %v5615
        %v5859 = vunpack.c.l.b16 %v5616
        %v5860 = vunpack.c.h.b16 %v5616
        %v5861 = vunpack.c.l.b16 %v5617
        %v5862 = vunpack.c.h.b16 %v5617
        %v5863 = vunpack.c.l.b16 %v5618
        %v5864 = vunpack.c.h.b16 %v5618
        %v5865 = vunpack.c.l.b16 %v5619
        %v5866 = vunpack.c.h.b16 %v5619
        %v5867 = vunpack.c.l.b16 %v5620
        %v5868 = vunpack.c.h.b16 %v5620
        %v5869 = vunpack.c.l.b16 %v5621
        %v5870 = vunpack.c.h.b16 %v5621
        %v5871 = vunpack.c.l.b16 %v5622
        %v5872 = vunpack.c.h.b16 %v5622
        %v5873 = vunpack.c.l.b16 %v5623
        %v5874 = vunpack.c.h.b16 %v5623
        %v5875 = vunpack.c.l.b16 %v5624
        %v5876 = vunpack.c.h.b16 %v5624
        %v5877 = vunpack.c.l.b16 %v5625
        %v5878 = vunpack.c.h.b16 %v5625
        %v5879 = vunpack.c.l.b16 %v5626
        %v5880 = vunpack.c.h.b16 %v5626
        %v5881 = vunpack.c.l.b16 %v5627
        %v5882 = vunpack.c.h.b16 %v5627
        %v5883 = vunpack.c.l.b16 %v5628
        %v5884 = vunpack.c.h.b16 %v5628
        %v5885 = vunpack.c.l.b16 %v5629
        %v5886 = vunpack.c.h.b16 %v5629
        %v5887 = vunpack.c.l.b16 %v5630
        %v5888 = vunpack.c.h.b16 %v5630
        %v5889 = vunpack.c.l.b16 %v5631
        %v5890 = vunpack.c.h.b16 %v5631
        %v5891 = vunpack.c.l.b16 %v5632
        %v5892 = vunpack.c.h.b16 %v5632
        %v5893 = vunpack.c.l.b16 %v5633
        %v5894 = vunpack.c.h.b16 %v5633
        %v5895 = vunpack.c.l.b16 %v5634
        %v5896 = vunpack.c.h.b16 %v5634
        %v5897 = vunpack.c.l.b16 %v5635
        %v5898 = vunpack.c.h.b16 %v5635
        %v5899 = vunpack.c.l.b16 %v5636
        %v5900 = vunpack.c.h.b16 %v5636
        %v5901 = vunpack.c.l.b16 %v5637
        %v5902 = vunpack.c.h.b16 %v5637
        %v5903 = vunpack.c.l.b16 %v5638
        %v5904 = vunpack.c.h.b16 %v5638
        %v5905 = vunpack.c.l.b16 %v5639
        %v5906 = vunpack.c.h.b16 %v5639
        %v5907 = vunpack.c.l.b16 %v5640
        %v5908 = vunpack.c.h.b16 %v5640
        %v5909 = vunpack.c.l.b16 %v5641
        %v5910 = vunpack.c.h.b16 %v5641
        %v5911 = vunpack.c.l.b16 %v5642
        %v5912 = vunpack.c.h.b16 %v5642
        %v5913 = vunpack.c.l.b16 %v5643
        %v5914 = vunpack.c.h.b16 %v5643
        %v5915 = vunpack.c.l.b16 %v5644
        %v5916 = vunpack.c.h.b16 %v5644
        %v5917 = vunpack.c.l.b16 %v5645
        %v5918 = vunpack.c.h.b16 %v5645
        %v5919 = vunpack.c.l.b16 %v5646
        %v5920 = vunpack.c.h.b16 %v5646
        %v5921 = vunpack.c.l.b16 %v5647
        %v5922 = vunpack.c.h.b16 %v5647
        %v5923 = vunpack.c.l.b16 %v5648
        %v5924 = vunpack.c.h.b16 %v5648
        %v5925 = vunpack.c.l.b16 %v5649
        %v5926 = vunpack.c.h.b16 %v5649
        %v5927 = vunpack.c.l.b16 %v5650
        %v5928 = vunpack.c.h.b16 %v5650
        %v5929 = vunpack.c.l.b16 %v5651
        %v5930 = vunpack.c.h.b16 %v5651
        %v5931 = vunpack.c.l.b16 %v5652
        %v5932 = vunpack.c.h.b16 %v5652
        %v5933 = vunpack.c.l.b16 %v5653
        %v5934 = vunpack.c.h.b16 %v5653
        %v5935 = vunpack.c.l.b16 %v5654
        %v5936 = vunpack.c.h.b16 %v5654
        %v5937 = vunpack.c.l.b16 %v5655
        %v5938 = vunpack.c.h.b16 %v5655
        %v5939 = vunpack.c.l.b16 %v5656
        %v5940 = vunpack.c.h.b16 %v5656
        %v5941 = vunpack.c.l.b16 %v5657
        %v5942 = vunpack.c.h.b16 %v5657
        %v5943 = vunpack.c.l.b16 %v5658
        %v5944 = vunpack.c.h.b16 %v5658
        %v5945 = vunpack.c.l.b16 %v5659
        %v5946 = vunpack.c.h.b16 %v5659
        %v5947 = vunpack.c.l.b16 %v5660
        %v5948 = vunpack.c.h.b16 %v5660
        %v5949 = vunpack.c.l.b16 %v5661
        %v5950 = vunpack.c.h.b16 %v5661
        %v5951 = vunpack.c.l.b16 %v5662
        %v5952 = vunpack.c.h.b16 %v5662
        %v5953 = vunpack.c.l.b16 %v5663
        %v5954 = vunpack.c.h.b16 %v5663
        %v5955 = vunpack.c.l.b16 %v5664
        %v5956 = vunpack.c.h.b16 %v5664
        %v5957 = vunpack.c.l.b16 %v5665
        %v5958 = vunpack.c.h.b16 %v5665
        %v5959 = vunpack.c.l.b16 %v5666
        %v5960 = vunpack.c.h.b16 %v5666
        %v5961 = vunpack.c.l.b16 %v5667
        %v5962 = vunpack.c.h.b16 %v5667
        %v5963 = vunpack.c.l.b16 %v5668
        %v5964 = vunpack.c.h.b16 %v5668
        %v5965 = vunpack.c.l.b16 %v5669
        %v5966 = vunpack.c.h.b16 %v5669
        %v5967 = vunpack.c.l.b16 %v5670
        %v5968 = vunpack.c.h.b16 %v5670
        %v5969 = vunpack.c.l.b16 %v5671
        %v5970 = vunpack.c.h.b16 %v5671
        %v5971 = vunpack.c.l.b16 %v5672
        %v5972 = vunpack.c.h.b16 %v5672
        %v5973 = vpack.c.b16 %v5785, %v5781
        %v5974 = vpack.c.b16 %v5786, %v5782
        %v5975 = vpack.c.b16 %v5787, %v5783
        %v5976 = vpack.c.b16 %v5788, %v5784
        %v5977 = vpack.c.b16 %v5793, %v5789
        %v5978 = vpack.c.b16 %v5794, %v5790
        %v5979 = vpack.c.b16 %v5795, %v5791
        %v5980 = vpack.c.b16 %v5796, %v5792
        %v5981 = vpack.c.b16 %v5801, %v5797
        %v5982 = vpack.c.b16 %v5802, %v5798
        %v5983 = vpack.c.b16 %v5803, %v5799
        %v5984 = vpack.c.b16 %v5804, %v5800
        %v5985 = vpack.c.b16 %v5809, %v5805
        %v5986 = vpack.c.b16 %v5810, %v5806
        %v5987 = vpack.c.b16 %v5811, %v5807
        %v5988 = vpack.c.b16 %v5812, %v5808
        %v5989 = vpack.c.b16 %v5817, %v5813
        %v5990 = vpack.c.b16 %v5818, %v5814
        %v5991 = vpack.c.b16 %v5819, %v5815
        %v5992 = vpack.c.b16 %v5820, %v5816
        %v5993 = vpack.c.b16 %v5825, %v5821
        %v5994 = vpack.c.b16 %v5826, %v5822
        %v5995 = vpack.c.b16 %v5827, %v5823
        %v5996 = vpack.c.b16 %v5828, %v5824
        %v5997 = vpack.c.b16 %v5833, %v5829
        %v5998 = vpack.c.b16 %v5834, %v5830
        %v5999 = vpack.c.b16 %v5835, %v5831
        %v6000 = vpack.c.b16 %v5836, %v5832
        %v6001 = vpack.c.b16 %v5841, %v5837
        %v6002 = vpack.c.b16 %v5842, %v5838
        %v6003 = vpack.c.b16 %v5843, %v5839
        %v6004 = vpack.c.b16 %v5844, %v5840
        %v6005 = vpack.c.b16 %v5849, %v5845
        %v6006 = vpack.c.b16 %v5850, %v5846
        %v6007 = vpack.c.b16 %v5851, %v5847
        %v6008 = vpack.c.b16 %v5852, %v5848
        %v6009 = vpack.c.b16 %v5857, %v5853
        %v6010 = vpack.c.b16 %v5858, %v5854
        %v6011 = vpack.c.b16 %v5859, %v5855
        %v6012 = vpack.c.b16 %v5860, %v5856
        %v6013 = vpack.c.b16 %v5865, %v5861
        %v6014 = vpack.c.b16 %v5866, %v5862
        %v6015 = vpack.c.b16 %v5867, %v5863
        %v6016 = vpack.c.b16 %v5868, %v5864
        %v6017 = vpack.c.b16 %v5873, %v5869
        %v6018 = vpack.c.b16 %v5874, %v5870
        %v6019 = vpack.c.b16 %v5875, %v5871
        %v6020 = vpack.c.b16 %v5876, %v5872
        %v6021 = vpack.c.b16 %v5881, %v5877
        %v6022 = vpack.c.b16 %v5882, %v5878
        %v6023 = vpack.c.b16 %v5883, %v5879
        %v6024 = vpack.c.b16 %v5884, %v5880
        %v6025 = vpack.c.b16 %v5889, %v5885
        %v6026 = vpack.c.b16 %v5890, %v5886
        %v6027 = vpack.c.b16 %v5891, %v5887
        %v6028 = vpack.c.b16 %v5892, %v5888
        %v6029 = vpack.c.b16 %v5897, %v5893
        %v6030 = vpack.c.b16 %v5898, %v5894
        %v6031 = vpack.c.b16 %v5899, %v5895
        %v6032 = vpack.c.b16 %v5900, %v5896
        %v6033 = vpack.c.b16 %v5905, %v5901
        %v6034 = vpack.c.b16 %v5906, %v5902
        %v6035 = vpack.c.b16 %v5907, %v5903
        %v6036 = vpack.c.b16 %v5908, %v5904
        %v6037 = vpack.c.b16 %v5913, %v5909
        %v6038 = vpack.c.b16 %v5914, %v5910
        %v6039 = vpack.c.b16 %v5915, %v5911
        %v6040 = vpack.c.b16 %v5916, %v5912
        %v6041 = vpack.c.b16 %v5921, %v5917
        %v6042 = vpack.c.b16 %v5922, %v5918
        %v6043 = vpack.c.b16 %v5923, %v5919
        %v6044 = vpack.c.b16 %v5924, %v5920
        %v6045 = vpack.c.b16 %v5929, %v5925
        %v6046 = vpack.c.b16 %v5930, %v5926
        %v6047 = vpack.c.b16 %v5931, %v5927
        %v6048 = vpack.c.b16 %v5932, %v5928
        %v6049 = vpack.c.b16 %v5937, %v5933
        %v6050 = vpack.c.b16 %v5938, %v5934
        %v6051 = vpack.c.b16 %v5939, %v5935
        %v6052 = vpack.c.b16 %v5940, %v5936
        %v6053 = vpack.c.b16 %v5945, %v5941
        %v6054 = vpack.c.b16 %v5946, %v5942
        %v6055 = vpack.c.b16 %v5947, %v5943
        %v6056 = vpack.c.b16 %v5948, %v5944
        %v6057 = vpack.c.b16 %v5953, %v5949
        %v6058 = vpack.c.b16 %v5954, %v5950
        %v6059 = vpack.c.b16 %v5955, %v5951
        %v6060 = vpack.c.b16 %v5956, %v5952
        %v6061 = vpack.c.b16 %v5961, %v5957
        %v6062 = vpack.c.b16 %v5962, %v5958
        %v6063 = vpack.c.b16 %v5963, %v5959
        %v6064 = vpack.c.b16 %v5964, %v5960
        %v6065 = vpack.c.b16 %v5969, %v5965
        %v6066 = vpack.c.b16 %v5970, %v5966
        %v6067 = vpack.c.b16 %v5971, %v5967
        %v6068 = vpack.c.b16 %v5972, %v5968
        %6165 = vmatprep.subr.bf16.mxu0 %v5974
        %6166 = vmatpush1.bf16.msra.mxu0 %v5973
        %6167 = vmatprep.subr.bf16.mxu0 %v5978
        %6168 = vmatpush1.bf16.msra.mxu0 %v5977
        %6169 = vmatprep.subr.bf16.mxu0 %v5982
        %6170 = vmatpush1.bf16.msra.mxu0 %v5981
        %6171 = vmatprep.subr.bf16.mxu0 %v5986
        %6172 = vmatpush1.bf16.msra.mxu0 %v5985
        %6173 = vmatprep.subr.bf16.mxu0 %v5990
        %6174 = vmatpush1.bf16.msra.mxu0 %v5989
        %6175 = vmatprep.subr.bf16.mxu0 %v5994
        %6176 = vmatpush1.bf16.msra.mxu0 %v5993
        %6177 = vmatprep.subr.bf16.mxu0 %v5998
        %6178 = vmatpush1.bf16.msra.mxu0 %v5997
        %6179 = vmatprep.subr.bf16.mxu0 %v6002
        %6180 = vmatpush1.bf16.msra.mxu0 %v6001
        %6181 = vmatprep.subr.bf16.mxu0 %v6006
        %6182 = vmatpush1.bf16.msra.mxu0 %v6005
        %6183 = vmatprep.subr.bf16.mxu0 %v6010
        %6184 = vmatpush1.bf16.msra.mxu0 %v6009
        %6185 = vmatprep.subr.bf16.mxu0 %v6014
        %6186 = vmatpush1.bf16.msra.mxu0 %v6013
        %6187 = vmatprep.subr.bf16.mxu0 %v6018
        %6188 = vmatpush1.bf16.msra.mxu0 %v6017
        %6189 = vmatprep.subr.bf16.mxu0 %v6022
        %6190 = vmatpush1.bf16.msra.mxu0 %v6021
        %6191 = vmatprep.subr.bf16.mxu0 %v6026
        %6192 = vmatpush1.bf16.msra.mxu0 %v6025
        %6193 = vmatprep.subr.bf16.mxu0 %v6030
        %6194 = vmatpush1.bf16.msra.mxu0 %v6029
        %6195 = vmatprep.subr.bf16.mxu0 %v6034
        %6196 = vmatpush1.bf16.msra.mxu0 %v6033
        %6197 = vmatprep.mubr.bf16.mxu0 %v5678
        %6198 = vmatmul.mubr.bf16.gmra.mrb[0].mxu0 %v5675
        %v6199 = vpop.f32.mrb[0].mxu0
        %v6200 = vadd.f32 0.0, %v6199
        %v6201 = vpop.f32.mrb[0].mxu0
        %v6202 = vadd.f32 0.0, %v6201
        %v6203 = vpop.f32.mrb[0].mxu0
        %v6204 = vpop.f32.mrb[0].mxu0
        %6205 = vdwg.mxu0
        %6206 = vmatprep.subr.bf16.mxu0 %v6038
        %6207 = vmatpush1.bf16.msra.mxu0 %v6037
        %6208 = vmatprep.subr.bf16.mxu0 %v6042
        %6209 = vmatpush1.bf16.msra.mxu0 %v6041
        %6210 = vmatprep.subr.bf16.mxu0 %v6046
        %6211 = vmatpush1.bf16.msra.mxu0 %v6045
        %6212 = vmatprep.subr.bf16.mxu0 %v6050
        %6213 = vmatpush1.bf16.msra.mxu0 %v6049
        %6214 = vmatprep.subr.bf16.mxu0 %v6054
        %6215 = vmatpush1.bf16.msra.mxu0 %v6053
        %6216 = vmatprep.subr.bf16.mxu0 %v6058
        %6217 = vmatpush1.bf16.msra.mxu0 %v6057
        %6218 = vmatprep.subr.bf16.mxu0 %v6062
        %6219 = vmatpush1.bf16.msra.mxu0 %v6061
        %6220 = vmatprep.subr.bf16.mxu0 %v6066
        %6221 = vmatpush1.bf16.msra.mxu0 %v6065
        %6222 = vmatprep.subr.bf16.mxu0 0
        %6223 = vmatpush1.bf16.msra.mxu0 0
        %6224 = vmatprep.subr.bf16.mxu0 0
        %6225 = vmatpush1.bf16.msra.mxu0 0
        %6226 = vmatprep.subr.bf16.mxu0 0
        %6227 = vmatpush1.bf16.msra.mxu0 0
        %6228 = vmatprep.subr.bf16.mxu0 0
        %6229 = vmatpush1.bf16.msra.mxu0 0
        %6230 = vmatprep.subr.bf16.mxu0 0
        %6231 = vmatpush1.bf16.msra.mxu0 0
        %6232 = vmatprep.subr.bf16.mxu0 0
        %6233 = vmatpush1.bf16.msra.mxu0 0
        %6234 = vmatprep.subr.bf16.mxu0 0
        %6235 = vmatpush1.bf16.msra.mxu0 0
        %6236 = vmatprep.subr.bf16.mxu0 0
        %6237 = vmatpush1.bf16.msra.mxu0 0
        %6238 = vmatprep.mubr.bf16.mxu0 0
        %6239 = vmatmul.mubr.bf16.gmra.mrb[0].mxu0 %v5681
        %v6240 = vpop.f32.mrb[0].mxu0
        %v6241 = vadd.f32 %v6200, %v6240
        %v6242 = vpop.f32.mrb[0].mxu0
        %v6243 = vadd.f32 %v6202, %v6242
        %v6244 = vpop.f32.mrb[0].mxu0
        %v6245 = vpop.f32.mrb[0].mxu0
        %6246 = vdwg.mxu0
        %6247 = vmatprep.subr.bf16.mxu0 %v5976
        %6248 = vmatpush1.bf16.msra.mxu0 %v5975
        %6249 = vmatprep.subr.bf16.mxu0 %v5980
        %6250 = vmatpush1.bf16.msra.mxu0 %v5979
        %6251 = vmatprep.subr.bf16.mxu0 %v5984
        %6252 = vmatpush1.bf16.msra.mxu0 %v5983
        %6253 = vmatprep.subr.bf16.mxu0 %v5988
        %6254 = vmatpush1.bf16.msra.mxu0 %v5987
        %6255 = vmatprep.subr.bf16.mxu0 %v5992
        %6256 = vmatpush1.bf16.msra.mxu0 %v5991
        %6257 = vmatprep.subr.bf16.mxu0 %v5996
        %6258 = vmatpush1.bf16.msra.mxu0 %v5995
        %6259 = vmatprep.subr.bf16.mxu0 %v6000
        %6260 = vmatpush1.bf16.msra.mxu0 %v5999
        %6261 = vmatprep.subr.bf16.mxu0 %v6004
        %6262 = vmatpush1.bf16.msra.mxu0 %v6003
        %6263 = vmatprep.subr.bf16.mxu0 %v6008
        %6264 = vmatpush1.bf16.msra.mxu0 %v6007
        %6265 = vmatprep.subr.bf16.mxu0 %v6012
        %6266 = vmatpush1.bf16.msra.mxu0 %v6011
        %6267 = vmatprep.subr.bf16.mxu0 %v6016
        %6268 = vmatpush1.bf16.msra.mxu0 %v6015
        %6269 = vmatprep.subr.bf16.mxu0 %v6020
        %6270 = vmatpush1.bf16.msra.mxu0 %v6019
        %6271 = vmatprep.subr.bf16.mxu0 %v6024
        %6272 = vmatpush1.bf16.msra.mxu0 %v6023
        %6273 = vmatprep.subr.bf16.mxu0 %v6028
        %6274 = vmatpush1.bf16.msra.mxu0 %v6027
        %6275 = vmatprep.subr.bf16.mxu0 %v6032
        %6276 = vmatpush1.bf16.msra.mxu0 %v6031
        %6277 = vmatprep.subr.bf16.mxu0 %v6036
        %6278 = vmatpush1.bf16.msra.mxu0 %v6035
        %6279 = vmatprep.mubr.bf16.mxu0 %v5678
        %6280 = vmatmul.mubr.bf16.gmra.mrb[0].mxu0 %v5675
        %v6281 = vpop.f32.mrb[0].mxu0
        %v6282 = vadd.f32 0.0, %v6281
        %v6283 = vpop.f32.mrb[0].mxu0
        %v6284 = vadd.f32 0.0, %v6283
        %v6285 = vpop.f32.mrb[0].mxu0
        %v6286 = vpop.f32.mrb[0].mxu0
        %6287 = vdwg.mxu0
        %6288 = vmatprep.subr.bf16.mxu0 %v6040
        %6289 = vmatpush1.bf16.msra.mxu0 %v6039
        %6290 = vmatprep.subr.bf16.mxu0 %v6044
        %6291 = vmatpush1.bf16.msra.mxu0 %v6043
        %6292 = vmatprep.subr.bf16.mxu0 %v6048
        %6293 = vmatpush1.bf16.msra.mxu0 %v6047
        %6294 = vmatprep.subr.bf16.mxu0 %v6052
        %6295 = vmatpush1.bf16.msra.mxu0 %v6051
        %6296 = vmatprep.subr.bf16.mxu0 %v6056
        %6297 = vmatpush1.bf16.msra.mxu0 %v6055
        %6298 = vmatprep.subr.bf16.mxu0 %v6060
        %6299 = vmatpush1.bf16.msra.mxu0 %v6059
        %6300 = vmatprep.subr.bf16.mxu0 %v6064
        %6301 = vmatpush1.bf16.msra.mxu0 %v6063
        %6302 = vmatprep.subr.bf16.mxu0 %v6068
        %6303 = vmatpush1.bf16.msra.mxu0 %v6067
        %6304 = vmatprep.subr.bf16.mxu0 0
        %6305 = vmatpush1.bf16.msra.mxu0 0
        %6306 = vmatprep.subr.bf16.mxu0 0
        %6307 = vmatpush1.bf16.msra.mxu0 0
        %6308 = vmatprep.subr.bf16.mxu0 0
        %6309 = vmatpush1.bf16.msra.mxu0 0
        %6310 = vmatprep.subr.bf16.mxu0 0
        %6311 = vmatpush1.bf16.msra.mxu0 0
        %6312 = vmatprep.subr.bf16.mxu0 0
        %6313 = vmatpush1.bf16.msra.mxu0 0
        %6314 = vmatprep.subr.bf16.mxu0 0
        %6315 = vmatpush1.bf16.msra.mxu0 0
        %6316 = vmatprep.subr.bf16.mxu0 0
        %6317 = vmatpush1.bf16.msra.mxu0 0
        %6318 = vmatprep.subr.bf16.mxu0 0
        %6319 = vmatpush1.bf16.msra.mxu0 0
        %6320 = vmatprep.mubr.bf16.mxu0 0
        %6321 = vmatmul.mubr.bf16.gmra.mrb[0].mxu0 %v5681
        %v6322 = vpop.f32.mrb[0].mxu0
        %v6323 = vadd.f32 %v6282, %v6322
        %v6324 = vpop.f32.mrb[0].mxu0
        %v6325 = vadd.f32 %v6284, %v6324
        %v6326 = vpop.f32.mrb[0].mxu0
        %v6327 = vpop.f32.mrb[0].mxu0
        %6328 = vdwg.mxu0
        %v6329 = vadd.f32 %v5572, %v6241
        %v6330 = vadd.f32 %v5573, %v6243
        %v6331 = vadd.f32 %v5574, %v6323
        %v6332 = vadd.f32 %v5575, %v6325
        %s6333 = scalar_lea.vmem [#allocation9], 3072
        %v6334 = vld [vmem:[%s6333] sm:$0xff]
        %v6335 = vld [vmem:[%s6333 + $0x8] sm:$0xff]
        %v6336 = vld [vmem:[%s6333 + $0x10] sm:$0xff]
        %v6337 = vld [vmem:[%s6333 + $0x18] sm:$0xff]
        %v6338 = vld [vmem:[%s6333 + $0x20] sm:$0xff]
        %v6339 = vld [vmem:[%s6333 + $0x28] sm:$0xff]
        %v6340 = vld [vmem:[%s6333 + $0x30] sm:$0xff]
        %v6341 = vld [vmem:[%s6333 + $0x38] sm:$0xff]
        %v6342 = vld [vmem:[%s6333 + $0x40] sm:$0xff]
        %v6343 = vld [vmem:[%s6333 + $0x48] sm:$0xff]
        %v6344 = vld [vmem:[%s6333 + $0x50] sm:$0xff]
        %v6345 = vld [vmem:[%s6333 + $0x58] sm:$0xff]
        %v6346 = vld [vmem:[%s6333 + $0x60] sm:$0xff]
        %v6347 = vld [vmem:[%s6333 + $0x68] sm:$0xff]
        %v6348 = vld [vmem:[%s6333 + $0x70] sm:$0xff]
        %v6349 = vld [vmem:[%s6333 + $0x78] sm:$0xff]
        %v6350 = vld [vmem:[%s6333 + $0x80] sm:$0xff]
        %v6351 = vld [vmem:[%s6333 + $0x88] sm:$0xff]
        %v6352 = vld [vmem:[%s6333 + $0x90] sm:$0xff]
        %v6353 = vld [vmem:[%s6333 + $0x98] sm:$0xff]
        %v6354 = vld [vmem:[%s6333 + $0xa0] sm:$0xff]
        %v6355 = vld [vmem:[%s6333 + $0xa8] sm:$0xff]
        %v6356 = vld [vmem:[%s6333 + $0xb0] sm:$0xff]
        %v6357 = vld [vmem:[%s6333 + $0xb8] sm:$0xff]
        %v6358 = vld [vmem:[%s6333 + $0xc0] sm:$0xff]
        %v6359 = vld [vmem:[%s6333 + $0xc8] sm:$0xff]
        %v6360 = vld [vmem:[%s6333 + $0xd0] sm:$0xff]
        %v6361 = vld [vmem:[%s6333 + $0xd8] sm:$0xff]
        %v6362 = vld [vmem:[%s6333 + $0xe0] sm:$0xff]
        %v6363 = vld [vmem:[%s6333 + $0xe8] sm:$0xff]
        %v6364 = vld [vmem:[%s6333 + $0xf0] sm:$0xff]
        %v6365 = vld [vmem:[%s6333 + $0xf8] sm:$0xff]
        %v6366 = vld [vmem:[%s6333 + $0x100] sm:$0xff]
        %v6367 = vld [vmem:[%s6333 + $0x108] sm:$0xff]
        %v6368 = vld [vmem:[%s6333 + $0x110] sm:$0xff]
        %v6369 = vld [vmem:[%s6333 + $0x118] sm:$0xff]
        %v6370 = vld [vmem:[%s6333 + $0x120] sm:$0xff]
        %v6371 = vld [vmem:[%s6333 + $0x128] sm:$0xff]
        %v6372 = vld [vmem:[%s6333 + $0x130] sm:$0xff]
        %v6373 = vld [vmem:[%s6333 + $0x138] sm:$0xff]
        %v6374 = vld [vmem:[%s6333 + $0x140] sm:$0xff]
        %v6375 = vld [vmem:[%s6333 + $0x148] sm:$0xff]
        %v6376 = vld [vmem:[%s6333 + $0x150] sm:$0xff]
        %v6377 = vld [vmem:[%s6333 + $0x158] sm:$0xff]
        %v6378 = vld [vmem:[%s6333 + $0x160] sm:$0xff]
        %v6379 = vld [vmem:[%s6333 + $0x168] sm:$0xff]
        %v6380 = vld [vmem:[%s6333 + $0x170] sm:$0xff]
        %v6381 = vld [vmem:[%s6333 + $0x178] sm:$0xff]
        %v6382 = vld [vmem:[%s6333 + $0x180] sm:$0xff]
        %v6383 = vld [vmem:[%s6333 + $0x188] sm:$0xff]
        %v6384 = vld [vmem:[%s6333 + $0x190] sm:$0xff]
        %v6385 = vld [vmem:[%s6333 + $0x198] sm:$0xff]
        %v6386 = vld [vmem:[%s6333 + $0x1a0] sm:$0xff]
        %v6387 = vld [vmem:[%s6333 + $0x1a8] sm:$0xff]
        %v6388 = vld [vmem:[%s6333 + $0x1b0] sm:$0xff]
        %v6389 = vld [vmem:[%s6333 + $0x1b8] sm:$0xff]
        %v6390 = vld [vmem:[%s6333 + $0x1c0] sm:$0xff]
        %v6391 = vld [vmem:[%s6333 + $0x1c8] sm:$0xff]
        %v6392 = vld [vmem:[%s6333 + $0x1d0] sm:$0xff]
        %v6393 = vld [vmem:[%s6333 + $0x1d8] sm:$0xff]
        %v6394 = vld [vmem:[%s6333 + $0x1e0] sm:$0xff]
        %v6395 = vld [vmem:[%s6333 + $0x1e8] sm:$0xff]
        %v6396 = vld [vmem:[%s6333 + $0x1f0] sm:$0xff]
        %v6397 = vld [vmem:[%s6333 + $0x1f8] sm:$0xff]
        %v6398 = vld [vmem:[%s6333 + $0x200] sm:$0xff]
        %v6399 = vld [vmem:[%s6333 + $0x208] sm:$0xff]
        %v6400 = vld [vmem:[%s6333 + $0x210] sm:$0xff]
        %v6401 = vld [vmem:[%s6333 + $0x218] sm:$0xff]
        %v6402 = vld [vmem:[%s6333 + $0x220] sm:$0xff]
        %v6403 = vld [vmem:[%s6333 + $0x228] sm:$0xff]
        %v6404 = vld [vmem:[%s6333 + $0x230] sm:$0xff]
        %v6405 = vld [vmem:[%s6333 + $0x238] sm:$0xff]
        %v6406 = vld [vmem:[%s6333 + $0x240] sm:$0xff]
        %v6407 = vld [vmem:[%s6333 + $0x248] sm:$0xff]
        %v6408 = vld [vmem:[%s6333 + $0x250] sm:$0xff]
        %v6409 = vld [vmem:[%s6333 + $0x258] sm:$0xff]
        %v6410 = vld [vmem:[%s6333 + $0x260] sm:$0xff]
        %v6411 = vld [vmem:[%s6333 + $0x268] sm:$0xff]
        %v6412 = vld [vmem:[%s6333 + $0x270] sm:$0xff]
        %v6413 = vld [vmem:[%s6333 + $0x278] sm:$0xff]
        %v6414 = vld [vmem:[%s6333 + $0x280] sm:$0xff]
        %v6415 = vld [vmem:[%s6333 + $0x288] sm:$0xff]
        %v6416 = vld [vmem:[%s6333 + $0x290] sm:$0xff]
        %v6417 = vld [vmem:[%s6333 + $0x298] sm:$0xff]
        %v6418 = vld [vmem:[%s6333 + $0x2a0] sm:$0xff]
        %v6419 = vld [vmem:[%s6333 + $0x2a8] sm:$0xff]
        %v6420 = vld [vmem:[%s6333 + $0x2b0] sm:$0xff]
        %v6421 = vld [vmem:[%s6333 + $0x2b8] sm:$0xff]
        %v6422 = vld [vmem:[%s6333 + $0x2c0] sm:$0xff]
        %v6423 = vld [vmem:[%s6333 + $0x2c8] sm:$0xff]
        %v6424 = vld [vmem:[%s6333 + $0x2d0] sm:$0xff]
        %v6425 = vld [vmem:[%s6333 + $0x2d8] sm:$0xff]
        %v6426 = vld [vmem:[%s6333 + $0x2e0] sm:$0xff]
        %v6427 = vld [vmem:[%s6333 + $0x2e8] sm:$0xff]
        %v6428 = vld [vmem:[%s6333 + $0x2f0] sm:$0xff]
        %v6429 = vld [vmem:[%s6333 + $0x2f8] sm:$0xff]
        %v6430 = vrot.slane %v3314, 2
        %v6431 = vrot.slane %v3315, 2
        %v6432 = vrot.slane %v3316, 2
        %v6532 = vunpack.c.l.b16 %v6334
        %v6533 = vunpack.c.h.b16 %v6334
        %v6534 = vunpack.c.l.b16 %v6335
        %v6535 = vunpack.c.h.b16 %v6335
        %v6536 = vunpack.c.l.b16 %v6336
        %v6537 = vunpack.c.h.b16 %v6336
        %v6538 = vunpack.c.l.b16 %v6337
        %v6539 = vunpack.c.h.b16 %v6337
        %v6540 = vunpack.c.l.b16 %v6338
        %v6541 = vunpack.c.h.b16 %v6338
        %v6542 = vunpack.c.l.b16 %v6339
        %v6543 = vunpack.c.h.b16 %v6339
        %v6544 = vunpack.c.l.b16 %v6340
        %v6545 = vunpack.c.h.b16 %v6340
        %v6546 = vunpack.c.l.b16 %v6341
        %v6547 = vunpack.c.h.b16 %v6341
        %v6548 = vunpack.c.l.b16 %v6342
        %v6549 = vunpack.c.h.b16 %v6342
        %v6550 = vunpack.c.l.b16 %v6343
        %v6551 = vunpack.c.h.b16 %v6343
        %v6552 = vunpack.c.l.b16 %v6344
        %v6553 = vunpack.c.h.b16 %v6344
        %v6554 = vunpack.c.l.b16 %v6345
        %v6555 = vunpack.c.h.b16 %v6345
        %v6556 = vunpack.c.l.b16 %v6346
        %v6557 = vunpack.c.h.b16 %v6346
        %v6558 = vunpack.c.l.b16 %v6347
        %v6559 = vunpack.c.h.b16 %v6347
        %v6560 = vunpack.c.l.b16 %v6348
        %v6561 = vunpack.c.h.b16 %v6348
        %v6562 = vunpack.c.l.b16 %v6349
        %v6563 = vunpack.c.h.b16 %v6349
        %v6564 = vunpack.c.l.b16 %v6350
        %v6565 = vunpack.c.h.b16 %v6350
        %v6566 = vunpack.c.l.b16 %v6351
        %v6567 = vunpack.c.h.b16 %v6351
        %v6568 = vunpack.c.l.b16 %v6352
        %v6569 = vunpack.c.h.b16 %v6352
        %v6570 = vunpack.c.l.b16 %v6353
        %v6571 = vunpack.c.h.b16 %v6353
        %v6572 = vunpack.c.l.b16 %v6354
        %v6573 = vunpack.c.h.b16 %v6354
        %v6574 = vunpack.c.l.b16 %v6355
        %v6575 = vunpack.c.h.b16 %v6355
        %v6576 = vunpack.c.l.b16 %v6356
        %v6577 = vunpack.c.h.b16 %v6356
        %v6578 = vunpack.c.l.b16 %v6357
        %v6579 = vunpack.c.h.b16 %v6357
        %v6580 = vunpack.c.l.b16 %v6358
        %v6581 = vunpack.c.h.b16 %v6358
        %v6582 = vunpack.c.l.b16 %v6359
        %v6583 = vunpack.c.h.b16 %v6359
        %v6584 = vunpack.c.l.b16 %v6360
        %v6585 = vunpack.c.h.b16 %v6360
        %v6586 = vunpack.c.l.b16 %v6361
        %v6587 = vunpack.c.h.b16 %v6361
        %v6588 = vunpack.c.l.b16 %v6362
        %v6589 = vunpack.c.h.b16 %v6362
        %v6590 = vunpack.c.l.b16 %v6363
        %v6591 = vunpack.c.h.b16 %v6363
        %v6592 = vunpack.c.l.b16 %v6364
        %v6593 = vunpack.c.h.b16 %v6364
        %v6594 = vunpack.c.l.b16 %v6365
        %v6595 = vunpack.c.h.b16 %v6365
        %v6596 = vunpack.c.l.b16 %v6366
        %v6597 = vunpack.c.h.b16 %v6366
        %v6598 = vunpack.c.l.b16 %v6367
        %v6599 = vunpack.c.h.b16 %v6367
        %v6600 = vunpack.c.l.b16 %v6368
        %v6601 = vunpack.c.h.b16 %v6368
        %v6602 = vunpack.c.l.b16 %v6369
        %v6603 = vunpack.c.h.b16 %v6369
        %v6604 = vunpack.c.l.b16 %v6370
        %v6605 = vunpack.c.h.b16 %v6370
        %v6606 = vunpack.c.l.b16 %v6371
        %v6607 = vunpack.c.h.b16 %v6371
        %v6608 = vunpack.c.l.b16 %v6372
        %v6609 = vunpack.c.h.b16 %v6372
        %v6610 = vunpack.c.l.b16 %v6373
        %v6611 = vunpack.c.h.b16 %v6373
        %v6612 = vunpack.c.l.b16 %v6374
        %v6613 = vunpack.c.h.b16 %v6374
        %v6614 = vunpack.c.l.b16 %v6375
        %v6615 = vunpack.c.h.b16 %v6375
        %v6616 = vunpack.c.l.b16 %v6376
        %v6617 = vunpack.c.h.b16 %v6376
        %v6618 = vunpack.c.l.b16 %v6377
        %v6619 = vunpack.c.h.b16 %v6377
        %v6620 = vunpack.c.l.b16 %v6378
        %v6621 = vunpack.c.h.b16 %v6378
        %v6622 = vunpack.c.l.b16 %v6379
        %v6623 = vunpack.c.h.b16 %v6379
        %v6624 = vunpack.c.l.b16 %v6380
        %v6625 = vunpack.c.h.b16 %v6380
        %v6626 = vunpack.c.l.b16 %v6381
        %v6627 = vunpack.c.h.b16 %v6381
        %v6628 = vunpack.c.l.b16 %v6382
        %v6629 = vunpack.c.h.b16 %v6382
        %v6630 = vunpack.c.l.b16 %v6383
        %v6631 = vunpack.c.h.b16 %v6383
        %v6632 = vunpack.c.l.b16 %v6384
        %v6633 = vunpack.c.h.b16 %v6384
        %v6634 = vunpack.c.l.b16 %v6385
        %v6635 = vunpack.c.h.b16 %v6385
        %v6636 = vunpack.c.l.b16 %v6386
        %v6637 = vunpack.c.h.b16 %v6386
        %v6638 = vunpack.c.l.b16 %v6387
        %v6639 = vunpack.c.h.b16 %v6387
        %v6640 = vunpack.c.l.b16 %v6388
        %v6641 = vunpack.c.h.b16 %v6388
        %v6642 = vunpack.c.l.b16 %v6389
        %v6643 = vunpack.c.h.b16 %v6389
        %v6644 = vunpack.c.l.b16 %v6390
        %v6645 = vunpack.c.h.b16 %v6390
        %v6646 = vunpack.c.l.b16 %v6391
        %v6647 = vunpack.c.h.b16 %v6391
        %v6648 = vunpack.c.l.b16 %v6392
        %v6649 = vunpack.c.h.b16 %v6392
        %v6650 = vunpack.c.l.b16 %v6393
        %v6651 = vunpack.c.h.b16 %v6393
        %v6652 = vunpack.c.l.b16 %v6394
        %v6653 = vunpack.c.h.b16 %v6394
        %v6654 = vunpack.c.l.b16 %v6395
        %v6655 = vunpack.c.h.b16 %v6395
        %v6656 = vunpack.c.l.b16 %v6396
        %v6657 = vunpack.c.h.b16 %v6396
        %v6658 = vunpack.c.l.b16 %v6397
        %v6659 = vunpack.c.h.b16 %v6397
        %v6660 = vunpack.c.l.b16 %v6398
        %v6661 = vunpack.c.h.b16 %v6398
        %v6662 = vunpack.c.l.b16 %v6399
        %v6663 = vunpack.c.h.b16 %v6399
        %v6664 = vunpack.c.l.b16 %v6400
        %v6665 = vunpack.c.h.b16 %v6400
        %v6666 = vunpack.c.l.b16 %v6401
        %v6667 = vunpack.c.h.b16 %v6401
        %v6668 = vunpack.c.l.b16 %v6402
        %v6669 = vunpack.c.h.b16 %v6402
        %v6670 = vunpack.c.l.b16 %v6403
        %v6671 = vunpack.c.h.b16 %v6403
        %v6672 = vunpack.c.l.b16 %v6404
        %v6673 = vunpack.c.h.b16 %v6404
        %v6674 = vunpack.c.l.b16 %v6405
        %v6675 = vunpack.c.h.b16 %v6405
        %v6676 = vunpack.c.l.b16 %v6406
        %v6677 = vunpack.c.h.b16 %v6406
        %v6678 = vunpack.c.l.b16 %v6407
        %v6679 = vunpack.c.h.b16 %v6407
        %v6680 = vunpack.c.l.b16 %v6408
        %v6681 = vunpack.c.h.b16 %v6408
        %v6682 = vunpack.c.l.b16 %v6409
        %v6683 = vunpack.c.h.b16 %v6409
        %v6684 = vunpack.c.l.b16 %v6410
        %v6685 = vunpack.c.h.b16 %v6410
        %v6686 = vunpack.c.l.b16 %v6411
        %v6687 = vunpack.c.h.b16 %v6411
        %v6688 = vunpack.c.l.b16 %v6412
        %v6689 = vunpack.c.h.b16 %v6412
        %v6690 = vunpack.c.l.b16 %v6413
        %v6691 = vunpack.c.h.b16 %v6413
        %v6692 = vunpack.c.l.b16 %v6414
        %v6693 = vunpack.c.h.b16 %v6414
        %v6694 = vunpack.c.l.b16 %v6415
        %v6695 = vunpack.c.h.b16 %v6415
        %v6696 = vunpack.c.l.b16 %v6416
        %v6697 = vunpack.c.h.b16 %v6416
        %v6698 = vunpack.c.l.b16 %v6417
        %v6699 = vunpack.c.h.b16 %v6417
        %v6700 = vunpack.c.l.b16 %v6418
        %v6701 = vunpack.c.h.b16 %v6418
        %v6702 = vunpack.c.l.b16 %v6419
        %v6703 = vunpack.c.h.b16 %v6419
        %v6704 = vunpack.c.l.b16 %v6420
        %v6705 = vunpack.c.h.b16 %v6420
        %v6706 = vunpack.c.l.b16 %v6421
        %v6707 = vunpack.c.h.b16 %v6421
        %v6708 = vunpack.c.l.b16 %v6422
        %v6709 = vunpack.c.h.b16 %v6422
        %v6710 = vunpack.c.l.b16 %v6423
        %v6711 = vunpack.c.h.b16 %v6423
        %v6712 = vunpack.c.l.b16 %v6424
        %v6713 = vunpack.c.h.b16 %v6424
        %v6714 = vunpack.c.l.b16 %v6425
        %v6715 = vunpack.c.h.b16 %v6425
        %v6716 = vunpack.c.l.b16 %v6426
        %v6717 = vunpack.c.h.b16 %v6426
        %v6718 = vunpack.c.l.b16 %v6427
        %v6719 = vunpack.c.h.b16 %v6427
        %v6720 = vunpack.c.l.b16 %v6428
        %v6721 = vunpack.c.h.b16 %v6428
        %v6722 = vunpack.c.l.b16 %v6429
        %v6723 = vunpack.c.h.b16 %v6429
        %v6724 = vpack.c.b16 %v6536, %v6532
        %v6725 = vpack.c.b16 %v6537, %v6533
        %v6726 = vpack.c.b16 %v6538, %v6534
        %v6727 = vpack.c.b16 %v6539, %v6535
        %v6728 = vpack.c.b16 %v6544, %v6540
        %v6729 = vpack.c.b16 %v6545, %v6541
        %v6730 = vpack.c.b16 %v6546, %v6542
        %v6731 = vpack.c.b16 %v6547, %v6543
        %v6732 = vpack.c.b16 %v6552, %v6548
        %v6733 = vpack.c.b16 %v6553, %v6549
        %v6734 = vpack.c.b16 %v6554, %v6550
        %v6735 = vpack.c.b16 %v6555, %v6551
        %v6736 = vpack.c.b16 %v6560, %v6556
        %v6737 = vpack.c.b16 %v6561, %v6557
        %v6738 = vpack.c.b16 %v6562, %v6558
        %v6739 = vpack.c.b16 %v6563, %v6559
        %v6740 = vpack.c.b16 %v6568, %v6564
        %v6741 = vpack.c.b16 %v6569, %v6565
        %v6742 = vpack.c.b16 %v6570, %v6566
        %v6743 = vpack.c.b16 %v6571, %v6567
        %v6744 = vpack.c.b16 %v6576, %v6572
        %v6745 = vpack.c.b16 %v6577, %v6573
        %v6746 = vpack.c.b16 %v6578, %v6574
        %v6747 = vpack.c.b16 %v6579, %v6575
        %v6748 = vpack.c.b16 %v6584, %v6580
        %v6749 = vpack.c.b16 %v6585, %v6581
        %v6750 = vpack.c.b16 %v6586, %v6582
        %v6751 = vpack.c.b16 %v6587, %v6583
        %v6752 = vpack.c.b16 %v6592, %v6588
        %v6753 = vpack.c.b16 %v6593, %v6589
        %v6754 = vpack.c.b16 %v6594, %v6590
        %v6755 = vpack.c.b16 %v6595, %v6591
        %v6756 = vpack.c.b16 %v6600, %v6596
        %v6757 = vpack.c.b16 %v6601, %v6597
        %v6758 = vpack.c.b16 %v6602, %v6598
        %v6759 = vpack.c.b16 %v6603, %v6599
        %v6760 = vpack.c.b16 %v6608, %v6604
        %v6761 = vpack.c.b16 %v6609, %v6605
        %v6762 = vpack.c.b16 %v6610, %v6606
        %v6763 = vpack.c.b16 %v6611, %v6607
        %v6764 = vpack.c.b16 %v6616, %v6612
        %v6765 = vpack.c.b16 %v6617, %v6613
        %v6766 = vpack.c.b16 %v6618, %v6614
        %v6767 = vpack.c.b16 %v6619, %v6615
        %v6768 = vpack.c.b16 %v6624, %v6620
        %v6769 = vpack.c.b16 %v6625, %v6621
        %v6770 = vpack.c.b16 %v6626, %v6622
        %v6771 = vpack.c.b16 %v6627, %v6623
        %v6772 = vpack.c.b16 %v6632, %v6628
        %v6773 = vpack.c.b16 %v6633, %v6629
        %v6774 = vpack.c.b16 %v6634, %v6630
        %v6775 = vpack.c.b16 %v6635, %v6631
        %v6776 = vpack.c.b16 %v6640, %v6636
        %v6777 = vpack.c.b16 %v6641, %v6637
        %v6778 = vpack.c.b16 %v6642, %v6638
        %v6779 = vpack.c.b16 %v6643, %v6639
        %v6780 = vpack.c.b16 %v6648, %v6644
        %v6781 = vpack.c.b16 %v6649, %v6645
        %v6782 = vpack.c.b16 %v6650, %v6646
        %v6783 = vpack.c.b16 %v6651, %v6647
        %v6784 = vpack.c.b16 %v6656, %v6652
        %v6785 = vpack.c.b16 %v6657, %v6653
        %v6786 = vpack.c.b16 %v6658, %v6654
        %v6787 = vpack.c.b16 %v6659, %v6655
        %v6788 = vpack.c.b16 %v6664, %v6660
        %v6789 = vpack.c.b16 %v6665, %v6661
        %v6790 = vpack.c.b16 %v6666, %v6662
        %v6791 = vpack.c.b16 %v6667, %v6663
        %v6792 = vpack.c.b16 %v6672, %v6668
        %v6793 = vpack.c.b16 %v6673, %v6669
        %v6794 = vpack.c.b16 %v6674, %v6670
        %v6795 = vpack.c.b16 %v6675, %v6671
        %v6796 = vpack.c.b16 %v6680, %v6676
        %v6797 = vpack.c.b16 %v6681, %v6677
        %v6798 = vpack.c.b16 %v6682, %v6678
        %v6799 = vpack.c.b16 %v6683, %v6679
        %v6800 = vpack.c.b16 %v6688, %v6684
        %v6801 = vpack.c.b16 %v6689, %v6685
        %v6802 = vpack.c.b16 %v6690, %v6686
        %v6803 = vpack.c.b16 %v6691, %v6687
        %v6804 = vpack.c.b16 %v6696, %v6692
        %v6805 = vpack.c.b16 %v6697, %v6693
        %v6806 = vpack.c.b16 %v6698, %v6694
        %v6807 = vpack.c.b16 %v6699, %v6695
        %v6808 = vpack.c.b16 %v6704, %v6700
        %v6809 = vpack.c.b16 %v6705, %v6701
        %v6810 = vpack.c.b16 %v6706, %v6702
        %v6811 = vpack.c.b16 %v6707, %v6703
        %v6812 = vpack.c.b16 %v6712, %v6708
        %v6813 = vpack.c.b16 %v6713, %v6709
        %v6814 = vpack.c.b16 %v6714, %v6710
        %v6815 = vpack.c.b16 %v6715, %v6711
        %v6816 = vpack.c.b16 %v6720, %v6716
        %v6817 = vpack.c.b16 %v6721, %v6717
        %v6818 = vpack.c.b16 %v6722, %v6718
        %v6819 = vpack.c.b16 %v6723, %v6719
        %6916 = vmatprep.subr.bf16.mxu0 %v6725
        %6917 = vmatpush1.bf16.msra.mxu0 %v6724
        %6918 = vmatprep.subr.bf16.mxu0 %v6729
        %6919 = vmatpush1.bf16.msra.mxu0 %v6728
        %6920 = vmatprep.subr.bf16.mxu0 %v6733
        %6921 = vmatpush1.bf16.msra.mxu0 %v6732
        %6922 = vmatprep.subr.bf16.mxu0 %v6737
        %6923 = vmatpush1.bf16.msra.mxu0 %v6736
        %6924 = vmatprep.subr.bf16.mxu0 %v6741
        %6925 = vmatpush1.bf16.msra.mxu0 %v6740
        %6926 = vmatprep.subr.bf16.mxu0 %v6745
        %6927 = vmatpush1.bf16.msra.mxu0 %v6744
        %6928 = vmatprep.subr.bf16.mxu0 %v6749
        %6929 = vmatpush1.bf16.msra.mxu0 %v6748
        %6930 = vmatprep.subr.bf16.mxu0 %v6753
        %6931 = vmatpush1.bf16.msra.mxu0 %v6752
        %6932 = vmatprep.subr.bf16.mxu0 %v6757
        %6933 = vmatpush1.bf16.msra.mxu0 %v6756
        %6934 = vmatprep.subr.bf16.mxu0 %v6761
        %6935 = vmatpush1.bf16.msra.mxu0 %v6760
        %6936 = vmatprep.subr.bf16.mxu0 %v6765
        %6937 = vmatpush1.bf16.msra.mxu0 %v6764
        %6938 = vmatprep.subr.bf16.mxu0 %v6769
        %6939 = vmatpush1.bf16.msra.mxu0 %v6768
        %6940 = vmatprep.subr.bf16.mxu0 %v6773
        %6941 = vmatpush1.bf16.msra.mxu0 %v6772
        %6942 = vmatprep.subr.bf16.mxu0 %v6777
        %6943 = vmatpush1.bf16.msra.mxu0 %v6776
        %6944 = vmatprep.subr.bf16.mxu0 %v6781
        %6945 = vmatpush1.bf16.msra.mxu0 %v6780
        %6946 = vmatprep.subr.bf16.mxu0 %v6785
        %6947 = vmatpush1.bf16.msra.mxu0 %v6784
        %6948 = vmatprep.mubr.bf16.mxu0 %v6431
        %6949 = vmatmul.mubr.bf16.gmra.mrb[0].mxu0 %v6430
        %v6950 = vpop.f32.mrb[0].mxu0
        %v6951 = vadd.f32 0.0, %v6950
        %v6952 = vpop.f32.mrb[0].mxu0
        %v6953 = vadd.f32 0.0, %v6952
        %v6954 = vpop.f32.mrb[0].mxu0
        %v6955 = vpop.f32.mrb[0].mxu0
        %6956 = vdwg.mxu0
        %6957 = vmatprep.subr.bf16.mxu0 %v6789
        %6958 = vmatpush1.bf16.msra.mxu0 %v6788
        %6959 = vmatprep.subr.bf16.mxu0 %v6793
        %6960 = vmatpush1.bf16.msra.mxu0 %v6792
        %6961 = vmatprep.subr.bf16.mxu0 %v6797
        %6962 = vmatpush1.bf16.msra.mxu0 %v6796
        %6963 = vmatprep.subr.bf16.mxu0 %v6801
        %6964 = vmatpush1.bf16.msra.mxu0 %v6800
        %6965 = vmatprep.subr.bf16.mxu0 %v6805
        %6966 = vmatpush1.bf16.msra.mxu0 %v6804
        %6967 = vmatprep.subr.bf16.mxu0 %v6809
        %6968 = vmatpush1.bf16.msra.mxu0 %v6808
        %6969 = vmatprep.subr.bf16.mxu0 %v6813
        %6970 = vmatpush1.bf16.msra.mxu0 %v6812
        %6971 = vmatprep.subr.bf16.mxu0 %v6817
        %6972 = vmatpush1.bf16.msra.mxu0 %v6816
        %6973 = vmatprep.subr.bf16.mxu0 0
        %6974 = vmatpush1.bf16.msra.mxu0 0
        %6975 = vmatprep.subr.bf16.mxu0 0
        %6976 = vmatpush1.bf16.msra.mxu0 0
        %6977 = vmatprep.subr.bf16.mxu0 0
        %6978 = vmatpush1.bf16.msra.mxu0 0
        %6979 = vmatprep.subr.bf16.mxu0 0
        %6980 = vmatpush1.bf16.msra.mxu0 0
        %6981 = vmatprep.subr.bf16.mxu0 0
        %6982 = vmatpush1.bf16.msra.mxu0 0
        %6983 = vmatprep.subr.bf16.mxu0 0
        %6984 = vmatpush1.bf16.msra.mxu0 0
        %6985 = vmatprep.subr.bf16.mxu0 0
        %6986 = vmatpush1.bf16.msra.mxu0 0
        %6987 = vmatprep.subr.bf16.mxu0 0
        %6988 = vmatpush1.bf16.msra.mxu0 0
        %6989 = vmatprep.mubr.bf16.mxu0 0
        %6990 = vmatmul.mubr.bf16.gmra.mrb[0].mxu0 %v6432
        %v6991 = vpop.f32.mrb[0].mxu0
        %v6992 = vadd.f32 %v6951, %v6991
        %v6993 = vpop.f32.mrb[0].mxu0
        %v6994 = vadd.f32 %v6953, %v6993
        %v6995 = vpop.f32.mrb[0].mxu0
        %v6996 = vpop.f32.mrb[0].mxu0
        %6997 = vdwg.mxu0
        %6998 = vmatprep.subr.bf16.mxu0 %v6727
        %6999 = vmatpush1.bf16.msra.mxu0 %v6726
        %7000 = vmatprep.subr.bf16.mxu0 %v6731
        %7001 = vmatpush1.bf16.msra.mxu0 %v6730
        %7002 = vmatprep.subr.bf16.mxu0 %v6735
        %7003 = vmatpush1.bf16.msra.mxu0 %v6734
        %7004 = vmatprep.subr.bf16.mxu0 %v6739
        %7005 = vmatpush1.bf16.msra.mxu0 %v6738
        %7006 = vmatprep.subr.bf16.mxu0 %v6743
        %7007 = vmatpush1.bf16.msra.mxu0 %v6742
        %7008 = vmatprep.subr.bf16.mxu0 %v6747
        %7009 = vmatpush1.bf16.msra.mxu0 %v6746
        %7010 = vmatprep.subr.bf16.mxu0 %v6751
        %7011 = vmatpush1.bf16.msra.mxu0 %v6750
        %7012 = vmatprep.subr.bf16.mxu0 %v6755
        %7013 = vmatpush1.bf16.msra.mxu0 %v6754
        %7014 = vmatprep.subr.bf16.mxu0 %v6759
        %7015 = vmatpush1.bf16.msra.mxu0 %v6758
        %7016 = vmatprep.subr.bf16.mxu0 %v6763
        %7017 = vmatpush1.bf16.msra.mxu0 %v6762
        %7018 = vmatprep.subr.bf16.mxu0 %v6767
        %7019 = vmatpush1.bf16.msra.mxu0 %v6766
        %7020 = vmatprep.subr.bf16.mxu0 %v6771
        %7021 = vmatpush1.bf16.msra.mxu0 %v6770
        %7022 = vmatprep.subr.bf16.mxu0 %v6775
        %7023 = vmatpush1.bf16.msra.mxu0 %v6774
        %7024 = vmatprep.subr.bf16.mxu0 %v6779
        %7025 = vmatpush1.bf16.msra.mxu0 %v6778
        %7026 = vmatprep.subr.bf16.mxu0 %v6783
        %7027 = vmatpush1.bf16.msra.mxu0 %v6782
        %7028 = vmatprep.subr.bf16.mxu0 %v6787
        %7029 = vmatpush1.bf16.msra.mxu0 %v6786
        %7030 = vmatprep.mubr.bf16.mxu0 %v6431
        %7031 = vmatmul.mubr.bf16.gmra.mrb[0].mxu0 %v6430
        %v7032 = vpop.f32.mrb[0].mxu0
        %v7033 = vadd.f32 0.0, %v7032
        %v7034 = vpop.f32.mrb[0].mxu0
        %v7035 = vadd.f32 0.0, %v7034
        %v7036 = vpop.f32.mrb[0].mxu0
        %v7037 = vpop.f32.mrb[0].mxu0
        %7038 = vdwg.mxu0
        %7039 = vmatprep.subr.bf16.mxu0 %v6791
        %7040 = vmatpush1.bf16.msra.mxu0 %v6790
        %7041 = vmatprep.subr.bf16.mxu0 %v6795
        %7042 = vmatpush1.bf16.msra.mxu0 %v6794
        %7043 = vmatprep.subr.bf16.mxu0 %v6799
        %7044 = vmatpush1.bf16.msra.mxu0 %v6798
        %7045 = vmatprep.subr.bf16.mxu0 %v6803
        %7046 = vmatpush1.bf16.msra.mxu0 %v6802
        %7047 = vmatprep.subr.bf16.mxu0 %v6807
        %7048 = vmatpush1.bf16.msra.mxu0 %v6806
        %7049 = vmatprep.subr.bf16.mxu0 %v6811
        %7050 = vmatpush1.bf16.msra.mxu0 %v6810
        %7051 = vmatprep.subr.bf16.mxu0 %v6815
        %7052 = vmatpush1.bf16.msra.mxu0 %v6814
        %7053 = vmatprep.subr.bf16.mxu0 %v6819
        %7054 = vmatpush1.bf16.msra.mxu0 %v6818
        %7055 = vmatprep.subr.bf16.mxu0 0
        %7056 = vmatpush1.bf16.msra.mxu0 0
        %7057 = vmatprep.subr.bf16.mxu0 0
        %7058 = vmatpush1.bf16.msra.mxu0 0
        %7059 = vmatprep.subr.bf16.mxu0 0
        %7060 = vmatpush1.bf16.msra.mxu0 0
        %7061 = vmatprep.subr.bf16.mxu0 0
        %7062 = vmatpush1.bf16.msra.mxu0 0
        %7063 = vmatprep.subr.bf16.mxu0 0
        %7064 = vmatpush1.bf16.msra.mxu0 0
        %7065 = vmatprep.subr.bf16.mxu0 0
        %7066 = vmatpush1.bf16.msra.mxu0 0
        %7067 = vmatprep.subr.bf16.mxu0 0
        %7068 = vmatpush1.bf16.msra.mxu0 0
        %7069 = vmatprep.subr.bf16.mxu0 0
        %7070 = vmatpush1.bf16.msra.mxu0 0
        %7071 = vmatprep.mubr.bf16.mxu0 0
        %7072 = vmatmul.mubr.bf16.gmra.mrb[0].mxu0 %v6432
        %v7073 = vpop.f32.mrb[0].mxu0
        %v7074 = vadd.f32 %v7033, %v7073
        %v7075 = vpop.f32.mrb[0].mxu0
        %v7076 = vadd.f32 %v7035, %v7075
        %v7077 = vpop.f32.mrb[0].mxu0
        %v7078 = vpop.f32.mrb[0].mxu0
        %7079 = vdwg.mxu0
        %v7080 = vadd.f32 %v6329, %v6992
        %v7081 = vadd.f32 %v6330, %v6994
        %v7082 = vadd.f32 %v6331, %v7074
        %v7083 = vadd.f32 %v6332, %v7076
        %v7084 = vld [vmem:[#allocation10] sm:$0xf]
        %v7086 = vlaneseq
        %v7087 = vshrl.u32 %v7086, 7
        %v7088 = vsub.s32 0, %v7087
        %v7089 = vrot.slane %v7084, %v7088
        %v7090 = vlaneseq
        %v7091 = vshrl.u32 %v7090, 7
        %v7092 = vsub.s32 1, %v7091
        %v7093 = vrot.slane %v7084, %v7092
        %v7094 = vlaneseq
        %v7095 = vshrl.u32 %v7094, 7
        %v7096 = vsub.s32 2, %v7095
        %v7097 = vrot.slane %v7084, %v7096
        %v7098 = vlaneseq
        %v7099 = vshrl.u32 %v7098, 7
        %v7100 = vsub.s32 3, %v7099
        %v7101 = vrot.slane %v7084, %v7100
        %v7106 = vadd.f32 %v7080, %v7089
        %v7107 = vadd.f32 %v7081, %v7093
        %v7108 = vadd.f32 %v7082, %v7097
        %v7109 = vadd.f32 %v7083, %v7101
        %7114 = vrot.lane.b32.xlu0 %v7106, 64
        %v7115 = vpop.permute.xlu0 %7114
        %7116 = vrot.lane.b32.xlu0 %v7107, 64
        %v7117 = vpop.permute.xlu0 %7116
        %7118 = vrot.lane.b32.xlu0 %v7108, 64
        %v7119 = vpop.permute.xlu0 %7118
        %7120 = vrot.lane.b32.xlu0 %v7109, 64
        %v7121 = vpop.permute.xlu0 %7120
        %vm7122 = vcmask 523264
        %v7123 = vsel %vm7122, %v7115, %v7117
        %v7124 = vsel %vm7122, %v7117, %v7119
        %v7125 = vsel %vm7122, %v7119, %v7121
        %v7130 = vmax.f32 %v7106, %v7123
        %v7131 = vmax.f32 %v7107, %v7124
        %v7132 = vmax.f32 %v7108, %v7125
        %v7133 = vmax.f32 %v7109, %v7121
        %v7138 = vrot.slane %v7130, 1
        %v7139 = vrot.slane %v7131, 1
        %v7140 = vrot.slane %v7132, 1
        %v7141 = vrot.slane %v7133, 1
        %v7146 = vmax.f32 %v7130, %v7138
        %v7147 = vmax.f32 %v7131, %v7139
        %v7148 = vmax.f32 %v7132, %v7140
        %v7149 = vmax.f32 %v7133, %v7141
        %v7150 = vld [vmem:[#allocation12] sm:$0xf]
        %vm7151 = vcmask 56320
        %v7153 = vsel %vm7151, %v7150, 0
        %v7156 = vsel %vm1892, %v7146, 0
        %v7159 = vsel %vm1892, %v7147, 0
        %v7162 = vsel %vm1892, %v7148, 0
        %v7165 = vsel %vm1892, %v7149, 0
        %7167 = vmatprep.subr.mxu0 %v7159
        %7168 = vmatpush1.msra.mxu0 %v7156
        %7169 = vmatprep.subr.mxu0 0.0
        %7170 = vmatpush1.msra.mxu0 0.0
        %7171 = vmatprep.subr.mxu0 0.0
        %7172 = vmatpush1.msra.mxu0 0.0
        %7173 = vmatprep.subr.mxu0 0.0
        %7174 = vmatpush1.msra.mxu0 0.0
        %7175 = vmatprep.subr.mxu0 0.0
        %7176 = vmatpush1.msra.mxu0 0.0
        %7177 = vmatprep.subr.mxu0 0.0
        %7178 = vmatpush1.msra.mxu0 0.0
        %7179 = vmatprep.subr.mxu0 0.0
        %7180 = vmatpush1.msra.mxu0 0.0
        %7181 = vmatprep.subr.mxu0 0.0
        %7182 = vmatpush1.msra.mxu0 0.0
        %7183 = vmatprep.subr.mxu0 0.0
        %7184 = vmatpush1.msra.mxu0 0.0
        %7185 = vmatprep.subr.mxu0 0.0
        %7186 = vmatpush1.msra.mxu0 0.0
        %7187 = vmatprep.subr.mxu0 0.0
        %7188 = vmatpush1.msra.mxu0 0.0
        %7189 = vmatprep.subr.mxu0 0.0
        %7190 = vmatpush1.msra.mxu0 0.0
        %7191 = vmatprep.subr.mxu0 0.0
        %7192 = vmatpush1.msra.mxu0 0.0
        %7193 = vmatprep.subr.mxu0 0.0
        %7194 = vmatpush1.msra.mxu0 0.0
        %7195 = vmatprep.subr.mxu0 0.0
        %7196 = vmatpush1.msra.mxu0 0.0
        %7197 = vmatprep.subr.mxu0 0.0
        %7198 = vmatpush1.msra.mxu0 0.0
        %7199 = vmatprep.subr.mxu0 0.0
        %7200 = vmatpush1.msra.mxu0 0.0
        %7201 = vmatprep.subr.mxu0 0.0
        %7202 = vmatpush1.msra.mxu0 0.0
        %7203 = vmatprep.subr.mxu0 0.0
        %7204 = vmatpush1.msra.mxu0 0.0
        %7205 = vmatprep.subr.mxu0 0.0
        %7206 = vmatpush1.msra.mxu0 0.0
        %7207 = vmatprep.subr.mxu0 0.0
        %7208 = vmatpush1.msra.mxu0 0.0
        %7209 = vmatprep.subr.mxu0 0.0
        %7210 = vmatpush1.msra.mxu0 0.0
        %7211 = vmatprep.subr.mxu0 0.0
        %7212 = vmatpush1.msra.mxu0 0.0
        %7213 = vmatprep.subr.mxu0 0.0
        %7214 = vmatpush1.msra.mxu0 0.0
        %7215 = vmatprep.subr.mxu0 0.0
        %7216 = vmatpush1.msra.mxu0 0.0
        %7217 = vmatprep.subr.mxu0 0.0
        %7218 = vmatpush1.msra.mxu0 0.0
        %7219 = vmatprep.subr.mxu0 0.0
        %7220 = vmatpush1.msra.mxu0 0.0
        %7221 = vmatprep.subr.mxu0 0.0
        %7222 = vmatpush1.msra.mxu0 0.0
        %7223 = vmatprep.subr.mxu0 0.0
        %7224 = vmatpush1.msra.mxu0 0.0
        %7225 = vmatprep.subr.mxu0 0.0
        %7226 = vmatpush1.msra.mxu0 0.0
        %7227 = vmatprep.subr.mxu0 0.0
        %7228 = vmatpush1.msra.mxu0 0.0
        %7229 = vmatprep.subr.mxu0 0.0
        %7230 = vmatpush1.msra.mxu0 0.0
        %7231 = vmatprep.mubr.f32.mxu0 0.0
        %7232 = vmatmul.mubr.f32.gmra.mrb[0].mxu0 %v7153
        %v7233 = vpop.f32.mrb[0].mxu0
        %v7234 = vadd.f32 0.0, %v7233
        %v7235 = vpop.f32.mrb[0].mxu0
        %v7236 = vadd.f32 0.0, %v7235
        %7237 = vdwg.mxu0
        %7238 = vmatprep.subr.mxu0 %v7165
        %7239 = vmatpush1.msra.mxu0 %v7162
        %7240 = vmatprep.subr.mxu0 0.0
        %7241 = vmatpush1.msra.mxu0 0.0
        %7242 = vmatprep.subr.mxu0 0.0
        %7243 = vmatpush1.msra.mxu0 0.0
        %7244 = vmatprep.subr.mxu0 0.0
        %7245 = vmatpush1.msra.mxu0 0.0
        %7246 = vmatprep.subr.mxu0 0.0
        %7247 = vmatpush1.msra.mxu0 0.0
        %7248 = vmatprep.subr.mxu0 0.0
        %7249 = vmatpush1.msra.mxu0 0.0
        %7250 = vmatprep.subr.mxu0 0.0
        %7251 = vmatpush1.msra.mxu0 0.0
        %7252 = vmatprep.subr.mxu0 0.0
        %7253 = vmatpush1.msra.mxu0 0.0
        %7254 = vmatprep.subr.mxu0 0.0
        %7255 = vmatpush1.msra.mxu0 0.0
        %7256 = vmatprep.subr.mxu0 0.0
        %7257 = vmatpush1.msra.mxu0 0.0
        %7258 = vmatprep.subr.mxu0 0.0
        %7259 = vmatpush1.msra.mxu0 0.0
        %7260 = vmatprep.subr.mxu0 0.0
        %7261 = vmatpush1.msra.mxu0 0.0
        %7262 = vmatprep.subr.mxu0 0.0
        %7263 = vmatpush1.msra.mxu0 0.0
        %7264 = vmatprep.subr.mxu0 0.0
        %7265 = vmatpush1.msra.mxu0 0.0
        %7266 = vmatprep.subr.mxu0 0.0
        %7267 = vmatpush1.msra.mxu0 0.0
        %7268 = vmatprep.subr.mxu0 0.0
        %7269 = vmatpush1.msra.mxu0 0.0
        %7270 = vmatprep.subr.mxu0 0.0
        %7271 = vmatpush1.msra.mxu0 0.0
        %7272 = vmatprep.subr.mxu0 0.0
        %7273 = vmatpush1.msra.mxu0 0.0
        %7274 = vmatprep.subr.mxu0 0.0
        %7275 = vmatpush1.msra.mxu0 0.0
        %7276 = vmatprep.subr.mxu0 0.0
        %7277 = vmatpush1.msra.mxu0 0.0
        %7278 = vmatprep.subr.mxu0 0.0
        %7279 = vmatpush1.msra.mxu0 0.0
        %7280 = vmatprep.subr.mxu0 0.0
        %7281 = vmatpush1.msra.mxu0 0.0
        %7282 = vmatprep.subr.mxu0 0.0
        %7283 = vmatpush1.msra.mxu0 0.0
        %7284 = vmatprep.subr.mxu0 0.0
        %7285 = vmatpush1.msra.mxu0 0.0
        %7286 = vmatprep.subr.mxu0 0.0
        %7287 = vmatpush1.msra.mxu0 0.0
        %7288 = vmatprep.subr.mxu0 0.0
        %7289 = vmatpush1.msra.mxu0 0.0
        %7290 = vmatprep.subr.mxu0 0.0
        %7291 = vmatpush1.msra.mxu0 0.0
        %7292 = vmatprep.subr.mxu0 0.0
        %7293 = vmatpush1.msra.mxu0 0.0
        %7294 = vmatprep.subr.mxu0 0.0
        %7295 = vmatpush1.msra.mxu0 0.0
        %7296 = vmatprep.subr.mxu0 0.0
        %7297 = vmatpush1.msra.mxu0 0.0
        %7298 = vmatprep.subr.mxu0 0.0
        %7299 = vmatpush1.msra.mxu0 0.0
        %7300 = vmatprep.subr.mxu0 0.0
        %7301 = vmatpush1.msra.mxu0 0.0
        %7302 = vmatprep.mubr.f32.mxu0 0.0
        %7303 = vmatmul.mubr.f32.gmra.mrb[0].mxu0 %v7153
        %v7304 = vpop.f32.mrb[0].mxu0
        %v7305 = vadd.f32 0.0, %v7304
        %v7306 = vpop.f32.mrb[0].mxu0
        %v7307 = vadd.f32 0.0, %v7306
        %7308 = vdwg.mxu0
        %7310 = vrot.lane.b32.xlu0 %v7236, 64
        %v7311 = vpop.permute.xlu0 %7310
        %7314 = vrot.lane.b32.xlu0 %v7307, 64
        %v7315 = vpop.permute.xlu0 %7314
        %v7317 = vsel %vm7122, %v7234, %v7311
        %v7318 = vsel %vm7122, %v7305, %v7315
        %v7321 = vcombine.low %v7317, %v7318
        %7323 = vst [vmem:[%s401] sm:$0xff] %v7321
        %p7324 = scmp.lt.s32.totalorder %s23, 1
        %s7325 = scalar_select %p7324, %s23, 1
        %s7326 = smul.addr %s7325, 2
        %s7327 = smul.addr %s7326, 4
        %s7328 = scalar_lea.vmem %s8, %s7327
        // Predicated region
        $region81: #{stem_forward.1} parent=51 // pred_check
          %p7329 = pneg %p214
        $region82: #{stem_forward.1} parent=51 // pred_check_branch
          %7331 = sbr.rel (%p7329) target = $region84
        $region83: #{stem_forward.1} parent=51 // pred_region
          _
        $region84: #{stem_forward.1} parent=51 // pred_fallthru
          _
      $region52: #{stem_forward.1} parent=5 // pred_fallthru
        _
      %p7332 = scmp.le.s32.totalorder 2, %s18
      // Predicated region
      $region85: #{stem_forward.1} parent=5 // pred_check
        %p7333 = pneg %p7332
      $region86: #{stem_forward.1} parent=5 // pred_check_branch
        %7335 = sbr.rel (%p7333) target = $region88
      $region87: #{stem_forward.1} parent=5 // pred_region
        %s7336 = ssub.s32 %s18, 2
        // Predicated region
        $region89: #{stem_forward.1} parent=87 // pred_check
          %p7337 = pneg %p220
        $region90: #{stem_forward.1} parent=87 // pred_check_branch
          %7339 = sbr.rel (%p7337) target = $region92
        $region91: #{stem_forward.1} parent=87 // pred_region
          %p7340 = scmp.lt.s32.totalorder %s24, 1
          %s7341 = scalar_select %p7340, %s24, 1
          %s7342 = smul.addr %s7341, 2
          %s7343 = smul.addr %s7342, 4
          %s7344 = scalar_lea.vmem %s8, %s7343
        $region92: #{stem_forward.1} parent=87 // pred_fallthru
          _
      $region88: #{stem_forward.1} parent=5 // pred_fallthru
        _
    $region6: #{stem_forward.1} parent=1 // loop_footer
      %s22 = sadd.s32 1, %s18
    $region7: #{stem_forward.1} parent=1 // loop_footer_branch
      %17 = sbr.rel target = $region3
    $region8: #{stem_forward.1} parent=1 // loop_exit
      _
    %7345 = vsyncpa [#allocation3], 1
    %s7346 = scalar_lea.sflag [#allocation3], 1
    %7347 = vsyncpa %s7346, 1
    %7348 = vsyncpa [#allocation5], 1
    %7349 = vsyncpa [#allocation8], 1
    %7350 = vsyncpa [#allocation11], 1

</llo_original>
